<compile_context>
chip_gen: v6e
topology: v6e:2x2x1
jax: 0.10.0
libtpu: 0.0.40
codegen_flags: <defaults>
</compile_context>

<pallas_src>
import jax
import jax.numpy as jnp
from jax.experimental import pallas as pl
from jax.experimental.pallas import tpu as pltpu

# ----------------------------- config ---------------------------------------
VOCAB = 64
D_MODEL = 32
N_HEADS = 4
D_HEAD = D_MODEL // N_HEADS
D_FF = 64
N_ENC_LAYERS = 1
N_DEC_LAYERS = 1
NEG_INF = -1e9
EMB_SCALE = float(D_MODEL) ** 0.5
ATTN_SCALE = 1.0 / (float(D_HEAD) ** 0.5)


# ----------------------- in-kernel building blocks --------------------------
def _mm(a, b):
    return jnp.dot(a, b, preferred_element_type=jnp.float32)


def _mm_nt(a, b):
    # a @ b.T without materializing a transpose (stays on the MXU path).
    return jax.lax.dot_general(
        a, b, (((1,), (1,)), ((), ())), preferred_element_type=jnp.float32
    )


def _layer_norm(x, g, b, eps=1e-5):
    mu = jnp.mean(x, axis=-1, keepdims=True)
    var = jnp.mean((x - mu) ** 2, axis=-1, keepdims=True)
    return (x - mu) * jax.lax.rsqrt(var + eps) * g + b


def _embed_lookup(ids, embed):
    # ids: (N, 1) int32 -> (N, D) via one-hot matmul (keeps the gather in VMEM).
    n = ids.shape[0]
    vocab_ids = jax.lax.broadcasted_iota(jnp.int32, (n, VOCAB), 1)
    onehot = (vocab_ids == ids).astype(jnp.float32)
    return _mm(onehot, embed)


def _mha(x_q, x_kv, mask, ap, is_self):
    """x_q: (Nq, D), x_kv: (Nk, D), mask: (Nq, Nk) additive (includes the
    batch block-diagonal, padding and causal constraints)."""
    w_qkv, b_qkv = ap["w_qkv"], ap["b_qkv"]
    w_o, b_o = ap["w_o"], ap["b_o"]
    if is_self:
        qkv = _mm(x_q, w_qkv) + b_qkv                       # one packed matmul
        q = qkv[:, :D_MODEL]
        k = qkv[:, D_MODEL:2 * D_MODEL]
        v = qkv[:, 2 * D_MODEL:]
    else:
        q = _mm(x_q, w_qkv[:, :D_MODEL]) + b_qkv[:, :D_MODEL]
        kv = _mm(x_kv, w_qkv[:, D_MODEL:]) + b_qkv[:, D_MODEL:]
        k = kv[:, :D_MODEL]
        v = kv[:, D_MODEL:]
    out = None
    for h in range(N_HEADS):
        lo, hi = h * D_HEAD, (h + 1) * D_HEAD
        s = _mm_nt(q[:, lo:hi], k[:, lo:hi]) * ATTN_SCALE + mask
        s = s - jnp.max(s, axis=-1, keepdims=True)
        e = jnp.exp(s)
        p = e / jnp.sum(e, axis=-1, keepdims=True)
        oh = _mm(p, v[:, lo:hi])                            # (Nq, D_HEAD)
        # head-concat folded into the output projection: sum_h o_h @ W_o[h]
        ch = _mm(oh, w_o[lo:hi, :])
        out = ch if out is None else out + ch
    return out + b_o


def _ffn(x, fp):
    h = _mm(x, fp["w1"]) + fp["b1"]
    h = h * jax.nn.sigmoid(h)                               # swish (Marian)
    return _mm(h, fp["w2"]) + fp["b2"]


# --------------------------- the fused kernel --------------------------------
def _make_kernel(param_treedef):
    def kernel(*refs):
        (enc_ids_ref, dec_ids_ref, labels_ref,
         pos_src_ref, pos_trg_ref,
         enc_mask_ref, dec_mask_ref, cross_mask_ref) = refs[:8]
        param_refs = refs[8:-1]
        out_ref = refs[-1]

        p = jax.tree_util.tree_unflatten(
            param_treedef, [r[...] for r in param_refs])

        # ------------------------------ encoder ------------------------------
        x = _embed_lookup(enc_ids_ref[...], p["embed"]) * EMB_SCALE
        x = x + pos_src_ref[...]
        x = _layer_norm(x, p["enc_emb_ln"]["g"], p["enc_emb_ln"]["b"])
        enc_mask = enc_mask_ref[...]
        for lp in p["enc_layers"]:
            a = _mha(x, x, enc_mask, lp["self_attn"], True)
            x = _layer_norm(x + a, lp["ln1"]["g"], lp["ln1"]["b"])
            f = _ffn(x, lp["ffn"])
            x = _layer_norm(x + f, lp["ln2"]["g"], lp["ln2"]["b"])
        enc_out = x

        # ------------------------------ decoder ------------------------------
        y = _embed_lookup(dec_ids_ref[...], p["embed"]) * EMB_SCALE
        y = y + pos_trg_ref[...]
        y = _layer_norm(y, p["dec_emb_ln"]["g"], p["dec_emb_ln"]["b"])
        dec_mask = dec_mask_ref[...]
        cross_mask = cross_mask_ref[...]
        for lp in p["dec_layers"]:
            a = _mha(y, y, dec_mask, lp["self_attn"], True)
            y = _layer_norm(y + a, lp["ln1"]["g"], lp["ln1"]["b"])
            c = _mha(y, enc_out, cross_mask, lp["cross_attn"], False)
            y = _layer_norm(y + c, lp["ln2"]["g"], lp["ln2"]["b"])
            f = _ffn(y, lp["ffn"])
            y = _layer_norm(y + f, lp["ln3"]["g"], lp["ln3"]["b"])

        # --------- tied LM head + cross-entropy (logits never leave VMEM) ----
        logits = _mm_nt(y, p["embed"]) + p["final_bias"]        # (N, VOCAB)
        labels = labels_ref[...]                                # (N, 1) int32
        m = jnp.max(logits, axis=-1, keepdims=True)
        lse = m + jnp.log(jnp.sum(jnp.exp(logits - m), axis=-1, keepdims=True))
        vocab_ids = jax.lax.broadcasted_iota(jnp.int32, logits.shape, 1)
        picked = jnp.sum(jnp.where(vocab_ids == labels, logits, 0.0),
                         axis=-1, keepdims=True)
        per_tok = lse - picked                                  # (N, 1)
        valid = (labels >= 0).astype(jnp.float32)               # HF ignores -100
        total = jnp.sum(per_tok * valid, axis=0, keepdims=True)  # (1, 1)
        count = jnp.sum(valid, axis=0, keepdims=True)            # (1, 1)
        out_ref[...] = total / jnp.maximum(count, 1.0)

    return kernel


# ----------------------------- JAX glue --------------------------------------
def sinusoidal_pos(seq_len, dim):
    pos = jnp.arange(seq_len, dtype=jnp.float32)[:, None]
    i = jnp.arange(dim // 2, dtype=jnp.float32)[None, :]
    angle = pos / jnp.power(10000.0, 2.0 * i / dim)
    return jnp.concatenate([jnp.sin(angle), jnp.cos(angle)], axis=-1)


def net_forward(params, input_ids, attention_mask, decoder_input_ids, labels):
    B, S = input_ids.shape
    T = decoder_input_ids.shape[1]
    n_enc, n_dec = B * S, B * T

    # additive attention masks with batch block-diagonal baked in (flattened
    # (batch*seq) rows let the kernel run plain 2-D matmuls).
    am = attention_mask.astype(jnp.float32).reshape(-1)          # (B*S,)
    b_enc = jnp.repeat(jnp.arange(B), S)
    b_dec = jnp.repeat(jnp.arange(B), T)
    same_ee = b_enc[:, None] == b_enc[None, :]
    same_dd = b_dec[:, None] == b_dec[None, :]
    same_de = b_dec[:, None] == b_enc[None, :]
    key_ok = am[None, :] > 0.0
    tpos = jnp.tile(jnp.arange(T), (B,))
    causal = tpos[:, None] >= tpos[None, :]
    enc_mask = jnp.where(same_ee & key_ok, 0.0, NEG_INF).astype(jnp.float32)
    dec_mask = jnp.where(same_dd & causal, 0.0, NEG_INF).astype(jnp.float32)
    cross_mask = jnp.where(same_de & key_ok, 0.0, NEG_INF).astype(jnp.float32)

    pos_src = jnp.tile(sinusoidal_pos(S, D_MODEL), (B, 1))       # (B*S, D)
    pos_trg = jnp.tile(sinusoidal_pos(T, D_MODEL), (B, 1))       # (B*T, D)

    flat_params, treedef = jax.tree_util.tree_flatten(params)

    inputs = [
        input_ids.reshape(n_enc, 1).astype(jnp.int32),
        decoder_input_ids.reshape(n_dec, 1).astype(jnp.int32),
        labels.reshape(n_dec, 1).astype(jnp.int32),
        pos_src, pos_trg, enc_mask, dec_mask, cross_mask,
    ] + list(flat_params)

    loss = pl.pallas_call(
        _make_kernel(treedef),
        out_shape=jax.ShapeDtypeStruct((1, 1), jnp.float32),
        in_specs=[pl.BlockSpec(memory_space=pltpu.MemorySpace.VMEM)] * len(inputs),
        out_specs=pl.BlockSpec(memory_space=pltpu.MemorySpace.VMEM),
    )(*inputs)
    return loss[0, 0]


# ----------------------------- parameters ------------------------------------
def _attn_block(key):
    kq, kk, kv, ko = jax.random.split(key, 4)
    wq = jax.random.normal(kq, (D_MODEL, D_MODEL), jnp.float32) * 0.02
    wk = jax.random.normal(kk, (D_MODEL, D_MODEL), jnp.float32) * 0.02
    wv = jax.random.normal(kv, (D_MODEL, D_MODEL), jnp.float32) * 0.02
    wo = jax.random.normal(ko, (D_MODEL, D_MODEL), jnp.float32) * 0.02
    return {
        "w_qkv": jnp.concatenate([wq, wk, wv], axis=1),          # (D, 3D)
        "b_qkv": jnp.zeros((1, 3 * D_MODEL), jnp.float32),
        "w_o": wo,                                               # (D, D)
        "b_o": jnp.zeros((1, D_MODEL), jnp.float32),
    }


def _ffn_block(key):
    k1, k2 = jax.random.split(key)
    return {
        "w1": jax.random.normal(k1, (D_MODEL, D_FF), jnp.float32) * 0.02,
        "b1": jnp.zeros((1, D_FF), jnp.float32),
        "w2": jax.random.normal(k2, (D_FF, D_MODEL), jnp.float32) * 0.02,
        "b2": jnp.zeros((1, D_MODEL), jnp.float32),
    }


def _ln():
    return {"g": jnp.ones((1, D_MODEL), jnp.float32),
            "b": jnp.zeros((1, D_MODEL), jnp.float32)}


def init_params(key):
    keys = jax.random.split(key, 2 + N_ENC_LAYERS + N_DEC_LAYERS)
    params = {
        "embed": jax.random.normal(keys[0], (VOCAB, D_MODEL), jnp.float32) * 0.02,
        "final_bias": jnp.zeros((1, VOCAB), jnp.float32),
        "enc_emb_ln": _ln(),
        "dec_emb_ln": _ln(),
        "enc_layers": [],
        "dec_layers": [],
    }
    for i in range(N_ENC_LAYERS):
        k1, k2 = jax.random.split(keys[2 + i])
        params["enc_layers"].append(
            {"self_attn": _attn_block(k1), "ffn": _ffn_block(k2),
             "ln1": _ln(), "ln2": _ln()}
        )
    for i in range(N_DEC_LAYERS):
        k1, k2, k3 = jax.random.split(keys[2 + N_ENC_LAYERS + i], 3)
        params["dec_layers"].append(
            {"self_attn": _attn_block(k1), "cross_attn": _attn_block(k2),
             "ffn": _ffn_block(k3), "ln1": _ln(), "ln2": _ln(), "ln3": _ln()}
        )
    return params


# ------------------------------- main -----------------------------------------
if __name__ == "__main__":
    key = jax.random.PRNGKey(0)
    kp, ks, kt = jax.random.split(key, 3)

    params = init_params(kp)

    B, S_SRC, T_TRG = 2, 8, 8
    # synthetic "tokenized" batch (stands in for tokenizer.prepare_seq2seq_batch)
    input_ids = jax.random.randint(ks, (B, S_SRC), 2, VOCAB, dtype=jnp.int32)
    attention_mask = jnp.array(
        [[1] * S_SRC, [1] * (S_SRC - 2) + [0, 0]], dtype=jnp.int32
    )
    trg_ids = jax.random.randint(kt, (B, T_TRG), 2, VOCAB, dtype=jnp.int32)
    # TODO(synk): Marian's shift_tokens_right (decoder_start token + pad) is not
    # reproduced; this mirrors the reference forward's labels[:, :-1] / [:, 1:].
    decoder_input_ids = trg_ids[:, :-1]
    labels = trg_ids[:, 1:]

    loss = jax.jit(net_forward)(
        params, input_ids, attention_mask, decoder_input_ids, labels
    )
    loss = jax.block_until_ready(loss)
    assert loss.shape == () and jnp.isfinite(loss)
    print("KERNEL_OK")
</pallas_src>

<mosaic_0001>
module attributes {stable_mosaic.version = 11 : i64} {
  func.func @kernel(%arg0: memref<16x1xi32, #tpu.memory_space<vmem>>, %arg1: memref<14x1xi32, #tpu.memory_space<vmem>>, %arg2: memref<14x1xi32, #tpu.memory_space<vmem>>, %arg3: memref<16x32xf32, #tpu.memory_space<vmem>>, %arg4: memref<14x32xf32, #tpu.memory_space<vmem>>, %arg5: memref<16x16xf32, #tpu.memory_space<vmem>>, %arg6: memref<14x14xf32, #tpu.memory_space<vmem>>, %arg7: memref<14x16xf32, #tpu.memory_space<vmem>>, %arg8: memref<1x32xf32, #tpu.memory_space<vmem>>, %arg9: memref<1x32xf32, #tpu.memory_space<vmem>>, %arg10: memref<1x32xf32, #tpu.memory_space<vmem>>, %arg11: memref<1x96xf32, #tpu.memory_space<vmem>>, %arg12: memref<32x32xf32, #tpu.memory_space<vmem>>, %arg13: memref<32x96xf32, #tpu.memory_space<vmem>>, %arg14: memref<1x64xf32, #tpu.memory_space<vmem>>, %arg15: memref<1x32xf32, #tpu.memory_space<vmem>>, %arg16: memref<32x64xf32, #tpu.memory_space<vmem>>, %arg17: memref<64x32xf32, #tpu.memory_space<vmem>>, %arg18: memref<1x32xf32, #tpu.memory_space<vmem>>, %arg19: memref<1x32xf32, #tpu.memory_space<vmem>>, %arg20: memref<1x32xf32, #tpu.memory_space<vmem>>, %arg21: memref<1x32xf32, #tpu.memory_space<vmem>>, %arg22: memref<1x32xf32, #tpu.memory_space<vmem>>, %arg23: memref<1x32xf32, #tpu.memory_space<vmem>>, %arg24: memref<1x32xf32, #tpu.memory_space<vmem>>, %arg25: memref<1x96xf32, #tpu.memory_space<vmem>>, %arg26: memref<32x32xf32, #tpu.memory_space<vmem>>, %arg27: memref<32x96xf32, #tpu.memory_space<vmem>>, %arg28: memref<64x32xf32, #tpu.memory_space<vmem>>, %arg29: memref<1x32xf32, #tpu.memory_space<vmem>>, %arg30: memref<1x32xf32, #tpu.memory_space<vmem>>, %arg31: memref<1x64xf32, #tpu.memory_space<vmem>>, %arg32: memref<1x32xf32, #tpu.memory_space<vmem>>, %arg33: memref<32x64xf32, #tpu.memory_space<vmem>>, %arg34: memref<64x32xf32, #tpu.memory_space<vmem>>, %arg35: memref<1x32xf32, #tpu.memory_space<vmem>>, %arg36: memref<1x32xf32, #tpu.memory_space<vmem>>, %arg37: memref<1x32xf32, #tpu.memory_space<vmem>>, %arg38: memref<1x32xf32, #tpu.memory_space<vmem>>, %arg39: memref<1x32xf32, #tpu.memory_space<vmem>>, %arg40: memref<1x96xf32, #tpu.memory_space<vmem>>, %arg41: memref<32x32xf32, #tpu.memory_space<vmem>>, %arg42: memref<32x96xf32, #tpu.memory_space<vmem>>, %arg43: memref<1x64xf32, #tpu.memory_space<vmem>>, %arg44: memref<1x1xf32, #tpu.memory_space<vmem>>) attributes {dimension_semantics = [], scalar_prefetch = 0 : i64, scratch_operands = 0 : i64, tpu.core_type = #tpu.core_type<tc>} {
    %c0 = arith.constant 0 : index
    %c0_0 = arith.constant 0 : index
    %0 = vector.load %arg8[%c0, %c0_0] : memref<1x32xf32, #tpu.memory_space<vmem>>, vector<1x32xf32>
    %c0_1 = arith.constant 0 : index
    %c0_2 = arith.constant 0 : index
    %1 = vector.load %arg9[%c0_1, %c0_2] : memref<1x32xf32, #tpu.memory_space<vmem>>, vector<1x32xf32>
    %c0_3 = arith.constant 0 : index
    %c0_4 = arith.constant 0 : index
    %2 = vector.load %arg10[%c0_3, %c0_4] : memref<1x32xf32, #tpu.memory_space<vmem>>, vector<1x32xf32>
    %c0_5 = arith.constant 0 : index
    %c0_6 = arith.constant 0 : index
    %3 = vector.load %arg11[%c0_5, %c0_6] : memref<1x96xf32, #tpu.memory_space<vmem>>, vector<1x96xf32>
    %c0_7 = arith.constant 0 : index
    %c0_8 = arith.constant 0 : index
    %4 = vector.load %arg12[%c0_7, %c0_8] : memref<32x32xf32, #tpu.memory_space<vmem>>, vector<32x32xf32>
    %c0_9 = arith.constant 0 : index
    %c0_10 = arith.constant 0 : index
    %5 = vector.load %arg13[%c0_9, %c0_10] : memref<32x96xf32, #tpu.memory_space<vmem>>, vector<32x96xf32>
    %c0_11 = arith.constant 0 : index
    %c0_12 = arith.constant 0 : index
    %6 = vector.load %arg14[%c0_11, %c0_12] : memref<1x64xf32, #tpu.memory_space<vmem>>, vector<1x64xf32>
    %c0_13 = arith.constant 0 : index
    %c0_14 = arith.constant 0 : index
    %7 = vector.load %arg15[%c0_13, %c0_14] : memref<1x32xf32, #tpu.memory_space<vmem>>, vector<1x32xf32>
    %c0_15 = arith.constant 0 : index
    %c0_16 = arith.constant 0 : index
    %8 = vector.load %arg16[%c0_15, %c0_16] : memref<32x64xf32, #tpu.memory_space<vmem>>, vector<32x64xf32>
    %c0_17 = arith.constant 0 : index
    %c0_18 = arith.constant 0 : index
    %9 = vector.load %arg17[%c0_17, %c0_18] : memref<64x32xf32, #tpu.memory_space<vmem>>, vector<64x32xf32>
    %c0_19 = arith.constant 0 : index
    %c0_20 = arith.constant 0 : index
    %10 = vector.load %arg18[%c0_19, %c0_20] : memref<1x32xf32, #tpu.memory_space<vmem>>, vector<1x32xf32>
    %c0_21 = arith.constant 0 : index
    %c0_22 = arith.constant 0 : index
    %11 = vector.load %arg19[%c0_21, %c0_22] : memref<1x32xf32, #tpu.memory_space<vmem>>, vector<1x32xf32>
    %c0_23 = arith.constant 0 : index
    %c0_24 = arith.constant 0 : index
    %12 = vector.load %arg20[%c0_23, %c0_24] : memref<1x32xf32, #tpu.memory_space<vmem>>, vector<1x32xf32>
    %c0_25 = arith.constant 0 : index
    %c0_26 = arith.constant 0 : index
    %13 = vector.load %arg21[%c0_25, %c0_26] : memref<1x32xf32, #tpu.memory_space<vmem>>, vector<1x32xf32>
    %c0_27 = arith.constant 0 : index
    %c0_28 = arith.constant 0 : index
    %14 = vector.load %arg22[%c0_27, %c0_28] : memref<1x32xf32, #tpu.memory_space<vmem>>, vector<1x32xf32>
    %c0_29 = arith.constant 0 : index
    %c0_30 = arith.constant 0 : index
    %15 = vector.load %arg23[%c0_29, %c0_30] : memref<1x32xf32, #tpu.memory_space<vmem>>, vector<1x32xf32>
    %c0_31 = arith.constant 0 : index
    %c0_32 = arith.constant 0 : index
    %16 = vector.load %arg24[%c0_31, %c0_32] : memref<1x32xf32, #tpu.memory_space<vmem>>, vector<1x32xf32>
    %c0_33 = arith.constant 0 : index
    %c0_34 = arith.constant 0 : index
    %17 = vector.load %arg25[%c0_33, %c0_34] : memref<1x96xf32, #tpu.memory_space<vmem>>, vector<1x96xf32>
    %c0_35 = arith.constant 0 : index
    %c0_36 = arith.constant 0 : index
    %18 = vector.load %arg26[%c0_35, %c0_36] : memref<32x32xf32, #tpu.memory_space<vmem>>, vector<32x32xf32>
    %c0_37 = arith.constant 0 : index
    %c0_38 = arith.constant 0 : index
    %19 = vector.load %arg27[%c0_37, %c0_38] : memref<32x96xf32, #tpu.memory_space<vmem>>, vector<32x96xf32>
    %c0_39 = arith.constant 0 : index
    %c0_40 = arith.constant 0 : index
    %20 = vector.load %arg28[%c0_39, %c0_40] : memref<64x32xf32, #tpu.memory_space<vmem>>, vector<64x32xf32>
    %c0_41 = arith.constant 0 : index
    %c0_42 = arith.constant 0 : index
    %21 = vector.load %arg29[%c0_41, %c0_42] : memref<1x32xf32, #tpu.memory_space<vmem>>, vector<1x32xf32>
    %c0_43 = arith.constant 0 : index
    %c0_44 = arith.constant 0 : index
    %22 = vector.load %arg30[%c0_43, %c0_44] : memref<1x32xf32, #tpu.memory_space<vmem>>, vector<1x32xf32>
    %c0_45 = arith.constant 0 : index
    %c0_46 = arith.constant 0 : index
    %23 = vector.load %arg31[%c0_45, %c0_46] : memref<1x64xf32, #tpu.memory_space<vmem>>, vector<1x64xf32>
    %c0_47 = arith.constant 0 : index
    %c0_48 = arith.constant 0 : index
    %24 = vector.load %arg32[%c0_47, %c0_48] : memref<1x32xf32, #tpu.memory_space<vmem>>, vector<1x32xf32>
    %c0_49 = arith.constant 0 : index
    %c0_50 = arith.constant 0 : index
    %25 = vector.load %arg33[%c0_49, %c0_50] : memref<32x64xf32, #tpu.memory_space<vmem>>, vector<32x64xf32>
    %c0_51 = arith.constant 0 : index
    %c0_52 = arith.constant 0 : index
    %26 = vector.load %arg34[%c0_51, %c0_52] : memref<64x32xf32, #tpu.memory_space<vmem>>, vector<64x32xf32>
    %c0_53 = arith.constant 0 : index
    %c0_54 = arith.constant 0 : index
    %27 = vector.load %arg35[%c0_53, %c0_54] : memref<1x32xf32, #tpu.memory_space<vmem>>, vector<1x32xf32>
    %c0_55 = arith.constant 0 : index
    %c0_56 = arith.constant 0 : index
    %28 = vector.load %arg36[%c0_55, %c0_56] : memref<1x32xf32, #tpu.memory_space<vmem>>, vector<1x32xf32>
    %c0_57 = arith.constant 0 : index
    %c0_58 = arith.constant 0 : index
    %29 = vector.load %arg37[%c0_57, %c0_58] : memref<1x32xf32, #tpu.memory_space<vmem>>, vector<1x32xf32>
    %c0_59 = arith.constant 0 : index
    %c0_60 = arith.constant 0 : index
    %30 = vector.load %arg38[%c0_59, %c0_60] : memref<1x32xf32, #tpu.memory_space<vmem>>, vector<1x32xf32>
    %c0_61 = arith.constant 0 : index
    %c0_62 = arith.constant 0 : index
    %31 = vector.load %arg39[%c0_61, %c0_62] : memref<1x32xf32, #tpu.memory_space<vmem>>, vector<1x32xf32>
    %c0_63 = arith.constant 0 : index
    %c0_64 = arith.constant 0 : index
    %32 = vector.load %arg40[%c0_63, %c0_64] : memref<1x96xf32, #tpu.memory_space<vmem>>, vector<1x96xf32>
    %c0_65 = arith.constant 0 : index
    %c0_66 = arith.constant 0 : index
    %33 = vector.load %arg41[%c0_65, %c0_66] : memref<32x32xf32, #tpu.memory_space<vmem>>, vector<32x32xf32>
    %c0_67 = arith.constant 0 : index
    %c0_68 = arith.constant 0 : index
    %34 = vector.load %arg42[%c0_67, %c0_68] : memref<32x96xf32, #tpu.memory_space<vmem>>, vector<32x96xf32>
    %c0_69 = arith.constant 0 : index
    %c0_70 = arith.constant 0 : index
    %35 = vector.load %arg43[%c0_69, %c0_70] : memref<1x64xf32, #tpu.memory_space<vmem>>, vector<1x64xf32>
    %c0_71 = arith.constant 0 : index
    %c0_72 = arith.constant 0 : index
    %36 = vector.load %arg0[%c0_71, %c0_72] : memref<16x1xi32, #tpu.memory_space<vmem>>, vector<16x1xi32>
    %37 = tpu.iota {dimensions = array<i32: 1>} : vector<16x64xi32>
    %38 = vector.broadcast %36 : vector<16x1xi32> to vector<16x64xi32>
    %39 = arith.cmpi eq, %37, %38 : vector<16x64xi32>
    %40 = arith.extui %39 : vector<16x64xi1> to vector<16x64xi32>
    %41 = arith.sitofp %40 : vector<16x64xi32> to vector<16x64xf32>
    %cst = arith.constant dense<0.000000e+00> : vector<16x32xf32>
    %42 = tpu.matmul %41, %20, %cst {dimension_numbers = #tpu.dot_dimension_numbers<[1], [0], [0], [1], [0, 0, 1, 1], [], []>} : vector<16x64xf32>, vector<64x32xf32>, vector<16x32xf32> -> vector<16x32xf32>
    %cst_73 = arith.constant 5.65685415 : f32
    %43 = vector.broadcast %cst_73 : f32 to vector<16x32xf32>
    %44 = arith.mulf %42, %43 : vector<16x32xf32>
    %c0_74 = arith.constant 0 : index
    %c0_75 = arith.constant 0 : index
    %45 = vector.load %arg3[%c0_74, %c0_75] : memref<16x32xf32, #tpu.memory_space<vmem>>, vector<16x32xf32>
    %46 = arith.addf %44, %45 : vector<16x32xf32>
    %cst_76 = arith.constant dense<0.000000e+00> : vector<16xf32>
    %47 = vector.multi_reduction <add>, %46, %cst_76 [1] : vector<16x32xf32> to vector<16xf32>
    %48 = vector.shape_cast %47 : vector<16xf32> to vector<16x1xf32>
    %cst_77 = arith.constant 3.200000e+01 : f32
    %49 = vector.broadcast %cst_77 : f32 to vector<16x1xf32>
    %50 = arith.divf %48, %49 : vector<16x1xf32>
    %51 = vector.broadcast %50 : vector<16x1xf32> to vector<16x32xf32>
    %52 = arith.subf %46, %51 : vector<16x32xf32>
    %53 = arith.mulf %52, %52 : vector<16x32xf32>
    %cst_78 = arith.constant dense<0.000000e+00> : vector<16xf32>
    %54 = vector.multi_reduction <add>, %53, %cst_78 [1] : vector<16x32xf32> to vector<16xf32>
    %55 = vector.shape_cast %54 : vector<16xf32> to vector<16x1xf32>
    %cst_79 = arith.constant 3.200000e+01 : f32
    %56 = vector.broadcast %cst_79 : f32 to vector<16x1xf32>
    %57 = arith.divf %55, %56 : vector<16x1xf32>
    %58 = vector.broadcast %50 : vector<16x1xf32> to vector<16x32xf32>
    %59 = arith.subf %46, %58 : vector<16x32xf32>
    %cst_80 = arith.constant 9.99999974E-6 : f32
    %60 = vector.broadcast %cst_80 : f32 to vector<16x1xf32>
    %61 = arith.addf %57, %60 : vector<16x1xf32>
    %62 = math.rsqrt %61 : vector<16x1xf32>
    %63 = vector.broadcast %62 : vector<16x1xf32> to vector<16x32xf32>
    %64 = arith.mulf %59, %63 : vector<16x32xf32>
    %65 = vector.broadcast %22 : vector<1x32xf32> to vector<16x32xf32>
    %66 = arith.mulf %64, %65 : vector<16x32xf32>
    %67 = vector.broadcast %21 : vector<1x32xf32> to vector<16x32xf32>
    %68 = arith.addf %66, %67 : vector<16x32xf32>
    %c0_81 = arith.constant 0 : index
    %c0_82 = arith.constant 0 : index
    %69 = vector.load %arg5[%c0_81, %c0_82] : memref<16x16xf32, #tpu.memory_space<vmem>>, vector<16x16xf32>
    %cst_83 = arith.constant dense<0.000000e+00> : vector<16x96xf32>
    %70 = tpu.matmul %68, %34, %cst_83 {dimension_numbers = #tpu.dot_dimension_numbers<[1], [0], [0], [1], [0, 0, 1, 1], [], []>} : vector<16x32xf32>, vector<32x96xf32>, vector<16x96xf32> -> vector<16x96xf32>
    %71 = vector.broadcast %32 : vector<1x96xf32> to vector<16x96xf32>
    %72 = arith.addf %70, %71 : vector<16x96xf32>
    %73 = vector.extract_strided_slice %72 {offsets = [0, 0], sizes = [16, 32], strides = [1, 1]} : vector<16x96xf32> to vector<16x32xf32>
    %74 = vector.extract_strided_slice %72 {offsets = [0, 32], sizes = [16, 32], strides = [1, 1]} : vector<16x96xf32> to vector<16x32xf32>
    %75 = vector.extract_strided_slice %72 {offsets = [0, 64], sizes = [16, 32], strides = [1, 1]} : vector<16x96xf32> to vector<16x32xf32>
    %76 = vector.extract_strided_slice %73 {offsets = [0, 0], sizes = [16, 8], strides = [1, 1]} : vector<16x32xf32> to vector<16x8xf32>
    %77 = vector.extract_strided_slice %74 {offsets = [0, 0], sizes = [16, 8], strides = [1, 1]} : vector<16x32xf32> to vector<16x8xf32>
    %cst_84 = arith.constant dense<0.000000e+00> : vector<16x16xf32>
    %78 = tpu.matmul %76, %77, %cst_84 {dimension_numbers = #tpu.dot_dimension_numbers<[1], [1], [0], [0], [0, 0, 1, 0], [], []>} : vector<16x8xf32>, vector<16x8xf32>, vector<16x16xf32> -> vector<16x16xf32>
    %cst_85 = arith.constant 0.353553385 : f32
    %79 = vector.broadcast %cst_85 : f32 to vector<16x16xf32>
    %80 = arith.mulf %78, %79 : vector<16x16xf32>
    %81 = arith.addf %80, %69 : vector<16x16xf32>
    %cst_86 = arith.constant dense<0xFF800000> : vector<16xf32>
    %82 = vector.multi_reduction <maximumf>, %81, %cst_86 [1] : vector<16x16xf32> to vector<16xf32>
    %83 = vector.shape_cast %82 : vector<16xf32> to vector<16x1xf32>
    %84 = vector.broadcast %83 : vector<16x1xf32> to vector<16x16xf32>
    %85 = arith.subf %81, %84 : vector<16x16xf32>
    %86 = math.exp %85 : vector<16x16xf32>
    %cst_87 = arith.constant dense<0.000000e+00> : vector<16xf32>
    %87 = vector.multi_reduction <add>, %86, %cst_87 [1] : vector<16x16xf32> to vector<16xf32>
    %88 = vector.shape_cast %87 : vector<16xf32> to vector<16x1xf32>
    %89 = vector.broadcast %88 : vector<16x1xf32> to vector<16x16xf32>
    %90 = arith.divf %86, %89 : vector<16x16xf32>
    %91 = vector.extract_strided_slice %75 {offsets = [0, 0], sizes = [16, 8], strides = [1, 1]} : vector<16x32xf32> to vector<16x8xf32>
    %cst_88 = arith.constant dense<0.000000e+00> : vector<16x8xf32>
    %92 = tpu.matmul %90, %91, %cst_88 {dimension_numbers = #tpu.dot_dimension_numbers<[1], [0], [0], [1], [0, 0, 1, 1], [], []>} : vector<16x16xf32>, vector<16x8xf32>, vector<16x8xf32> -> vector<16x8xf32>
    %93 = vector.extract_strided_slice %33 {offsets = [0, 0], sizes = [8, 32], strides = [1, 1]} : vector<32x32xf32> to vector<8x32xf32>
    %cst_89 = arith.constant dense<0.000000e+00> : vector<16x32xf32>
    %94 = tpu.matmul %92, %93, %cst_89 {dimension_numbers = #tpu.dot_dimension_numbers<[1], [0], [0], [1], [0, 0, 1, 1], [], []>} : vector<16x8xf32>, vector<8x32xf32>, vector<16x32xf32> -> vector<16x32xf32>
    %95 = vector.extract_strided_slice %73 {offsets = [0, 8], sizes = [16, 8], strides = [1, 1]} : vector<16x32xf32> to vector<16x8xf32>
    %96 = vector.extract_strided_slice %74 {offsets = [0, 8], sizes = [16, 8], strides = [1, 1]} : vector<16x32xf32> to vector<16x8xf32>
    %cst_90 = arith.constant dense<0.000000e+00> : vector<16x16xf32>
    %97 = tpu.matmul %95, %96, %cst_90 {dimension_numbers = #tpu.dot_dimension_numbers<[1], [1], [0], [0], [0, 0, 1, 0], [], []>} : vector<16x8xf32>, vector<16x8xf32>, vector<16x16xf32> -> vector<16x16xf32>
    %cst_91 = arith.constant 0.353553385 : f32
    %98 = vector.broadcast %cst_91 : f32 to vector<16x16xf32>
    %99 = arith.mulf %97, %98 : vector<16x16xf32>
    %100 = arith.addf %99, %69 : vector<16x16xf32>
    %cst_92 = arith.constant dense<0xFF800000> : vector<16xf32>
    %101 = vector.multi_reduction <maximumf>, %100, %cst_92 [1] : vector<16x16xf32> to vector<16xf32>
    %102 = vector.shape_cast %101 : vector<16xf32> to vector<16x1xf32>
    %103 = vector.broadcast %102 : vector<16x1xf32> to vector<16x16xf32>
    %104 = arith.subf %100, %103 : vector<16x16xf32>
    %105 = math.exp %104 : vector<16x16xf32>
    %cst_93 = arith.constant dense<0.000000e+00> : vector<16xf32>
    %106 = vector.multi_reduction <add>, %105, %cst_93 [1] : vector<16x16xf32> to vector<16xf32>
    %107 = vector.shape_cast %106 : vector<16xf32> to vector<16x1xf32>
    %108 = vector.broadcast %107 : vector<16x1xf32> to vector<16x16xf32>
    %109 = arith.divf %105, %108 : vector<16x16xf32>
    %110 = vector.extract_strided_slice %75 {offsets = [0, 8], sizes = [16, 8], strides = [1, 1]} : vector<16x32xf32> to vector<16x8xf32>
    %cst_94 = arith.constant dense<0.000000e+00> : vector<16x8xf32>
    %111 = tpu.matmul %109, %110, %cst_94 {dimension_numbers = #tpu.dot_dimension_numbers<[1], [0], [0], [1], [0, 0, 1, 1], [], []>} : vector<16x16xf32>, vector<16x8xf32>, vector<16x8xf32> -> vector<16x8xf32>
    %112 = vector.extract_strided_slice %33 {offsets = [8, 0], sizes = [8, 32], strides = [1, 1]} : vector<32x32xf32> to vector<8x32xf32>
    %cst_95 = arith.constant dense<0.000000e+00> : vector<16x32xf32>
    %113 = tpu.matmul %111, %112, %cst_95 {dimension_numbers = #tpu.dot_dimension_numbers<[1], [0], [0], [1], [0, 0, 1, 1], [], []>} : vector<16x8xf32>, vector<8x32xf32>, vector<16x32xf32> -> vector<16x32xf32>
    %114 = arith.addf %94, %113 : vector<16x32xf32>
    %115 = vector.extract_strided_slice %73 {offsets = [0, 16], sizes = [16, 8], strides = [1, 1]} : vector<16x32xf32> to vector<16x8xf32>
    %116 = vector.extract_strided_slice %74 {offsets = [0, 16], sizes = [16, 8], strides = [1, 1]} : vector<16x32xf32> to vector<16x8xf32>
    %cst_96 = arith.constant dense<0.000000e+00> : vector<16x16xf32>
    %117 = tpu.matmul %115, %116, %cst_96 {dimension_numbers = #tpu.dot_dimension_numbers<[1], [1], [0], [0], [0, 0, 1, 0], [], []>} : vector<16x8xf32>, vector<16x8xf32>, vector<16x16xf32> -> vector<16x16xf32>
    %cst_97 = arith.constant 0.353553385 : f32
    %118 = vector.broadcast %cst_97 : f32 to vector<16x16xf32>
    %119 = arith.mulf %117, %118 : vector<16x16xf32>
    %120 = arith.addf %119, %69 : vector<16x16xf32>
    %cst_98 = arith.constant dense<0xFF800000> : vector<16xf32>
    %121 = vector.multi_reduction <maximumf>, %120, %cst_98 [1] : vector<16x16xf32> to vector<16xf32>
    %122 = vector.shape_cast %121 : vector<16xf32> to vector<16x1xf32>
    %123 = vector.broadcast %122 : vector<16x1xf32> to vector<16x16xf32>
    %124 = arith.subf %120, %123 : vector<16x16xf32>
    %125 = math.exp %124 : vector<16x16xf32>
    %cst_99 = arith.constant dense<0.000000e+00> : vector<16xf32>
    %126 = vector.multi_reduction <add>, %125, %cst_99 [1] : vector<16x16xf32> to vector<16xf32>
    %127 = vector.shape_cast %126 : vector<16xf32> to vector<16x1xf32>
    %128 = vector.broadcast %127 : vector<16x1xf32> to vector<16x16xf32>
    %129 = arith.divf %125, %128 : vector<16x16xf32>
    %130 = vector.extract_strided_slice %75 {offsets = [0, 16], sizes = [16, 8], strides = [1, 1]} : vector<16x32xf32> to vector<16x8xf32>
    %cst_100 = arith.constant dense<0.000000e+00> : vector<16x8xf32>
    %131 = tpu.matmul %129, %130, %cst_100 {dimension_numbers = #tpu.dot_dimension_numbers<[1], [0], [0], [1], [0, 0, 1, 1], [], []>} : vector<16x16xf32>, vector<16x8xf32>, vector<16x8xf32> -> vector<16x8xf32>
    %132 = vector.extract_strided_slice %33 {offsets = [16, 0], sizes = [8, 32], strides = [1, 1]} : vector<32x32xf32> to vector<8x32xf32>
    %cst_101 = arith.constant dense<0.000000e+00> : vector<16x32xf32>
    %133 = tpu.matmul %131, %132, %cst_101 {dimension_numbers = #tpu.dot_dimension_numbers<[1], [0], [0], [1], [0, 0, 1, 1], [], []>} : vector<16x8xf32>, vector<8x32xf32>, vector<16x32xf32> -> vector<16x32xf32>
    %134 = arith.addf %114, %133 : vector<16x32xf32>
    %135 = vector.extract_strided_slice %73 {offsets = [0, 24], sizes = [16, 8], strides = [1, 1]} : vector<16x32xf32> to vector<16x8xf32>
    %136 = vector.extract_strided_slice %74 {offsets = [0, 24], sizes = [16, 8], strides = [1, 1]} : vector<16x32xf32> to vector<16x8xf32>
    %cst_102 = arith.constant dense<0.000000e+00> : vector<16x16xf32>
    %137 = tpu.matmul %135, %136, %cst_102 {dimension_numbers = #tpu.dot_dimension_numbers<[1], [1], [0], [0], [0, 0, 1, 0], [], []>} : vector<16x8xf32>, vector<16x8xf32>, vector<16x16xf32> -> vector<16x16xf32>
    %cst_103 = arith.constant 0.353553385 : f32
    %138 = vector.broadcast %cst_103 : f32 to vector<16x16xf32>
    %139 = arith.mulf %137, %138 : vector<16x16xf32>
    %140 = arith.addf %139, %69 : vector<16x16xf32>
    %cst_104 = arith.constant dense<0xFF800000> : vector<16xf32>
    %141 = vector.multi_reduction <maximumf>, %140, %cst_104 [1] : vector<16x16xf32> to vector<16xf32>
    %142 = vector.shape_cast %141 : vector<16xf32> to vector<16x1xf32>
    %143 = vector.broadcast %142 : vector<16x1xf32> to vector<16x16xf32>
    %144 = arith.subf %140, %143 : vector<16x16xf32>
    %145 = math.exp %144 : vector<16x16xf32>
    %cst_105 = arith.constant dense<0.000000e+00> : vector<16xf32>
    %146 = vector.multi_reduction <add>, %145, %cst_105 [1] : vector<16x16xf32> to vector<16xf32>
    %147 = vector.shape_cast %146 : vector<16xf32> to vector<16x1xf32>
    %148 = vector.broadcast %147 : vector<16x1xf32> to vector<16x16xf32>
    %149 = arith.divf %145, %148 : vector<16x16xf32>
    %150 = vector.extract_strided_slice %75 {offsets = [0, 24], sizes = [16, 8], strides = [1, 1]} : vector<16x32xf32> to vector<16x8xf32>
    %cst_106 = arith.constant dense<0.000000e+00> : vector<16x8xf32>
    %151 = tpu.matmul %149, %150, %cst_106 {dimension_numbers = #tpu.dot_dimension_numbers<[1], [0], [0], [1], [0, 0, 1, 1], [], []>} : vector<16x16xf32>, vector<16x8xf32>, vector<16x8xf32> -> vector<16x8xf32>
    %152 = vector.extract_strided_slice %33 {offsets = [24, 0], sizes = [8, 32], strides = [1, 1]} : vector<32x32xf32> to vector<8x32xf32>
    %cst_107 = arith.constant dense<0.000000e+00> : vector<16x32xf32>
    %153 = tpu.matmul %151, %152, %cst_107 {dimension_numbers = #tpu.dot_dimension_numbers<[1], [0], [0], [1], [0, 0, 1, 1], [], []>} : vector<16x8xf32>, vector<8x32xf32>, vector<16x32xf32> -> vector<16x32xf32>
    %154 = arith.addf %134, %153 : vector<16x32xf32>
    %155 = vector.broadcast %31 : vector<1x32xf32> to vector<16x32xf32>
    %156 = arith.addf %154, %155 : vector<16x32xf32>
    %157 = arith.addf %68, %156 : vector<16x32xf32>
    %cst_108 = arith.constant dense<0.000000e+00> : vector<16xf32>
    %158 = vector.multi_reduction <add>, %157, %cst_108 [1] : vector<16x32xf32> to vector<16xf32>
    %159 = vector.shape_cast %158 : vector<16xf32> to vector<16x1xf32>
    %cst_109 = arith.constant 3.200000e+01 : f32
    %160 = vector.broadcast %cst_109 : f32 to vector<16x1xf32>
    %161 = arith.divf %159, %160 : vector<16x1xf32>
    %162 = vector.broadcast %161 : vector<16x1xf32> to vector<16x32xf32>
    %163 = arith.subf %157, %162 : vector<16x32xf32>
    %164 = arith.mulf %163, %163 : vector<16x32xf32>
    %cst_110 = arith.constant dense<0.000000e+00> : vector<16xf32>
    %165 = vector.multi_reduction <add>, %164, %cst_110 [1] : vector<16x32xf32> to vector<16xf32>
    %166 = vector.shape_cast %165 : vector<16xf32> to vector<16x1xf32>
    %cst_111 = arith.constant 3.200000e+01 : f32
    %167 = vector.broadcast %cst_111 : f32 to vector<16x1xf32>
    %168 = arith.divf %166, %167 : vector<16x1xf32>
    %169 = vector.broadcast %161 : vector<16x1xf32> to vector<16x32xf32>
    %170 = arith.subf %157, %169 : vector<16x32xf32>
    %cst_112 = arith.constant 9.99999974E-6 : f32
    %171 = vector.broadcast %cst_112 : f32 to vector<16x1xf32>
    %172 = arith.addf %168, %171 : vector<16x1xf32>
    %173 = math.rsqrt %172 : vector<16x1xf32>
    %174 = vector.broadcast %173 : vector<16x1xf32> to vector<16x32xf32>
    %175 = arith.mulf %170, %174 : vector<16x32xf32>
    %176 = vector.broadcast %28 : vector<1x32xf32> to vector<16x32xf32>
    %177 = arith.mulf %175, %176 : vector<16x32xf32>
    %178 = vector.broadcast %27 : vector<1x32xf32> to vector<16x32xf32>
    %179 = arith.addf %177, %178 : vector<16x32xf32>
    %cst_113 = arith.constant dense<0.000000e+00> : vector<16x64xf32>
    %180 = tpu.matmul %179, %25, %cst_113 {dimension_numbers = #tpu.dot_dimension_numbers<[1], [0], [0], [1], [0, 0, 1, 1], [], []>} : vector<16x32xf32>, vector<32x64xf32>, vector<16x64xf32> -> vector<16x64xf32>
    %181 = vector.broadcast %23 : vector<1x64xf32> to vector<16x64xf32>
    %182 = arith.addf %180, %181 : vector<16x64xf32>
    %183 = arith.negf %182 : vector<16x64xf32>
    %184 = math.exp %183 : vector<16x64xf32>
    %cst_114 = arith.constant 1.000000e+00 : f32
    %185 = vector.broadcast %cst_114 : f32 to vector<16x64xf32>
    %186 = arith.addf %185, %184 : vector<16x64xf32>
    %187 = arith.divf %185, %186 : vector<16x64xf32>
    %188 = arith.mulf %182, %187 : vector<16x64xf32>
    %cst_115 = arith.constant dense<0.000000e+00> : vector<16x32xf32>
    %189 = tpu.matmul %188, %26, %cst_115 {dimension_numbers = #tpu.dot_dimension_numbers<[1], [0], [0], [1], [0, 0, 1, 1], [], []>} : vector<16x64xf32>, vector<64x32xf32>, vector<16x32xf32> -> vector<16x32xf32>
    %190 = vector.broadcast %24 : vector<1x32xf32> to vector<16x32xf32>
    %191 = arith.addf %189, %190 : vector<16x32xf32>
    %192 = arith.addf %179, %191 : vector<16x32xf32>
    %cst_116 = arith.constant dense<0.000000e+00> : vector<16xf32>
    %193 = vector.multi_reduction <add>, %192, %cst_116 [1] : vector<16x32xf32> to vector<16xf32>
    %194 = vector.shape_cast %193 : vector<16xf32> to vector<16x1xf32>
    %cst_117 = arith.constant 3.200000e+01 : f32
    %195 = vector.broadcast %cst_117 : f32 to vector<16x1xf32>
    %196 = arith.divf %194, %195 : vector<16x1xf32>
    %197 = vector.broadcast %196 : vector<16x1xf32> to vector<16x32xf32>
    %198 = arith.subf %192, %197 : vector<16x32xf32>
    %199 = arith.mulf %198, %198 : vector<16x32xf32>
    %cst_118 = arith.constant dense<0.000000e+00> : vector<16xf32>
    %200 = vector.multi_reduction <add>, %199, %cst_118 [1] : vector<16x32xf32> to vector<16xf32>
    %201 = vector.shape_cast %200 : vector<16xf32> to vector<16x1xf32>
    %cst_119 = arith.constant 3.200000e+01 : f32
    %202 = vector.broadcast %cst_119 : f32 to vector<16x1xf32>
    %203 = arith.divf %201, %202 : vector<16x1xf32>
    %204 = vector.broadcast %196 : vector<16x1xf32> to vector<16x32xf32>
    %205 = arith.subf %192, %204 : vector<16x32xf32>
    %cst_120 = arith.constant 9.99999974E-6 : f32
    %206 = vector.broadcast %cst_120 : f32 to vector<16x1xf32>
    %207 = arith.addf %203, %206 : vector<16x1xf32>
    %208 = math.rsqrt %207 : vector<16x1xf32>
    %209 = vector.broadcast %208 : vector<16x1xf32> to vector<16x32xf32>
    %210 = arith.mulf %205, %209 : vector<16x32xf32>
    %211 = vector.broadcast %30 : vector<1x32xf32> to vector<16x32xf32>
    %212 = arith.mulf %210, %211 : vector<16x32xf32>
    %213 = vector.broadcast %29 : vector<1x32xf32> to vector<16x32xf32>
    %214 = arith.addf %212, %213 : vector<16x32xf32>
    %c0_121 = arith.constant 0 : index
    %c0_122 = arith.constant 0 : index
    %215 = vector.load %arg1[%c0_121, %c0_122] : memref<14x1xi32, #tpu.memory_space<vmem>>, vector<14x1xi32>
    %216 = tpu.iota {dimensions = array<i32: 1>} : vector<14x64xi32>
    %217 = vector.broadcast %215 : vector<14x1xi32> to vector<14x64xi32>
    %218 = arith.cmpi eq, %216, %217 : vector<14x64xi32>
    %219 = arith.extui %218 : vector<14x64xi1> to vector<14x64xi32>
    %220 = arith.sitofp %219 : vector<14x64xi32> to vector<14x64xf32>
    %cst_123 = arith.constant dense<0.000000e+00> : vector<14x32xf32>
    %221 = tpu.matmul %220, %20, %cst_123 {dimension_numbers = #tpu.dot_dimension_numbers<[1], [0], [0], [1], [0, 0, 1, 1], [], []>} : vector<14x64xf32>, vector<64x32xf32>, vector<14x32xf32> -> vector<14x32xf32>
    %cst_124 = arith.constant 5.65685415 : f32
    %222 = vector.broadcast %cst_124 : f32 to vector<14x32xf32>
    %223 = arith.mulf %221, %222 : vector<14x32xf32>
    %c0_125 = arith.constant 0 : index
    %c0_126 = arith.constant 0 : index
    %224 = vector.load %arg4[%c0_125, %c0_126] : memref<14x32xf32, #tpu.memory_space<vmem>>, vector<14x32xf32>
    %225 = arith.addf %223, %224 : vector<14x32xf32>
    %cst_127 = arith.constant dense<0.000000e+00> : vector<14xf32>
    %226 = vector.multi_reduction <add>, %225, %cst_127 [1] : vector<14x32xf32> to vector<14xf32>
    %227 = vector.shape_cast %226 : vector<14xf32> to vector<14x1xf32>
    %cst_128 = arith.constant 3.200000e+01 : f32
    %228 = vector.broadcast %cst_128 : f32 to vector<14x1xf32>
    %229 = arith.divf %227, %228 : vector<14x1xf32>
    %230 = vector.broadcast %229 : vector<14x1xf32> to vector<14x32xf32>
    %231 = arith.subf %225, %230 : vector<14x32xf32>
    %232 = arith.mulf %231, %231 : vector<14x32xf32>
    %cst_129 = arith.constant dense<0.000000e+00> : vector<14xf32>
    %233 = vector.multi_reduction <add>, %232, %cst_129 [1] : vector<14x32xf32> to vector<14xf32>
    %234 = vector.shape_cast %233 : vector<14xf32> to vector<14x1xf32>
    %cst_130 = arith.constant 3.200000e+01 : f32
    %235 = vector.broadcast %cst_130 : f32 to vector<14x1xf32>
    %236 = arith.divf %234, %235 : vector<14x1xf32>
    %237 = vector.broadcast %229 : vector<14x1xf32> to vector<14x32xf32>
    %238 = arith.subf %225, %237 : vector<14x32xf32>
    %cst_131 = arith.constant 9.99999974E-6 : f32
    %239 = vector.broadcast %cst_131 : f32 to vector<14x1xf32>
    %240 = arith.addf %236, %239 : vector<14x1xf32>
    %241 = math.rsqrt %240 : vector<14x1xf32>
    %242 = vector.broadcast %241 : vector<14x1xf32> to vector<14x32xf32>
    %243 = arith.mulf %238, %242 : vector<14x32xf32>
    %244 = vector.broadcast %1 : vector<1x32xf32> to vector<14x32xf32>
    %245 = arith.mulf %243, %244 : vector<14x32xf32>
    %246 = vector.broadcast %0 : vector<1x32xf32> to vector<14x32xf32>
    %247 = arith.addf %245, %246 : vector<14x32xf32>
    %c0_132 = arith.constant 0 : index
    %c0_133 = arith.constant 0 : index
    %248 = vector.load %arg6[%c0_132, %c0_133] : memref<14x14xf32, #tpu.memory_space<vmem>>, vector<14x14xf32>
    %c0_134 = arith.constant 0 : index
    %c0_135 = arith.constant 0 : index
    %249 = vector.load %arg7[%c0_134, %c0_135] : memref<14x16xf32, #tpu.memory_space<vmem>>, vector<14x16xf32>
    %cst_136 = arith.constant dense<0.000000e+00> : vector<14x96xf32>
    %250 = tpu.matmul %247, %19, %cst_136 {dimension_numbers = #tpu.dot_dimension_numbers<[1], [0], [0], [1], [0, 0, 1, 1], [], []>} : vector<14x32xf32>, vector<32x96xf32>, vector<14x96xf32> -> vector<14x96xf32>
    %251 = vector.broadcast %17 : vector<1x96xf32> to vector<14x96xf32>
    %252 = arith.addf %250, %251 : vector<14x96xf32>
    %253 = vector.extract_strided_slice %252 {offsets = [0, 0], sizes = [14, 32], strides = [1, 1]} : vector<14x96xf32> to vector<14x32xf32>
    %254 = vector.extract_strided_slice %252 {offsets = [0, 32], sizes = [14, 32], strides = [1, 1]} : vector<14x96xf32> to vector<14x32xf32>
    %255 = vector.extract_strided_slice %252 {offsets = [0, 64], sizes = [14, 32], strides = [1, 1]} : vector<14x96xf32> to vector<14x32xf32>
    %256 = vector.extract_strided_slice %253 {offsets = [0, 0], sizes = [14, 8], strides = [1, 1]} : vector<14x32xf32> to vector<14x8xf32>
    %257 = vector.extract_strided_slice %254 {offsets = [0, 0], sizes = [14, 8], strides = [1, 1]} : vector<14x32xf32> to vector<14x8xf32>
    %cst_137 = arith.constant dense<0.000000e+00> : vector<14x14xf32>
    %258 = tpu.matmul %256, %257, %cst_137 {dimension_numbers = #tpu.dot_dimension_numbers<[1], [1], [0], [0], [0, 0, 1, 0], [], []>} : vector<14x8xf32>, vector<14x8xf32>, vector<14x14xf32> -> vector<14x14xf32>
    %cst_138 = arith.constant 0.353553385 : f32
    %259 = vector.broadcast %cst_138 : f32 to vector<14x14xf32>
    %260 = arith.mulf %258, %259 : vector<14x14xf32>
    %261 = arith.addf %260, %248 : vector<14x14xf32>
    %cst_139 = arith.constant dense<0xFF800000> : vector<14xf32>
    %262 = vector.multi_reduction <maximumf>, %261, %cst_139 [1] : vector<14x14xf32> to vector<14xf32>
    %263 = vector.shape_cast %262 : vector<14xf32> to vector<14x1xf32>
    %264 = vector.broadcast %263 : vector<14x1xf32> to vector<14x14xf32>
    %265 = arith.subf %261, %264 : vector<14x14xf32>
    %266 = math.exp %265 : vector<14x14xf32>
    %cst_140 = arith.constant dense<0.000000e+00> : vector<14xf32>
    %267 = vector.multi_reduction <add>, %266, %cst_140 [1] : vector<14x14xf32> to vector<14xf32>
    %268 = vector.shape_cast %267 : vector<14xf32> to vector<14x1xf32>
    %269 = vector.broadcast %268 : vector<14x1xf32> to vector<14x14xf32>
    %270 = arith.divf %266, %269 : vector<14x14xf32>
    %271 = vector.extract_strided_slice %255 {offsets = [0, 0], sizes = [14, 8], strides = [1, 1]} : vector<14x32xf32> to vector<14x8xf32>
    %cst_141 = arith.constant dense<0.000000e+00> : vector<14x8xf32>
    %272 = tpu.matmul %270, %271, %cst_141 {dimension_numbers = #tpu.dot_dimension_numbers<[1], [0], [0], [1], [0, 0, 1, 1], [], []>} : vector<14x14xf32>, vector<14x8xf32>, vector<14x8xf32> -> vector<14x8xf32>
    %273 = vector.extract_strided_slice %18 {offsets = [0, 0], sizes = [8, 32], strides = [1, 1]} : vector<32x32xf32> to vector<8x32xf32>
    %cst_142 = arith.constant dense<0.000000e+00> : vector<14x32xf32>
    %274 = tpu.matmul %272, %273, %cst_142 {dimension_numbers = #tpu.dot_dimension_numbers<[1], [0], [0], [1], [0, 0, 1, 1], [], []>} : vector<14x8xf32>, vector<8x32xf32>, vector<14x32xf32> -> vector<14x32xf32>
    %275 = vector.extract_strided_slice %253 {offsets = [0, 8], sizes = [14, 8], strides = [1, 1]} : vector<14x32xf32> to vector<14x8xf32>
    %276 = vector.extract_strided_slice %254 {offsets = [0, 8], sizes = [14, 8], strides = [1, 1]} : vector<14x32xf32> to vector<14x8xf32>
    %cst_143 = arith.constant dense<0.000000e+00> : vector<14x14xf32>
    %277 = tpu.matmul %275, %276, %cst_143 {dimension_numbers = #tpu.dot_dimension_numbers<[1], [1], [0], [0], [0, 0, 1, 0], [], []>} : vector<14x8xf32>, vector<14x8xf32>, vector<14x14xf32> -> vector<14x14xf32>
    %cst_144 = arith.constant 0.353553385 : f32
    %278 = vector.broadcast %cst_144 : f32 to vector<14x14xf32>
    %279 = arith.mulf %277, %278 : vector<14x14xf32>
    %280 = arith.addf %279, %248 : vector<14x14xf32>
    %cst_145 = arith.constant dense<0xFF800000> : vector<14xf32>
    %281 = vector.multi_reduction <maximumf>, %280, %cst_145 [1] : vector<14x14xf32> to vector<14xf32>
    %282 = vector.shape_cast %281 : vector<14xf32> to vector<14x1xf32>
    %283 = vector.broadcast %282 : vector<14x1xf32> to vector<14x14xf32>
    %284 = arith.subf %280, %283 : vector<14x14xf32>
    %285 = math.exp %284 : vector<14x14xf32>
    %cst_146 = arith.constant dense<0.000000e+00> : vector<14xf32>
    %286 = vector.multi_reduction <add>, %285, %cst_146 [1] : vector<14x14xf32> to vector<14xf32>
    %287 = vector.shape_cast %286 : vector<14xf32> to vector<14x1xf32>
    %288 = vector.broadcast %287 : vector<14x1xf32> to vector<14x14xf32>
    %289 = arith.divf %285, %288 : vector<14x14xf32>
    %290 = vector.extract_strided_slice %255 {offsets = [0, 8], sizes = [14, 8], strides = [1, 1]} : vector<14x32xf32> to vector<14x8xf32>
    %cst_147 = arith.constant dense<0.000000e+00> : vector<14x8xf32>
    %291 = tpu.matmul %289, %290, %cst_147 {dimension_numbers = #tpu.dot_dimension_numbers<[1], [0], [0], [1], [0, 0, 1, 1], [], []>} : vector<14x14xf32>, vector<14x8xf32>, vector<14x8xf32> -> vector<14x8xf32>
    %292 = vector.extract_strided_slice %18 {offsets = [8, 0], sizes = [8, 32], strides = [1, 1]} : vector<32x32xf32> to vector<8x32xf32>
    %cst_148 = arith.constant dense<0.000000e+00> : vector<14x32xf32>
    %293 = tpu.matmul %291, %292, %cst_148 {dimension_numbers = #tpu.dot_dimension_numbers<[1], [0], [0], [1], [0, 0, 1, 1], [], []>} : vector<14x8xf32>, vector<8x32xf32>, vector<14x32xf32> -> vector<14x32xf32>
    %294 = arith.addf %274, %293 : vector<14x32xf32>
    %295 = vector.extract_strided_slice %253 {offsets = [0, 16], sizes = [14, 8], strides = [1, 1]} : vector<14x32xf32> to vector<14x8xf32>
    %296 = vector.extract_strided_slice %254 {offsets = [0, 16], sizes = [14, 8], strides = [1, 1]} : vector<14x32xf32> to vector<14x8xf32>
    %cst_149 = arith.constant dense<0.000000e+00> : vector<14x14xf32>
    %297 = tpu.matmul %295, %296, %cst_149 {dimension_numbers = #tpu.dot_dimension_numbers<[1], [1], [0], [0], [0, 0, 1, 0], [], []>} : vector<14x8xf32>, vector<14x8xf32>, vector<14x14xf32> -> vector<14x14xf32>
    %cst_150 = arith.constant 0.353553385 : f32
    %298 = vector.broadcast %cst_150 : f32 to vector<14x14xf32>
    %299 = arith.mulf %297, %298 : vector<14x14xf32>
    %300 = arith.addf %299, %248 : vector<14x14xf32>
    %cst_151 = arith.constant dense<0xFF800000> : vector<14xf32>
    %301 = vector.multi_reduction <maximumf>, %300, %cst_151 [1] : vector<14x14xf32> to vector<14xf32>
    %302 = vector.shape_cast %301 : vector<14xf32> to vector<14x1xf32>
    %303 = vector.broadcast %302 : vector<14x1xf32> to vector<14x14xf32>
    %304 = arith.subf %300, %303 : vector<14x14xf32>
    %305 = math.exp %304 : vector<14x14xf32>
    %cst_152 = arith.constant dense<0.000000e+00> : vector<14xf32>
    %306 = vector.multi_reduction <add>, %305, %cst_152 [1] : vector<14x14xf32> to vector<14xf32>
    %307 = vector.shape_cast %306 : vector<14xf32> to vector<14x1xf32>
    %308 = vector.broadcast %307 : vector<14x1xf32> to vector<14x14xf32>
    %309 = arith.divf %305, %308 : vector<14x14xf32>
    %310 = vector.extract_strided_slice %255 {offsets = [0, 16], sizes = [14, 8], strides = [1, 1]} : vector<14x32xf32> to vector<14x8xf32>
    %cst_153 = arith.constant dense<0.000000e+00> : vector<14x8xf32>
    %311 = tpu.matmul %309, %310, %cst_153 {dimension_numbers = #tpu.dot_dimension_numbers<[1], [0], [0], [1], [0, 0, 1, 1], [], []>} : vector<14x14xf32>, vector<14x8xf32>, vector<14x8xf32> -> vector<14x8xf32>
    %312 = vector.extract_strided_slice %18 {offsets = [16, 0], sizes = [8, 32], strides = [1, 1]} : vector<32x32xf32> to vector<8x32xf32>
    %cst_154 = arith.constant dense<0.000000e+00> : vector<14x32xf32>
    %313 = tpu.matmul %311, %312, %cst_154 {dimension_numbers = #tpu.dot_dimension_numbers<[1], [0], [0], [1], [0, 0, 1, 1], [], []>} : vector<14x8xf32>, vector<8x32xf32>, vector<14x32xf32> -> vector<14x32xf32>
    %314 = arith.addf %294, %313 : vector<14x32xf32>
    %315 = vector.extract_strided_slice %253 {offsets = [0, 24], sizes = [14, 8], strides = [1, 1]} : vector<14x32xf32> to vector<14x8xf32>
    %316 = vector.extract_strided_slice %254 {offsets = [0, 24], sizes = [14, 8], strides = [1, 1]} : vector<14x32xf32> to vector<14x8xf32>
    %cst_155 = arith.constant dense<0.000000e+00> : vector<14x14xf32>
    %317 = tpu.matmul %315, %316, %cst_155 {dimension_numbers = #tpu.dot_dimension_numbers<[1], [1], [0], [0], [0, 0, 1, 0], [], []>} : vector<14x8xf32>, vector<14x8xf32>, vector<14x14xf32> -> vector<14x14xf32>
    %cst_156 = arith.constant 0.353553385 : f32
    %318 = vector.broadcast %cst_156 : f32 to vector<14x14xf32>
    %319 = arith.mulf %317, %318 : vector<14x14xf32>
    %320 = arith.addf %319, %248 : vector<14x14xf32>
    %cst_157 = arith.constant dense<0xFF800000> : vector<14xf32>
    %321 = vector.multi_reduction <maximumf>, %320, %cst_157 [1] : vector<14x14xf32> to vector<14xf32>
    %322 = vector.shape_cast %321 : vector<14xf32> to vector<14x1xf32>
    %323 = vector.broadcast %322 : vector<14x1xf32> to vector<14x14xf32>
    %324 = arith.subf %320, %323 : vector<14x14xf32>
    %325 = math.exp %324 : vector<14x14xf32>
    %cst_158 = arith.constant dense<0.000000e+00> : vector<14xf32>
    %326 = vector.multi_reduction <add>, %325, %cst_158 [1] : vector<14x14xf32> to vector<14xf32>
    %327 = vector.shape_cast %326 : vector<14xf32> to vector<14x1xf32>
    %328 = vector.broadcast %327 : vector<14x1xf32> to vector<14x14xf32>
    %329 = arith.divf %325, %328 : vector<14x14xf32>
    %330 = vector.extract_strided_slice %255 {offsets = [0, 24], sizes = [14, 8], strides = [1, 1]} : vector<14x32xf32> to vector<14x8xf32>
    %cst_159 = arith.constant dense<0.000000e+00> : vector<14x8xf32>
    %331 = tpu.matmul %329, %330, %cst_159 {dimension_numbers = #tpu.dot_dimension_numbers<[1], [0], [0], [1], [0, 0, 1, 1], [], []>} : vector<14x14xf32>, vector<14x8xf32>, vector<14x8xf32> -> vector<14x8xf32>
    %332 = vector.extract_strided_slice %18 {offsets = [24, 0], sizes = [8, 32], strides = [1, 1]} : vector<32x32xf32> to vector<8x32xf32>
    %cst_160 = arith.constant dense<0.000000e+00> : vector<14x32xf32>
    %333 = tpu.matmul %331, %332, %cst_160 {dimension_numbers = #tpu.dot_dimension_numbers<[1], [0], [0], [1], [0, 0, 1, 1], [], []>} : vector<14x8xf32>, vector<8x32xf32>, vector<14x32xf32> -> vector<14x32xf32>
    %334 = arith.addf %314, %333 : vector<14x32xf32>
    %335 = vector.broadcast %16 : vector<1x32xf32> to vector<14x32xf32>
    %336 = arith.addf %334, %335 : vector<14x32xf32>
    %337 = arith.addf %247, %336 : vector<14x32xf32>
    %cst_161 = arith.constant dense<0.000000e+00> : vector<14xf32>
    %338 = vector.multi_reduction <add>, %337, %cst_161 [1] : vector<14x32xf32> to vector<14xf32>
    %339 = vector.shape_cast %338 : vector<14xf32> to vector<14x1xf32>
    %cst_162 = arith.constant 3.200000e+01 : f32
    %340 = vector.broadcast %cst_162 : f32 to vector<14x1xf32>
    %341 = arith.divf %339, %340 : vector<14x1xf32>
    %342 = vector.broadcast %341 : vector<14x1xf32> to vector<14x32xf32>
    %343 = arith.subf %337, %342 : vector<14x32xf32>
    %344 = arith.mulf %343, %343 : vector<14x32xf32>
    %cst_163 = arith.constant dense<0.000000e+00> : vector<14xf32>
    %345 = vector.multi_reduction <add>, %344, %cst_163 [1] : vector<14x32xf32> to vector<14xf32>
    %346 = vector.shape_cast %345 : vector<14xf32> to vector<14x1xf32>
    %cst_164 = arith.constant 3.200000e+01 : f32
    %347 = vector.broadcast %cst_164 : f32 to vector<14x1xf32>
    %348 = arith.divf %346, %347 : vector<14x1xf32>
    %349 = vector.broadcast %341 : vector<14x1xf32> to vector<14x32xf32>
    %350 = arith.subf %337, %349 : vector<14x32xf32>
    %cst_165 = arith.constant 9.99999974E-6 : f32
    %351 = vector.broadcast %cst_165 : f32 to vector<14x1xf32>
    %352 = arith.addf %348, %351 : vector<14x1xf32>
    %353 = math.rsqrt %352 : vector<14x1xf32>
    %354 = vector.broadcast %353 : vector<14x1xf32> to vector<14x32xf32>
    %355 = arith.mulf %350, %354 : vector<14x32xf32>
    %356 = vector.broadcast %11 : vector<1x32xf32> to vector<14x32xf32>
    %357 = arith.mulf %355, %356 : vector<14x32xf32>
    %358 = vector.broadcast %10 : vector<1x32xf32> to vector<14x32xf32>
    %359 = arith.addf %357, %358 : vector<14x32xf32>
    %360 = vector.extract_strided_slice %5 {offsets = [0, 0], sizes = [32, 32], strides = [1, 1]} : vector<32x96xf32> to vector<32x32xf32>
    %cst_166 = arith.constant dense<0.000000e+00> : vector<14x32xf32>
    %361 = tpu.matmul %359, %360, %cst_166 {dimension_numbers = #tpu.dot_dimension_numbers<[1], [0], [0], [1], [0, 0, 1, 1], [], []>} : vector<14x32xf32>, vector<32x32xf32>, vector<14x32xf32> -> vector<14x32xf32>
    %362 = vector.extract_strided_slice %3 {offsets = [0, 0], sizes = [1, 32], strides = [1, 1]} : vector<1x96xf32> to vector<1x32xf32>
    %363 = vector.broadcast %362 : vector<1x32xf32> to vector<14x32xf32>
    %364 = arith.addf %361, %363 : vector<14x32xf32>
    %365 = vector.extract_strided_slice %5 {offsets = [0, 32], sizes = [32, 64], strides = [1, 1]} : vector<32x96xf32> to vector<32x64xf32>
    %cst_167 = arith.constant dense<0.000000e+00> : vector<16x64xf32>
    %366 = tpu.matmul %214, %365, %cst_167 {dimension_numbers = #tpu.dot_dimension_numbers<[1], [0], [0], [1], [0, 0, 1, 1], [], []>} : vector<16x32xf32>, vector<32x64xf32>, vector<16x64xf32> -> vector<16x64xf32>
    %367 = vector.extract_strided_slice %3 {offsets = [0, 32], sizes = [1, 64], strides = [1, 1]} : vector<1x96xf32> to vector<1x64xf32>
    %368 = vector.broadcast %367 : vector<1x64xf32> to vector<16x64xf32>
    %369 = arith.addf %366, %368 : vector<16x64xf32>
    %370 = vector.extract_strided_slice %369 {offsets = [0, 0], sizes = [16, 32], strides = [1, 1]} : vector<16x64xf32> to vector<16x32xf32>
    %371 = vector.extract_strided_slice %369 {offsets = [0, 32], sizes = [16, 32], strides = [1, 1]} : vector<16x64xf32> to vector<16x32xf32>
    %372 = vector.extract_strided_slice %364 {offsets = [0, 0], sizes = [14, 8], strides = [1, 1]} : vector<14x32xf32> to vector<14x8xf32>
    %373 = vector.extract_strided_slice %370 {offsets = [0, 0], sizes = [16, 8], strides = [1, 1]} : vector<16x32xf32> to vector<16x8xf32>
    %cst_168 = arith.constant dense<0.000000e+00> : vector<14x16xf32>
    %374 = tpu.matmul %372, %373, %cst_168 {dimension_numbers = #tpu.dot_dimension_numbers<[1], [1], [0], [0], [0, 0, 1, 0], [], []>} : vector<14x8xf32>, vector<16x8xf32>, vector<14x16xf32> -> vector<14x16xf32>
    %cst_169 = arith.constant 0.353553385 : f32
    %375 = vector.broadcast %cst_169 : f32 to vector<14x16xf32>
    %376 = arith.mulf %374, %375 : vector<14x16xf32>
    %377 = arith.addf %376, %249 : vector<14x16xf32>
    %cst_170 = arith.constant dense<0xFF800000> : vector<14xf32>
    %378 = vector.multi_reduction <maximumf>, %377, %cst_170 [1] : vector<14x16xf32> to vector<14xf32>
    %379 = vector.shape_cast %378 : vector<14xf32> to vector<14x1xf32>
    %380 = vector.broadcast %379 : vector<14x1xf32> to vector<14x16xf32>
    %381 = arith.subf %377, %380 : vector<14x16xf32>
    %382 = math.exp %381 : vector<14x16xf32>
    %cst_171 = arith.constant dense<0.000000e+00> : vector<14xf32>
    %383 = vector.multi_reduction <add>, %382, %cst_171 [1] : vector<14x16xf32> to vector<14xf32>
    %384 = vector.shape_cast %383 : vector<14xf32> to vector<14x1xf32>
    %385 = vector.broadcast %384 : vector<14x1xf32> to vector<14x16xf32>
    %386 = arith.divf %382, %385 : vector<14x16xf32>
    %387 = vector.extract_strided_slice %371 {offsets = [0, 0], sizes = [16, 8], strides = [1, 1]} : vector<16x32xf32> to vector<16x8xf32>
    %cst_172 = arith.constant dense<0.000000e+00> : vector<14x8xf32>
    %388 = tpu.matmul %386, %387, %cst_172 {dimension_numbers = #tpu.dot_dimension_numbers<[1], [0], [0], [1], [0, 0, 1, 1], [], []>} : vector<14x16xf32>, vector<16x8xf32>, vector<14x8xf32> -> vector<14x8xf32>
    %389 = vector.extract_strided_slice %4 {offsets = [0, 0], sizes = [8, 32], strides = [1, 1]} : vector<32x32xf32> to vector<8x32xf32>
    %cst_173 = arith.constant dense<0.000000e+00> : vector<14x32xf32>
    %390 = tpu.matmul %388, %389, %cst_173 {dimension_numbers = #tpu.dot_dimension_numbers<[1], [0], [0], [1], [0, 0, 1, 1], [], []>} : vector<14x8xf32>, vector<8x32xf32>, vector<14x32xf32> -> vector<14x32xf32>
    %391 = vector.extract_strided_slice %364 {offsets = [0, 8], sizes = [14, 8], strides = [1, 1]} : vector<14x32xf32> to vector<14x8xf32>
    %392 = vector.extract_strided_slice %370 {offsets = [0, 8], sizes = [16, 8], strides = [1, 1]} : vector<16x32xf32> to vector<16x8xf32>
    %cst_174 = arith.constant dense<0.000000e+00> : vector<14x16xf32>
    %393 = tpu.matmul %391, %392, %cst_174 {dimension_numbers = #tpu.dot_dimension_numbers<[1], [1], [0], [0], [0, 0, 1, 0], [], []>} : vector<14x8xf32>, vector<16x8xf32>, vector<14x16xf32> -> vector<14x16xf32>
    %cst_175 = arith.constant 0.353553385 : f32
    %394 = vector.broadcast %cst_175 : f32 to vector<14x16xf32>
    %395 = arith.mulf %393, %394 : vector<14x16xf32>
    %396 = arith.addf %395, %249 : vector<14x16xf32>
    %cst_176 = arith.constant dense<0xFF800000> : vector<14xf32>
    %397 = vector.multi_reduction <maximumf>, %396, %cst_176 [1] : vector<14x16xf32> to vector<14xf32>
    %398 = vector.shape_cast %397 : vector<14xf32> to vector<14x1xf32>
    %399 = vector.broadcast %398 : vector<14x1xf32> to vector<14x16xf32>
    %400 = arith.subf %396, %399 : vector<14x16xf32>
    %401 = math.exp %400 : vector<14x16xf32>
    %cst_177 = arith.constant dense<0.000000e+00> : vector<14xf32>
    %402 = vector.multi_reduction <add>, %401, %cst_177 [1] : vector<14x16xf32> to vector<14xf32>
    %403 = vector.shape_cast %402 : vector<14xf32> to vector<14x1xf32>
    %404 = vector.broadcast %403 : vector<14x1xf32> to vector<14x16xf32>
    %405 = arith.divf %401, %404 : vector<14x16xf32>
    %406 = vector.extract_strided_slice %371 {offsets = [0, 8], sizes = [16, 8], strides = [1, 1]} : vector<16x32xf32> to vector<16x8xf32>
    %cst_178 = arith.constant dense<0.000000e+00> : vector<14x8xf32>
    %407 = tpu.matmul %405, %406, %cst_178 {dimension_numbers = #tpu.dot_dimension_numbers<[1], [0], [0], [1], [0, 0, 1, 1], [], []>} : vector<14x16xf32>, vector<16x8xf32>, vector<14x8xf32> -> vector<14x8xf32>
    %408 = vector.extract_strided_slice %4 {offsets = [8, 0], sizes = [8, 32], strides = [1, 1]} : vector<32x32xf32> to vector<8x32xf32>
    %cst_179 = arith.constant dense<0.000000e+00> : vector<14x32xf32>
    %409 = tpu.matmul %407, %408, %cst_179 {dimension_numbers = #tpu.dot_dimension_numbers<[1], [0], [0], [1], [0, 0, 1, 1], [], []>} : vector<14x8xf32>, vector<8x32xf32>, vector<14x32xf32> -> vector<14x32xf32>
    %410 = arith.addf %390, %409 : vector<14x32xf32>
    %411 = vector.extract_strided_slice %364 {offsets = [0, 16], sizes = [14, 8], strides = [1, 1]} : vector<14x32xf32> to vector<14x8xf32>
    %412 = vector.extract_strided_slice %370 {offsets = [0, 16], sizes = [16, 8], strides = [1, 1]} : vector<16x32xf32> to vector<16x8xf32>
    %cst_180 = arith.constant dense<0.000000e+00> : vector<14x16xf32>
    %413 = tpu.matmul %411, %412, %cst_180 {dimension_numbers = #tpu.dot_dimension_numbers<[1], [1], [0], [0], [0, 0, 1, 0], [], []>} : vector<14x8xf32>, vector<16x8xf32>, vector<14x16xf32> -> vector<14x16xf32>
    %cst_181 = arith.constant 0.353553385 : f32
    %414 = vector.broadcast %cst_181 : f32 to vector<14x16xf32>
    %415 = arith.mulf %413, %414 : vector<14x16xf32>
    %416 = arith.addf %415, %249 : vector<14x16xf32>
    %cst_182 = arith.constant dense<0xFF800000> : vector<14xf32>
    %417 = vector.multi_reduction <maximumf>, %416, %cst_182 [1] : vector<14x16xf32> to vector<14xf32>
    %418 = vector.shape_cast %417 : vector<14xf32> to vector<14x1xf32>
    %419 = vector.broadcast %418 : vector<14x1xf32> to vector<14x16xf32>
    %420 = arith.subf %416, %419 : vector<14x16xf32>
    %421 = math.exp %420 : vector<14x16xf32>
    %cst_183 = arith.constant dense<0.000000e+00> : vector<14xf32>
    %422 = vector.multi_reduction <add>, %421, %cst_183 [1] : vector<14x16xf32> to vector<14xf32>
    %423 = vector.shape_cast %422 : vector<14xf32> to vector<14x1xf32>
    %424 = vector.broadcast %423 : vector<14x1xf32> to vector<14x16xf32>
    %425 = arith.divf %421, %424 : vector<14x16xf32>
    %426 = vector.extract_strided_slice %371 {offsets = [0, 16], sizes = [16, 8], strides = [1, 1]} : vector<16x32xf32> to vector<16x8xf32>
    %cst_184 = arith.constant dense<0.000000e+00> : vector<14x8xf32>
    %427 = tpu.matmul %425, %426, %cst_184 {dimension_numbers = #tpu.dot_dimension_numbers<[1], [0], [0], [1], [0, 0, 1, 1], [], []>} : vector<14x16xf32>, vector<16x8xf32>, vector<14x8xf32> -> vector<14x8xf32>
    %428 = vector.extract_strided_slice %4 {offsets = [16, 0], sizes = [8, 32], strides = [1, 1]} : vector<32x32xf32> to vector<8x32xf32>
    %cst_185 = arith.constant dense<0.000000e+00> : vector<14x32xf32>
    %429 = tpu.matmul %427, %428, %cst_185 {dimension_numbers = #tpu.dot_dimension_numbers<[1], [0], [0], [1], [0, 0, 1, 1], [], []>} : vector<14x8xf32>, vector<8x32xf32>, vector<14x32xf32> -> vector<14x32xf32>
    %430 = arith.addf %410, %429 : vector<14x32xf32>
    %431 = vector.extract_strided_slice %364 {offsets = [0, 24], sizes = [14, 8], strides = [1, 1]} : vector<14x32xf32> to vector<14x8xf32>
    %432 = vector.extract_strided_slice %370 {offsets = [0, 24], sizes = [16, 8], strides = [1, 1]} : vector<16x32xf32> to vector<16x8xf32>
    %cst_186 = arith.constant dense<0.000000e+00> : vector<14x16xf32>
    %433 = tpu.matmul %431, %432, %cst_186 {dimension_numbers = #tpu.dot_dimension_numbers<[1], [1], [0], [0], [0, 0, 1, 0], [], []>} : vector<14x8xf32>, vector<16x8xf32>, vector<14x16xf32> -> vector<14x16xf32>
    %cst_187 = arith.constant 0.353553385 : f32
    %434 = vector.broadcast %cst_187 : f32 to vector<14x16xf32>
    %435 = arith.mulf %433, %434 : vector<14x16xf32>
    %436 = arith.addf %435, %249 : vector<14x16xf32>
    %cst_188 = arith.constant dense<0xFF800000> : vector<14xf32>
    %437 = vector.multi_reduction <maximumf>, %436, %cst_188 [1] : vector<14x16xf32> to vector<14xf32>
    %438 = vector.shape_cast %437 : vector<14xf32> to vector<14x1xf32>
    %439 = vector.broadcast %438 : vector<14x1xf32> to vector<14x16xf32>
    %440 = arith.subf %436, %439 : vector<14x16xf32>
    %441 = math.exp %440 : vector<14x16xf32>
    %cst_189 = arith.constant dense<0.000000e+00> : vector<14xf32>
    %442 = vector.multi_reduction <add>, %441, %cst_189 [1] : vector<14x16xf32> to vector<14xf32>
    %443 = vector.shape_cast %442 : vector<14xf32> to vector<14x1xf32>
    %444 = vector.broadcast %443 : vector<14x1xf32> to vector<14x16xf32>
    %445 = arith.divf %441, %444 : vector<14x16xf32>
    %446 = vector.extract_strided_slice %371 {offsets = [0, 24], sizes = [16, 8], strides = [1, 1]} : vector<16x32xf32> to vector<16x8xf32>
    %cst_190 = arith.constant dense<0.000000e+00> : vector<14x8xf32>
    %447 = tpu.matmul %445, %446, %cst_190 {dimension_numbers = #tpu.dot_dimension_numbers<[1], [0], [0], [1], [0, 0, 1, 1], [], []>} : vector<14x16xf32>, vector<16x8xf32>, vector<14x8xf32> -> vector<14x8xf32>
    %448 = vector.extract_strided_slice %4 {offsets = [24, 0], sizes = [8, 32], strides = [1, 1]} : vector<32x32xf32> to vector<8x32xf32>
    %cst_191 = arith.constant dense<0.000000e+00> : vector<14x32xf32>
    %449 = tpu.matmul %447, %448, %cst_191 {dimension_numbers = #tpu.dot_dimension_numbers<[1], [0], [0], [1], [0, 0, 1, 1], [], []>} : vector<14x8xf32>, vector<8x32xf32>, vector<14x32xf32> -> vector<14x32xf32>
    %450 = arith.addf %430, %449 : vector<14x32xf32>
    %451 = vector.broadcast %2 : vector<1x32xf32> to vector<14x32xf32>
    %452 = arith.addf %450, %451 : vector<14x32xf32>
    %453 = arith.addf %359, %452 : vector<14x32xf32>
    %cst_192 = arith.constant dense<0.000000e+00> : vector<14xf32>
    %454 = vector.multi_reduction <add>, %453, %cst_192 [1] : vector<14x32xf32> to vector<14xf32>
    %455 = vector.shape_cast %454 : vector<14xf32> to vector<14x1xf32>
    %cst_193 = arith.constant 3.200000e+01 : f32
    %456 = vector.broadcast %cst_193 : f32 to vector<14x1xf32>
    %457 = arith.divf %455, %456 : vector<14x1xf32>
    %458 = vector.broadcast %457 : vector<14x1xf32> to vector<14x32xf32>
    %459 = arith.subf %453, %458 : vector<14x32xf32>
    %460 = arith.mulf %459, %459 : vector<14x32xf32>
    %cst_194 = arith.constant dense<0.000000e+00> : vector<14xf32>
    %461 = vector.multi_reduction <add>, %460, %cst_194 [1] : vector<14x32xf32> to vector<14xf32>
    %462 = vector.shape_cast %461 : vector<14xf32> to vector<14x1xf32>
    %cst_195 = arith.constant 3.200000e+01 : f32
    %463 = vector.broadcast %cst_195 : f32 to vector<14x1xf32>
    %464 = arith.divf %462, %463 : vector<14x1xf32>
    %465 = vector.broadcast %457 : vector<14x1xf32> to vector<14x32xf32>
    %466 = arith.subf %453, %465 : vector<14x32xf32>
    %cst_196 = arith.constant 9.99999974E-6 : f32
    %467 = vector.broadcast %cst_196 : f32 to vector<14x1xf32>
    %468 = arith.addf %464, %467 : vector<14x1xf32>
    %469 = math.rsqrt %468 : vector<14x1xf32>
    %470 = vector.broadcast %469 : vector<14x1xf32> to vector<14x32xf32>
    %471 = arith.mulf %466, %470 : vector<14x32xf32>
    %472 = vector.broadcast %13 : vector<1x32xf32> to vector<14x32xf32>
    %473 = arith.mulf %471, %472 : vector<14x32xf32>
    %474 = vector.broadcast %12 : vector<1x32xf32> to vector<14x32xf32>
    %475 = arith.addf %473, %474 : vector<14x32xf32>
    %cst_197 = arith.constant dense<0.000000e+00> : vector<14x64xf32>
    %476 = tpu.matmul %475, %8, %cst_197 {dimension_numbers = #tpu.dot_dimension_numbers<[1], [0], [0], [1], [0, 0, 1, 1], [], []>} : vector<14x32xf32>, vector<32x64xf32>, vector<14x64xf32> -> vector<14x64xf32>
    %477 = vector.broadcast %6 : vector<1x64xf32> to vector<14x64xf32>
    %478 = arith.addf %476, %477 : vector<14x64xf32>
    %479 = arith.negf %478 : vector<14x64xf32>
    %480 = math.exp %479 : vector<14x64xf32>
    %cst_198 = arith.constant 1.000000e+00 : f32
    %481 = vector.broadcast %cst_198 : f32 to vector<14x64xf32>
    %482 = arith.addf %481, %480 : vector<14x64xf32>
    %483 = arith.divf %481, %482 : vector<14x64xf32>
    %484 = arith.mulf %478, %483 : vector<14x64xf32>
    %cst_199 = arith.constant dense<0.000000e+00> : vector<14x32xf32>
    %485 = tpu.matmul %484, %9, %cst_199 {dimension_numbers = #tpu.dot_dimension_numbers<[1], [0], [0], [1], [0, 0, 1, 1], [], []>} : vector<14x64xf32>, vector<64x32xf32>, vector<14x32xf32> -> vector<14x32xf32>
    %486 = vector.broadcast %7 : vector<1x32xf32> to vector<14x32xf32>
    %487 = arith.addf %485, %486 : vector<14x32xf32>
    %488 = arith.addf %475, %487 : vector<14x32xf32>
    %cst_200 = arith.constant dense<0.000000e+00> : vector<14xf32>
    %489 = vector.multi_reduction <add>, %488, %cst_200 [1] : vector<14x32xf32> to vector<14xf32>
    %490 = vector.shape_cast %489 : vector<14xf32> to vector<14x1xf32>
    %cst_201 = arith.constant 3.200000e+01 : f32
    %491 = vector.broadcast %cst_201 : f32 to vector<14x1xf32>
    %492 = arith.divf %490, %491 : vector<14x1xf32>
    %493 = vector.broadcast %492 : vector<14x1xf32> to vector<14x32xf32>
    %494 = arith.subf %488, %493 : vector<14x32xf32>
    %495 = arith.mulf %494, %494 : vector<14x32xf32>
    %cst_202 = arith.constant dense<0.000000e+00> : vector<14xf32>
    %496 = vector.multi_reduction <add>, %495, %cst_202 [1] : vector<14x32xf32> to vector<14xf32>
    %497 = vector.shape_cast %496 : vector<14xf32> to vector<14x1xf32>
    %cst_203 = arith.constant 3.200000e+01 : f32
    %498 = vector.broadcast %cst_203 : f32 to vector<14x1xf32>
    %499 = arith.divf %497, %498 : vector<14x1xf32>
    %500 = vector.broadcast %492 : vector<14x1xf32> to vector<14x32xf32>
    %501 = arith.subf %488, %500 : vector<14x32xf32>
    %cst_204 = arith.constant 9.99999974E-6 : f32
    %502 = vector.broadcast %cst_204 : f32 to vector<14x1xf32>
    %503 = arith.addf %499, %502 : vector<14x1xf32>
    %504 = math.rsqrt %503 : vector<14x1xf32>
    %505 = vector.broadcast %504 : vector<14x1xf32> to vector<14x32xf32>
    %506 = arith.mulf %501, %505 : vector<14x32xf32>
    %507 = vector.broadcast %15 : vector<1x32xf32> to vector<14x32xf32>
    %508 = arith.mulf %506, %507 : vector<14x32xf32>
    %509 = vector.broadcast %14 : vector<1x32xf32> to vector<14x32xf32>
    %510 = arith.addf %508, %509 : vector<14x32xf32>
    %cst_205 = arith.constant dense<0.000000e+00> : vector<14x64xf32>
    %511 = tpu.matmul %510, %20, %cst_205 {dimension_numbers = #tpu.dot_dimension_numbers<[1], [1], [0], [0], [0, 0, 1, 0], [], []>} : vector<14x32xf32>, vector<64x32xf32>, vector<14x64xf32> -> vector<14x64xf32>
    %512 = vector.broadcast %35 : vector<1x64xf32> to vector<14x64xf32>
    %513 = arith.addf %511, %512 : vector<14x64xf32>
    %c0_206 = arith.constant 0 : index
    %c0_207 = arith.constant 0 : index
    %514 = vector.load %arg2[%c0_206, %c0_207] : memref<14x1xi32, #tpu.memory_space<vmem>>, vector<14x1xi32>
    %cst_208 = arith.constant dense<0xFF800000> : vector<14xf32>
    %515 = vector.multi_reduction <maximumf>, %513, %cst_208 [1] : vector<14x64xf32> to vector<14xf32>
    %516 = vector.shape_cast %515 : vector<14xf32> to vector<14x1xf32>
    %517 = vector.broadcast %516 : vector<14x1xf32> to vector<14x64xf32>
    %518 = arith.subf %513, %517 : vector<14x64xf32>
    %519 = math.exp %518 : vector<14x64xf32>
    %cst_209 = arith.constant dense<0.000000e+00> : vector<14xf32>
    %520 = vector.multi_reduction <add>, %519, %cst_209 [1] : vector<14x64xf32> to vector<14xf32>
    %521 = vector.shape_cast %520 : vector<14xf32> to vector<14x1xf32>
    %522 = math.log %521 : vector<14x1xf32>
    %523 = arith.addf %516, %522 : vector<14x1xf32>
    %524 = tpu.iota {dimensions = array<i32: 1>} : vector<14x64xi32>
    %525 = vector.broadcast %514 : vector<14x1xi32> to vector<14x64xi32>
    %526 = arith.cmpi eq, %524, %525 : vector<14x64xi32>
    %cst_210 = arith.constant 0.000000e+00 : f32
    %527 = vector.broadcast %cst_210 : f32 to vector<14x64xf32>
    %528 = arith.select %526, %513, %527 : vector<14x64xi1>, vector<14x64xf32>
    %cst_211 = arith.constant dense<0.000000e+00> : vector<14xf32>
    %529 = vector.multi_reduction <add>, %528, %cst_211 [1] : vector<14x64xf32> to vector<14xf32>
    %530 = vector.shape_cast %529 : vector<14xf32> to vector<14x1xf32>
    %531 = arith.subf %523, %530 : vector<14x1xf32>
    %c0_i32 = arith.constant 0 : i32
    %532 = vector.broadcast %c0_i32 : i32 to vector<14x1xi32>
    %533 = arith.cmpi sge, %514, %532 : vector<14x1xi32>
    %534 = arith.extui %533 : vector<14x1xi1> to vector<14x1xi32>
    %535 = arith.sitofp %534 : vector<14x1xi32> to vector<14x1xf32>
    %536 = arith.mulf %531, %535 : vector<14x1xf32>
    %cst_212 = arith.constant dense<0.000000e+00> : vector<1xf32>
    %537 = vector.multi_reduction <add>, %536, %cst_212 [0] : vector<14x1xf32> to vector<1xf32>
    %538 = vector.shape_cast %537 : vector<1xf32> to vector<1x1xf32>
    %cst_213 = arith.constant dense<0.000000e+00> : vector<1xf32>
    %539 = vector.multi_reduction <add>, %535, %cst_213 [0] : vector<14x1xf32> to vector<1xf32>
    %540 = vector.shape_cast %539 : vector<1xf32> to vector<1x1xf32>
    %cst_214 = arith.constant 1.000000e+00 : f32
    %541 = vector.broadcast %cst_214 : f32 to vector<1x1xf32>
    %542 = arith.maximumf %540, %541 : vector<1x1xf32>
    %543 = arith.divf %538, %542 : vector<1x1xf32>
    %c0_215 = arith.constant 0 : index
    %c0_216 = arith.constant 0 : index
    %544 = vector.load %arg44[%c0_215, %c0_216] : memref<1x1xf32, #tpu.memory_space<vmem>>, vector<1x1xf32>
    tpu.vector_store %arg44[%c0_215, %c0_216], %543 {strides = array<i32>} : memref<1x1xf32, #tpu.memory_space<vmem>>, vector<1x1xf32>,
    return
  }
}

</mosaic_0001>

<llo_original>
// kernel: ge.8
$region0: #{ge.8}
  %s0 = inlined_call_operand.vmem [shape: s32[2,7], index: 0, kind: input, shape index: {}]
  %s1 = inlined_call_operand.vmem [shape: s32[14], index: 1, kind: output, shape index: {}]
  $region1: #{ge.8} parent=0
    #allocation0 [shape = 'u8[4096]{0}', space=vmem, size = 0x1000, scoped, tag = 'scoped mem for output reshape']
    #allocation1 [shape = 'u8[4096]{0}', space=vmem, size = 0x1000, scoped, tag = 'scoped mem for input reshape']
    %s3 = sshll.u32 1, 2
    %s4 = ssub.s32 %s3, 1
    %v5 = vld [vmem:[%s0] sm:%s4]
    %6 = vst [vmem:[#allocation1] sm:%s4] %v5
    %v7 = vld [vmem:[#allocation1] sm:$0x1]
    %vm8 = vcmask 56320
    %9 = vst.msk [vmem:[#allocation0] sm:$0x1] %vm8, %v7
    %s10 = scalar_lea.vmem [#allocation1], 1
    %v11 = vld [vmem:[%s10] sm:$0x1]
    %12 = vrot.lane.b32.xlu0 %v11, 7
    %v13 = vpop.permute.xlu0 %12
    %vm14 = vcmask 113720
    %15 = vst.msk [vmem:[#allocation0] sm:$0x1] %vm14, %v13
    %s17 = sshll.u32 1, 1
    %s18 = ssub.s32 %s17, 1
    %v20 = vld [vmem:[#allocation0] sm:%s18]
    %s21 = sshll.u32 1, 1
    %s22 = ssub.s32 %s21, 1
    %23 = vst [vmem:[%s1] sm:%s22] %v20

// kernel: eq.22
$region0: #{eq.22}
  %s0 = inlined_call_operand.vmem [shape: s32[2,8], index: 0, kind: input, shape index: {}]
  %s1 = inlined_call_operand.vmem [shape: s32[16], index: 1, kind: output, shape index: {}]
  $region1: #{eq.22} parent=0
    #allocation0 [shape = 'u8[4096]{0}', space=vmem, size = 0x1000, scoped, tag = 'scoped mem for output reshape']
    #allocation1 [shape = 'u8[4096]{0}', space=vmem, size = 0x1000, scoped, tag = 'scoped mem for input reshape']
    %s3 = sshll.u32 1, 2
    %s4 = ssub.s32 %s3, 1
    %v5 = vld [vmem:[%s0] sm:%s4]
    %6 = vst [vmem:[#allocation1] sm:%s4] %v5
    %v7 = vld [vmem:[#allocation1] sm:$0x1]
    %vm8 = vcmask 64512
    %9 = vst.msk [vmem:[#allocation0] sm:$0x1] %vm8, %v7
    %s10 = scalar_lea.vmem [#allocation1], 1
    %v11 = vld [vmem:[%s10] sm:$0x1]
    %12 = vrot.lane.b32.xlu0 %v11, 8
    %v13 = vpop.permute.xlu0 %12
    %vm14 = vcmask 130112
    %15 = vst.msk [vmem:[#allocation0] sm:$0x1] %vm14, %v13
    %s17 = sshll.u32 1, 1
    %s18 = ssub.s32 %s17, 1
    %v20 = vld [vmem:[#allocation0] sm:%s18]
    %s21 = sshll.u32 1, 1
    %s22 = ssub.s32 %s21, 1
    %23 = vst [vmem:[%s1] sm:%s22] %v20

// kernel: tile.31
$region0: #{tile.31}
  %s0 = inlined_call_operand.vmem [shape: f32[2,7,32], index: 0, kind: input, shape index: {}]
  %s1 = inlined_call_operand.vmem [shape: f32[14,32], index: 1, kind: output, shape index: {}]
  %v2 = vld [vmem:[%s0] sm:$0x7f]
  %vm3 = vcmask 261120
  %4 = vst.msk [vmem:[%s1] sm:$0x7f] %vm3, %v2
  %s5 = scalar_lea.vmem %s0, 8
  %v6 = vld [vmem:[%s5] sm:$0x7f]
  %vm7 = vcmask 261120
  %s8 = scalar_lea.vmem %s1, 7
  %9 = vst.msk [vmem:[%s8] sm:$0x7f] %vm7, %v6

// kernel: net_forward.1
$region0: #{net_forward.1}
  #allocation0 [shape = 'u32[]', space=smem, size = 0x4, offset = 0x4, fixed_abs, tag = 'smem constant byte address 0x4 - core index']
  #allocation1 [shape = 'u32[144,128]{1,0:T(1,128)}', space=vmem, size = 0x12000, scoped, tag = 'internal scratch']
  %s0 = inlined_call_operand.smem [shape: u32[45], index: -1, kind: input, shape index: {}]
  %s1 = sld [smem:[%s0]]
  %s2 = scalar_lea.smem %s0, 1
  %s3 = sld [smem:[%s2]]
  %s4 = scalar_lea.smem %s0, 2
  %s5 = sld [smem:[%s4]]
  %s6 = scalar_lea.smem %s0, 3
  %s7 = sld [smem:[%s6]]
  %s8 = scalar_lea.smem %s0, 4
  %s9 = sld [smem:[%s8]]
  %s10 = scalar_lea.smem %s0, 5
  %s11 = sld [smem:[%s10]]
  %s12 = scalar_lea.smem %s0, 6
  %s13 = sld [smem:[%s12]]
  %s14 = scalar_lea.smem %s0, 7
  %s15 = sld [smem:[%s14]]
  %s16 = scalar_lea.smem %s0, 8
  %s17 = sld [smem:[%s16]]
  %s18 = scalar_lea.smem %s0, 9
  %s19 = sld [smem:[%s18]]
  %s20 = scalar_lea.smem %s0, 10
  %s21 = sld [smem:[%s20]]
  %s22 = scalar_lea.smem %s0, 11
  %s23 = sld [smem:[%s22]]
  %s24 = scalar_lea.smem %s0, 12
  %s25 = sld [smem:[%s24]]
  %s26 = scalar_lea.smem %s0, 13
  %s27 = sld [smem:[%s26]]
  %s28 = scalar_lea.smem %s0, 14
  %s29 = sld [smem:[%s28]]
  %s30 = scalar_lea.smem %s0, 15
  %s31 = sld [smem:[%s30]]
  %s32 = scalar_lea.smem %s0, 16
  %s33 = sld [smem:[%s32]]
  %s34 = scalar_lea.smem %s0, 17
  %s35 = sld [smem:[%s34]]
  %s36 = scalar_lea.smem %s0, 18
  %s37 = sld [smem:[%s36]]
  %s38 = scalar_lea.smem %s0, 19
  %s39 = sld [smem:[%s38]]
  %s40 = scalar_lea.smem %s0, 20
  %s41 = sld [smem:[%s40]]
  %s42 = scalar_lea.smem %s0, 21
  %s43 = sld [smem:[%s42]]
  %s44 = scalar_lea.smem %s0, 22
  %s45 = sld [smem:[%s44]]
  %s46 = scalar_lea.smem %s0, 23
  %s47 = sld [smem:[%s46]]
  %s48 = scalar_lea.smem %s0, 24
  %s49 = sld [smem:[%s48]]
  %s50 = scalar_lea.smem %s0, 25
  %s51 = sld [smem:[%s50]]
  %s52 = scalar_lea.smem %s0, 26
  %s53 = sld [smem:[%s52]]
  %s54 = scalar_lea.smem %s0, 27
  %s55 = sld [smem:[%s54]]
  %s56 = scalar_lea.smem %s0, 28
  %s57 = sld [smem:[%s56]]
  %s58 = scalar_lea.smem %s0, 29
  %s59 = sld [smem:[%s58]]
  %s60 = scalar_lea.smem %s0, 30
  %s61 = sld [smem:[%s60]]
  %s62 = scalar_lea.smem %s0, 31
  %s63 = sld [smem:[%s62]]
  %s64 = scalar_lea.smem %s0, 32
  %s65 = sld [smem:[%s64]]
  %s66 = scalar_lea.smem %s0, 33
  %s67 = sld [smem:[%s66]]
  %s68 = scalar_lea.smem %s0, 34
  %s69 = sld [smem:[%s68]]
  %s70 = scalar_lea.smem %s0, 35
  %s71 = sld [smem:[%s70]]
  %s72 = scalar_lea.smem %s0, 36
  %s73 = sld [smem:[%s72]]
  %s74 = scalar_lea.smem %s0, 37
  %s75 = sld [smem:[%s74]]
  %s76 = scalar_lea.smem %s0, 38
  %s77 = sld [smem:[%s76]]
  %s78 = scalar_lea.smem %s0, 39
  %s79 = sld [smem:[%s78]]
  %s80 = scalar_lea.smem %s0, 40
  %s81 = sld [smem:[%s80]]
  %s82 = scalar_lea.smem %s0, 41
  %s83 = sld [smem:[%s82]]
  %s84 = scalar_lea.smem %s0, 42
  %s85 = sld [smem:[%s84]]
  %s86 = scalar_lea.smem %s0, 43
  %s87 = sld [smem:[%s86]]
  %s88 = scalar_lea.smem %s0, 44
  %s89 = sld [smem:[%s88]]
  %s90 = sld [smem:[#allocation0]]
  $region186: #{net_forward.1} parent=0
    _
  %s92 = ssub.s32 1, %s90
  %s93 = scalar_select 0, %s92, %s90
  $region1: #{net_forward.1} parent=0
    #allocation2 [shape = 'u8[512]{0}', space=vmem, size = 0x400, scoped, tag = 'output window, operand 0, single buffered']
    #allocation3 [shape = 's32[1]{0}', space=sflag, size = 0x4, scoped, tag = 'scoped memory for net_forward.1']
    %94 = vsyncpa [#allocation3], 0
    // Predicated region
    $region2: #{net_forward.1} parent=1 // pred_check
      _
    $region3: #{net_forward.1} parent=1 // pred_check_branch
      %96 = sbr.rel (0) target = $region5
    $region4: #{net_forward.1} parent=1 // pred_region
      _
    $region5: #{net_forward.1} parent=1 // pred_fallthru
      _
    // Predicated region
    $region6: #{net_forward.1} parent=1 // pred_check
      _
    $region7: #{net_forward.1} parent=1 // pred_check_branch
      %98 = sbr.rel (0) target = $region9
    $region8: #{net_forward.1} parent=1 // pred_region
      _
    $region9: #{net_forward.1} parent=1 // pred_fallthru
      _
    // Predicated region
    $region10: #{net_forward.1} parent=1 // pred_check
      _
    $region11: #{net_forward.1} parent=1 // pred_check_branch
      %100 = sbr.rel (0) target = $region13
    $region12: #{net_forward.1} parent=1 // pred_region
      _
    $region13: #{net_forward.1} parent=1 // pred_fallthru
      _
    // Predicated region
    $region14: #{net_forward.1} parent=1 // pred_check
      _
    $region15: #{net_forward.1} parent=1 // pred_check_branch
      %102 = sbr.rel (0) target = $region17
    $region16: #{net_forward.1} parent=1 // pred_region
      _
    $region17: #{net_forward.1} parent=1 // pred_fallthru
      _
    // Predicated region
    $region18: #{net_forward.1} parent=1 // pred_check
      _
    $region19: #{net_forward.1} parent=1 // pred_check_branch
      %104 = sbr.rel (0) target = $region21
    $region20: #{net_forward.1} parent=1 // pred_region
      _
    $region21: #{net_forward.1} parent=1 // pred_fallthru
      _
    // Predicated region
    $region22: #{net_forward.1} parent=1 // pred_check
      _
    $region23: #{net_forward.1} parent=1 // pred_check_branch
      %106 = sbr.rel (0) target = $region25
    $region24: #{net_forward.1} parent=1 // pred_region
      _
    $region25: #{net_forward.1} parent=1 // pred_fallthru
      _
    // Predicated region
    $region26: #{net_forward.1} parent=1 // pred_check
      _
    $region27: #{net_forward.1} parent=1 // pred_check_branch
      %108 = sbr.rel (0) target = $region29
    $region28: #{net_forward.1} parent=1 // pred_region
      _
    $region29: #{net_forward.1} parent=1 // pred_fallthru
      _
    // Predicated region
    $region30: #{net_forward.1} parent=1 // pred_check
      _
    $region31: #{net_forward.1} parent=1 // pred_check_branch
      %110 = sbr.rel (0) target = $region33
    $region32: #{net_forward.1} parent=1 // pred_region
      _
    $region33: #{net_forward.1} parent=1 // pred_fallthru
      _
    // Predicated region
    $region34: #{net_forward.1} parent=1 // pred_check
      _
    $region35: #{net_forward.1} parent=1 // pred_check_branch
      %112 = sbr.rel (0) target = $region37
    $region36: #{net_forward.1} parent=1 // pred_region
      _
    $region37: #{net_forward.1} parent=1 // pred_fallthru
      _
    // Predicated region
    $region38: #{net_forward.1} parent=1 // pred_check
      _
    $region39: #{net_forward.1} parent=1 // pred_check_branch
      %114 = sbr.rel (0) target = $region41
    $region40: #{net_forward.1} parent=1 // pred_region
      _
    $region41: #{net_forward.1} parent=1 // pred_fallthru
      _
    // Predicated region
    $region42: #{net_forward.1} parent=1 // pred_check
      _
    $region43: #{net_forward.1} parent=1 // pred_check_branch
      %116 = sbr.rel (0) target = $region45
    $region44: #{net_forward.1} parent=1 // pred_region
      _
    $region45: #{net_forward.1} parent=1 // pred_fallthru
      _
    // Predicated region
    $region46: #{net_forward.1} parent=1 // pred_check
      _
    $region47: #{net_forward.1} parent=1 // pred_check_branch
      %118 = sbr.rel (0) target = $region49
    $region48: #{net_forward.1} parent=1 // pred_region
      _
    $region49: #{net_forward.1} parent=1 // pred_fallthru
      _
    // Predicated region
    $region50: #{net_forward.1} parent=1 // pred_check
      _
    $region51: #{net_forward.1} parent=1 // pred_check_branch
      %120 = sbr.rel (0) target = $region53
    $region52: #{net_forward.1} parent=1 // pred_region
      _
    $region53: #{net_forward.1} parent=1 // pred_fallthru
      _
    // Predicated region
    $region54: #{net_forward.1} parent=1 // pred_check
      _
    $region55: #{net_forward.1} parent=1 // pred_check_branch
      %122 = sbr.rel (0) target = $region57
    $region56: #{net_forward.1} parent=1 // pred_region
      _
    $region57: #{net_forward.1} parent=1 // pred_fallthru
      _
    // Predicated region
    $region58: #{net_forward.1} parent=1 // pred_check
      _
    $region59: #{net_forward.1} parent=1 // pred_check_branch
      %124 = sbr.rel (0) target = $region61
    $region60: #{net_forward.1} parent=1 // pred_region
      _
    $region61: #{net_forward.1} parent=1 // pred_fallthru
      _
    // Predicated region
    $region62: #{net_forward.1} parent=1 // pred_check
      _
    $region63: #{net_forward.1} parent=1 // pred_check_branch
      %126 = sbr.rel (0) target = $region65
    $region64: #{net_forward.1} parent=1 // pred_region
      _
    $region65: #{net_forward.1} parent=1 // pred_fallthru
      _
    // Predicated region
    $region66: #{net_forward.1} parent=1 // pred_check
      _
    $region67: #{net_forward.1} parent=1 // pred_check_branch
      %128 = sbr.rel (0) target = $region69
    $region68: #{net_forward.1} parent=1 // pred_region
      _
    $region69: #{net_forward.1} parent=1 // pred_fallthru
      _
    // Predicated region
    $region70: #{net_forward.1} parent=1 // pred_check
      _
    $region71: #{net_forward.1} parent=1 // pred_check_branch
      %130 = sbr.rel (0) target = $region73
    $region72: #{net_forward.1} parent=1 // pred_region
      _
    $region73: #{net_forward.1} parent=1 // pred_fallthru
      _
    // Predicated region
    $region74: #{net_forward.1} parent=1 // pred_check
      _
    $region75: #{net_forward.1} parent=1 // pred_check_branch
      %132 = sbr.rel (0) target = $region77
    $region76: #{net_forward.1} parent=1 // pred_region
      _
    $region77: #{net_forward.1} parent=1 // pred_fallthru
      _
    // Predicated region
    $region78: #{net_forward.1} parent=1 // pred_check
      _
    $region79: #{net_forward.1} parent=1 // pred_check_branch
      %134 = sbr.rel (0) target = $region81
    $region80: #{net_forward.1} parent=1 // pred_region
      _
    $region81: #{net_forward.1} parent=1 // pred_fallthru
      _
    // Predicated region
    $region82: #{net_forward.1} parent=1 // pred_check
      _
    $region83: #{net_forward.1} parent=1 // pred_check_branch
      %136 = sbr.rel (0) target = $region85
    $region84: #{net_forward.1} parent=1 // pred_region
      _
    $region85: #{net_forward.1} parent=1 // pred_fallthru
      _
    // Predicated region
    $region86: #{net_forward.1} parent=1 // pred_check
      _
    $region87: #{net_forward.1} parent=1 // pred_check_branch
      %138 = sbr.rel (0) target = $region89
    $region88: #{net_forward.1} parent=1 // pred_region
      _
    $region89: #{net_forward.1} parent=1 // pred_fallthru
      _
    // Predicated region
    $region90: #{net_forward.1} parent=1 // pred_check
      _
    $region91: #{net_forward.1} parent=1 // pred_check_branch
      %140 = sbr.rel (0) target = $region93
    $region92: #{net_forward.1} parent=1 // pred_region
      _
    $region93: #{net_forward.1} parent=1 // pred_fallthru
      _
    // Predicated region
    $region94: #{net_forward.1} parent=1 // pred_check
      _
    $region95: #{net_forward.1} parent=1 // pred_check_branch
      %142 = sbr.rel (0) target = $region97
    $region96: #{net_forward.1} parent=1 // pred_region
      _
    $region97: #{net_forward.1} parent=1 // pred_fallthru
      _
    // Predicated region
    $region98: #{net_forward.1} parent=1 // pred_check
      _
    $region99: #{net_forward.1} parent=1 // pred_check_branch
      %144 = sbr.rel (0) target = $region101
    $region100: #{net_forward.1} parent=1 // pred_region
      _
    $region101: #{net_forward.1} parent=1 // pred_fallthru
      _
    // Predicated region
    $region102: #{net_forward.1} parent=1 // pred_check
      _
    $region103: #{net_forward.1} parent=1 // pred_check_branch
      %146 = sbr.rel (0) target = $region105
    $region104: #{net_forward.1} parent=1 // pred_region
      _
    $region105: #{net_forward.1} parent=1 // pred_fallthru
      _
    // Predicated region
    $region106: #{net_forward.1} parent=1 // pred_check
      _
    $region107: #{net_forward.1} parent=1 // pred_check_branch
      %148 = sbr.rel (0) target = $region109
    $region108: #{net_forward.1} parent=1 // pred_region
      _
    $region109: #{net_forward.1} parent=1 // pred_fallthru
      _
    // Predicated region
    $region110: #{net_forward.1} parent=1 // pred_check
      _
    $region111: #{net_forward.1} parent=1 // pred_check_branch
      %150 = sbr.rel (0) target = $region113
    $region112: #{net_forward.1} parent=1 // pred_region
      _
    $region113: #{net_forward.1} parent=1 // pred_fallthru
      _
    // Predicated region
    $region114: #{net_forward.1} parent=1 // pred_check
      _
    $region115: #{net_forward.1} parent=1 // pred_check_branch
      %152 = sbr.rel (0) target = $region117
    $region116: #{net_forward.1} parent=1 // pred_region
      _
    $region117: #{net_forward.1} parent=1 // pred_fallthru
      _
    // Predicated region
    $region118: #{net_forward.1} parent=1 // pred_check
      _
    $region119: #{net_forward.1} parent=1 // pred_check_branch
      %154 = sbr.rel (0) target = $region121
    $region120: #{net_forward.1} parent=1 // pred_region
      _
    $region121: #{net_forward.1} parent=1 // pred_fallthru
      _
    // Predicated region
    $region122: #{net_forward.1} parent=1 // pred_check
      _
    $region123: #{net_forward.1} parent=1 // pred_check_branch
      %156 = sbr.rel (0) target = $region125
    $region124: #{net_forward.1} parent=1 // pred_region
      _
    $region125: #{net_forward.1} parent=1 // pred_fallthru
      _
    // Predicated region
    $region126: #{net_forward.1} parent=1 // pred_check
      _
    $region127: #{net_forward.1} parent=1 // pred_check_branch
      %158 = sbr.rel (0) target = $region129
    $region128: #{net_forward.1} parent=1 // pred_region
      _
    $region129: #{net_forward.1} parent=1 // pred_fallthru
      _
    // Predicated region
    $region130: #{net_forward.1} parent=1 // pred_check
      _
    $region131: #{net_forward.1} parent=1 // pred_check_branch
      %160 = sbr.rel (0) target = $region133
    $region132: #{net_forward.1} parent=1 // pred_region
      _
    $region133: #{net_forward.1} parent=1 // pred_fallthru
      _
    // Predicated region
    $region134: #{net_forward.1} parent=1 // pred_check
      _
    $region135: #{net_forward.1} parent=1 // pred_check_branch
      %162 = sbr.rel (0) target = $region137
    $region136: #{net_forward.1} parent=1 // pred_region
      _
    $region137: #{net_forward.1} parent=1 // pred_fallthru
      _
    // Predicated region
    $region138: #{net_forward.1} parent=1 // pred_check
      _
    $region139: #{net_forward.1} parent=1 // pred_check_branch
      %164 = sbr.rel (0) target = $region141
    $region140: #{net_forward.1} parent=1 // pred_region
      _
    $region141: #{net_forward.1} parent=1 // pred_fallthru
      _
    // Predicated region
    $region142: #{net_forward.1} parent=1 // pred_check
      _
    $region143: #{net_forward.1} parent=1 // pred_check_branch
      %166 = sbr.rel (0) target = $region145
    $region144: #{net_forward.1} parent=1 // pred_region
      _
    $region145: #{net_forward.1} parent=1 // pred_fallthru
      _
    // Predicated region
    $region146: #{net_forward.1} parent=1 // pred_check
      _
    $region147: #{net_forward.1} parent=1 // pred_check_branch
      %168 = sbr.rel (0) target = $region149
    $region148: #{net_forward.1} parent=1 // pred_region
      _
    $region149: #{net_forward.1} parent=1 // pred_fallthru
      _
    // Predicated region
    $region150: #{net_forward.1} parent=1 // pred_check
      _
    $region151: #{net_forward.1} parent=1 // pred_check_branch
      %170 = sbr.rel (0) target = $region153
    $region152: #{net_forward.1} parent=1 // pred_region
      _
    $region153: #{net_forward.1} parent=1 // pred_fallthru
      _
    // Predicated region
    $region154: #{net_forward.1} parent=1 // pred_check
      _
    $region155: #{net_forward.1} parent=1 // pred_check_branch
      %172 = sbr.rel (0) target = $region157
    $region156: #{net_forward.1} parent=1 // pred_region
      _
    $region157: #{net_forward.1} parent=1 // pred_fallthru
      _
    // Predicated region
    $region158: #{net_forward.1} parent=1 // pred_check
      _
    $region159: #{net_forward.1} parent=1 // pred_check_branch
      %174 = sbr.rel (0) target = $region161
    $region160: #{net_forward.1} parent=1 // pred_region
      _
    $region161: #{net_forward.1} parent=1 // pred_fallthru
      _
    // Predicated region
    $region162: #{net_forward.1} parent=1 // pred_check
      _
    $region163: #{net_forward.1} parent=1 // pred_check_branch
      %176 = sbr.rel (0) target = $region165
    $region164: #{net_forward.1} parent=1 // pred_region
      _
    $region165: #{net_forward.1} parent=1 // pred_fallthru
      _
    // Predicated region
    $region166: #{net_forward.1} parent=1 // pred_check
      _
    $region167: #{net_forward.1} parent=1 // pred_check_branch
      %178 = sbr.rel (0) target = $region169
    $region168: #{net_forward.1} parent=1 // pred_region
      _
    $region169: #{net_forward.1} parent=1 // pred_fallthru
      _
    // Predicated region
    $region170: #{net_forward.1} parent=1 // pred_check
      _
    $region171: #{net_forward.1} parent=1 // pred_check_branch
      %180 = sbr.rel (0) target = $region173
    $region172: #{net_forward.1} parent=1 // pred_region
      _
    $region173: #{net_forward.1} parent=1 // pred_fallthru
      _
    // Predicated region
    $region174: #{net_forward.1} parent=1 // pred_check
      _
    $region175: #{net_forward.1} parent=1 // pred_check_branch
      %182 = sbr.rel (0) target = $region177
    $region176: #{net_forward.1} parent=1 // pred_region
      _
    $region177: #{net_forward.1} parent=1 // pred_fallthru
      _
    %v183 = vld [vmem:[%s17] sm:$0x1]
    %v184 = vld [vmem:[%s19] sm:$0x1]
    %v185 = vld [vmem:[%s21] sm:$0x1]
    %v186 = vld [vmem:[%s23] sm:$0x1]
    %v187 = vld [vmem:[%s25] sm:$0xff]
    %v188 = vld [vmem:[%s25 + $0x8] sm:$0xff]
    %v189 = vld [vmem:[%s25 + $0x10] sm:$0xff]
    %v190 = vld [vmem:[%s25 + $0x18] sm:$0xff]
    %v191 = vld [vmem:[%s27] sm:$0xff]
    %v192 = vld [vmem:[%s27 + $0x8] sm:$0xff]
    %v193 = vld [vmem:[%s27 + $0x10] sm:$0xff]
    %v194 = vld [vmem:[%s27 + $0x18] sm:$0xff]
    %v195 = vld [vmem:[%s29] sm:$0x1]
    %v196 = vld [vmem:[%s31] sm:$0x1]
    %v197 = vld [vmem:[%s33] sm:$0xff]
    %v198 = vld [vmem:[%s33 + $0x8] sm:$0xff]
    %v199 = vld [vmem:[%s33 + $0x10] sm:$0xff]
    %v200 = vld [vmem:[%s33 + $0x18] sm:$0xff]
    %v201 = vld [vmem:[%s35] sm:$0xff]
    %v202 = vld [vmem:[%s35 + $0x8] sm:$0xff]
    %v203 = vld [vmem:[%s35 + $0x10] sm:$0xff]
    %v204 = vld [vmem:[%s35 + $0x18] sm:$0xff]
    %v205 = vld [vmem:[%s35 + $0x20] sm:$0xff]
    %v206 = vld [vmem:[%s35 + $0x28] sm:$0xff]
    %v207 = vld [vmem:[%s35 + $0x30] sm:$0xff]
    %v208 = vld [vmem:[%s35 + $0x38] sm:$0xff]
    %v209 = vld [vmem:[%s37] sm:$0x1]
    %v210 = vld [vmem:[%s39] sm:$0x1]
    %v211 = vld [vmem:[%s41] sm:$0x1]
    %v212 = vld [vmem:[%s43] sm:$0x1]
    %v213 = vld [vmem:[%s45] sm:$0x1]
    %v214 = vld [vmem:[%s47] sm:$0x1]
    %v215 = vld [vmem:[%s49] sm:$0x1]
    %v216 = vld [vmem:[%s51] sm:$0x1]
    %v217 = vld [vmem:[%s53] sm:$0xff]
    %v218 = vld [vmem:[%s53 + $0x8] sm:$0xff]
    %v219 = vld [vmem:[%s53 + $0x10] sm:$0xff]
    %v220 = vld [vmem:[%s53 + $0x18] sm:$0xff]
    %v221 = vld [vmem:[%s55] sm:$0xff]
    %v222 = vld [vmem:[%s55 + $0x8] sm:$0xff]
    %v223 = vld [vmem:[%s55 + $0x10] sm:$0xff]
    %v224 = vld [vmem:[%s55 + $0x18] sm:$0xff]
    %v225 = vld [vmem:[%s57] sm:$0xff]
    %v226 = vld [vmem:[%s57 + $0x8] sm:$0xff]
    %v227 = vld [vmem:[%s57 + $0x10] sm:$0xff]
    %v228 = vld [vmem:[%s57 + $0x18] sm:$0xff]
    %v229 = vld [vmem:[%s57 + $0x20] sm:$0xff]
    %v230 = vld [vmem:[%s57 + $0x28] sm:$0xff]
    %v231 = vld [vmem:[%s57 + $0x30] sm:$0xff]
    %v232 = vld [vmem:[%s57 + $0x38] sm:$0xff]
    %v233 = vld [vmem:[%s59] sm:$0x1]
    %v234 = vld [vmem:[%s61] sm:$0x1]
    %v235 = vld [vmem:[%s63] sm:$0x1]
    %v236 = vld [vmem:[%s65] sm:$0x1]
    %v237 = vld [vmem:[%s67] sm:$0xff]
    %v238 = vld [vmem:[%s67 + $0x8] sm:$0xff]
    %v239 = vld [vmem:[%s67 + $0x10] sm:$0xff]
    %v240 = vld [vmem:[%s67 + $0x18] sm:$0xff]
    %v241 = vld [vmem:[%s69] sm:$0xff]
    %v242 = vld [vmem:[%s69 + $0x8] sm:$0xff]
    %v243 = vld [vmem:[%s69 + $0x10] sm:$0xff]
    %v244 = vld [vmem:[%s69 + $0x18] sm:$0xff]
    %v245 = vld [vmem:[%s69 + $0x20] sm:$0xff]
    %v246 = vld [vmem:[%s69 + $0x28] sm:$0xff]
    %v247 = vld [vmem:[%s69 + $0x30] sm:$0xff]
    %v248 = vld [vmem:[%s69 + $0x38] sm:$0xff]
    %v249 = vld [vmem:[%s71] sm:$0x1]
    %v250 = vld [vmem:[%s73] sm:$0x1]
    %v251 = vld [vmem:[%s75] sm:$0x1]
    %v252 = vld [vmem:[%s77] sm:$0x1]
    %v253 = vld [vmem:[%s79] sm:$0x1]
    %v254 = vld [vmem:[%s81] sm:$0x1]
    %v255 = vld [vmem:[%s83] sm:$0xff]
    %v256 = vld [vmem:[%s83 + $0x8] sm:$0xff]
    %v257 = vld [vmem:[%s83 + $0x10] sm:$0xff]
    %v258 = vld [vmem:[%s83 + $0x18] sm:$0xff]
    %v259 = vld [vmem:[%s85] sm:$0xff]
    %v260 = vld [vmem:[%s85 + $0x8] sm:$0xff]
    %v261 = vld [vmem:[%s85 + $0x10] sm:$0xff]
    %v262 = vld [vmem:[%s85 + $0x18] sm:$0xff]
    %v263 = vld [vmem:[%s87] sm:$0x1]
    %v264 = vld [vmem:[%s1] sm:$0xff]
    %v265 = vld [vmem:[%s1 + $0x8] sm:$0xff]
    %v266 = vlaneseq
    %v267 = vand.u32 %v266, 127
    %268 = vset.pattern.permute.xlu0 0
    %269 = vperm.xlu0 %268, %v264
    %v270 = vpop.permute.xlu0 %269
    %271 = vset.pattern.permute.xlu0 0
    %272 = vperm.xlu0 %271, %v265
    %v273 = vpop.permute.xlu0 %272
    %vm274 = vcmp.eq.s32.totalorder %v267, %v270
    %vm275 = vcmp.eq.s32.totalorder %v267, %v273
    %v276 = vsel %vm274, 1, 0
    %v277 = vsel %vm275, 1, 0
    %v278 = vcvt.s32.f32 %v276
    %v279 = vcvt.s32.f32 %v277
    %vm280 = vcmask 523264
    %v282 = vsel %vm280, %v278, 0
    %v285 = vsel %vm280, %v279, 0
    %287 = vmatprep.subr.mxu0 0.0
    %288 = vmatpush1.msra.mxu0 0.0
    %289 = vmatprep.subr.mxu0 0.0
    %290 = vmatpush1.msra.mxu0 0.0
    %291 = vmatprep.subr.mxu0 0.0
    %292 = vmatpush1.msra.mxu0 0.0
    %293 = vmatprep.subr.mxu0 0.0
    %294 = vmatpush1.msra.mxu0 0.0
    %295 = vmatprep.subr.mxu0 0.0
    %296 = vmatpush1.msra.mxu0 0.0
    %297 = vmatprep.subr.mxu0 0.0
    %298 = vmatpush1.msra.mxu0 0.0
    %299 = vmatprep.subr.mxu0 0.0
    %300 = vmatpush1.msra.mxu0 0.0
    %301 = vmatprep.subr.mxu0 0.0
    %302 = vmatpush1.msra.mxu0 0.0
    %303 = vmatprep.subr.mxu0 0.0
    %304 = vmatpush1.msra.mxu0 %v232
    %305 = vmatprep.subr.mxu0 0.0
    %306 = vmatpush1.msra.mxu0 %v231
    %307 = vmatprep.subr.mxu0 0.0
    %308 = vmatpush1.msra.mxu0 %v230
    %309 = vmatprep.subr.mxu0 0.0
    %310 = vmatpush1.msra.mxu0 %v229
    %311 = vmatprep.subr.mxu0 0.0
    %312 = vmatpush1.msra.mxu0 %v228
    %313 = vmatprep.subr.mxu0 0.0
    %314 = vmatpush1.msra.mxu0 %v227
    %315 = vmatprep.subr.mxu0 0.0
    %316 = vmatpush1.msra.mxu0 %v226
    %317 = vmatprep.subr.mxu0 0.0
    %318 = vmatpush1.msra.mxu0 %v225
    %319 = vmatprep.subr.mxu0 0.0
    %320 = vmatpush2.msra.mxu0 0.0
    %321 = vmatprep.subr.mxu0 0.0
    %322 = vmatpush2.msra.mxu0 0.0
    %323 = vmatprep.subr.mxu0 0.0
    %324 = vmatpush2.msra.mxu0 0.0
    %325 = vmatprep.subr.mxu0 0.0
    %326 = vmatpush2.msra.mxu0 0.0
    %327 = vmatprep.subr.mxu0 0.0
    %328 = vmatpush2.msra.mxu0 0.0
    %329 = vmatprep.subr.mxu0 0.0
    %330 = vmatpush2.msra.mxu0 0.0
    %331 = vmatprep.subr.mxu0 0.0
    %332 = vmatpush2.msra.mxu0 0.0
    %333 = vmatprep.subr.mxu0 0.0
    %334 = vmatpush2.msra.mxu0 0.0
    %335 = vmatprep.subr.mxu0 0.0
    %336 = vmatpush2.msra.mxu0 0.0
    %337 = vmatprep.subr.mxu0 0.0
    %338 = vmatpush2.msra.mxu0 0.0
    %339 = vmatprep.subr.mxu0 0.0
    %340 = vmatpush2.msra.mxu0 0.0
    %341 = vmatprep.subr.mxu0 0.0
    %342 = vmatpush2.msra.mxu0 0.0
    %343 = vmatprep.subr.mxu0 0.0
    %344 = vmatpush2.msra.mxu0 0.0
    %345 = vmatprep.subr.mxu0 0.0
    %346 = vmatpush2.msra.mxu0 0.0
    %347 = vmatprep.subr.mxu0 0.0
    %348 = vmatpush2.msra.mxu0 0.0
    %349 = vmatprep.subr.mxu0 0.0
    %350 = vmatpush2.msra.mxu0 0.0
    %351 = vmatprep.mubr.f32.mxu0 0.0
    %352 = vmatmul.mubr.f32.gmra.mxu0 %v282
    %v353 = vpop.f32.mrf.mxu0
    %v354 = vadd.f32 0.0, %v353
    %v355 = vpop.f32.mrf.mxu0
    %356 = vmatprep.mubr.f32.mxu0 0.0
    %357 = vmatmul.mubr.f32.gmra.mxu0 %v285
    %v358 = vpop.f32.mrf.mxu0
    %v359 = vadd.f32 0.0, %v358
    %v360 = vpop.f32.mrf.mxu0
    %361 = vdwg.mxu0
    %v362 = vmul.f32 %v354, 5.656854
    %v363 = vmul.f32 %v359, 5.656854
    %v364 = vld [vmem:[%s7] sm:$0xff]
    %v365 = vld [vmem:[%s7 + $0x8] sm:$0xff]
    %v366 = vadd.f32 %v362, %v364
    %v367 = vadd.f32 %v363, %v365
    %vm368 = vcmask 261120
    %v369 = vsel %vm368, %v366, 0.0
    %370 = vadd.xlane.f32.xlu0 %v369
    %v371 = vpop.xlane.xlu0 %370
    %v372 = vsel %vm368, %v367, 0.0
    %373 = vadd.xlane.f32.xlu0 %v372
    %v374 = vpop.xlane.xlu0 %373
    %v375 = vrcp.pop 32.0
    %v376 = vmul.f32 %v371, %v375
    %v377 = vmul.f32 %v374, %v375
    %v378 = vsub.f32 %v366, %v376
    %v379 = vsub.f32 %v367, %v377
    %v380 = vmul.f32 %v378, %v378
    %v381 = vmul.f32 %v379, %v379
    %v382 = vsel %vm368, %v380, 0.0
    %383 = vadd.xlane.f32.xlu0 %v382
    %v384 = vpop.xlane.xlu0 %383
    %v385 = vsel %vm368, %v381, 0.0
    %386 = vadd.xlane.f32.xlu0 %v385
    %v387 = vpop.xlane.xlu0 %386
    %v388 = vmul.f32 %v384, %v375
    %v389 = vmul.f32 %v387, %v375
    %v390 = vadd.f32 %v388, 1e-05
    %v391 = vadd.f32 %v389, 1e-05
    %v392 = vrsqrt.pop %v390
    %v393 = vrsqrt.pop %v391
    %v394 = vmul.f32 %v378, %v392
    %v395 = vmul.f32 %v379, %v393
    %v397 = vlaneseq
    %v398 = vshrl.u32 %v397, 7
    %v399 = vsub.s32 0, %v398
    %v400 = vrot.slane %v234, %v399
    %v402 = vmul.f32 %v394, %v400
    %v403 = vmul.f32 %v395, %v400
    %v405 = vlaneseq
    %v406 = vshrl.u32 %v405, 7
    %v407 = vsub.s32 0, %v406
    %v408 = vrot.slane %v233, %v407
    %v410 = vadd.f32 %v402, %v408
    %v411 = vadd.f32 %v403, %v408
    %v412 = vld [vmem:[%s11] sm:$0xff]
    %v413 = vld [vmem:[%s11 + $0x8] sm:$0xff]
    %v415 = vlaneseq
    %v416 = vshrl.u32 %v415, 7
    %v417 = vsub.s32 0, %v416
    %v418 = vrot.slane %v254, %v417
    %v421 = vsel %vm368, %v410, 0
    %v424 = vsel %vm368, %v411, 0
    %426 = vmatprep.subr.mxu0 0.0
    %427 = vmatpush1.msra.mxu0 0.0
    %428 = vmatprep.subr.mxu0 0.0
    %429 = vmatpush1.msra.mxu0 0.0
    %430 = vmatprep.subr.mxu0 0.0
    %431 = vmatpush1.msra.mxu0 0.0
    %432 = vmatprep.subr.mxu0 0.0
    %433 = vmatpush1.msra.mxu0 0.0
    %434 = vmatprep.subr.mxu0 0.0
    %435 = vmatpush1.msra.mxu0 0.0
    %436 = vmatprep.subr.mxu0 0.0
    %437 = vmatpush1.msra.mxu0 0.0
    %438 = vmatprep.subr.mxu0 0.0
    %439 = vmatpush1.msra.mxu0 0.0
    %440 = vmatprep.subr.mxu0 0.0
    %441 = vmatpush1.msra.mxu0 0.0
    %442 = vmatprep.subr.mxu0 0.0
    %443 = vmatpush1.msra.mxu0 0.0
    %444 = vmatprep.subr.mxu0 0.0
    %445 = vmatpush1.msra.mxu0 0.0
    %446 = vmatprep.subr.mxu0 0.0
    %447 = vmatpush1.msra.mxu0 0.0
    %448 = vmatprep.subr.mxu0 0.0
    %449 = vmatpush1.msra.mxu0 0.0
    %450 = vmatprep.subr.mxu0 0.0
    %451 = vmatpush1.msra.mxu0 %v262
    %452 = vmatprep.subr.mxu0 0.0
    %453 = vmatpush1.msra.mxu0 %v261
    %454 = vmatprep.subr.mxu0 0.0
    %455 = vmatpush1.msra.mxu0 %v260
    %456 = vmatprep.subr.mxu0 0.0
    %457 = vmatpush1.msra.mxu0 %v259
    %458 = vmatprep.subr.mxu0 0.0
    %459 = vmatpush2.msra.mxu0 0.0
    %460 = vmatprep.subr.mxu0 0.0
    %461 = vmatpush2.msra.mxu0 0.0
    %462 = vmatprep.subr.mxu0 0.0
    %463 = vmatpush2.msra.mxu0 0.0
    %464 = vmatprep.subr.mxu0 0.0
    %465 = vmatpush2.msra.mxu0 0.0
    %466 = vmatprep.subr.mxu0 0.0
    %467 = vmatpush2.msra.mxu0 0.0
    %468 = vmatprep.subr.mxu0 0.0
    %469 = vmatpush2.msra.mxu0 0.0
    %470 = vmatprep.subr.mxu0 0.0
    %471 = vmatpush2.msra.mxu0 0.0
    %472 = vmatprep.subr.mxu0 0.0
    %473 = vmatpush2.msra.mxu0 0.0
    %474 = vmatprep.subr.mxu0 0.0
    %475 = vmatpush2.msra.mxu0 0.0
    %476 = vmatprep.subr.mxu0 0.0
    %477 = vmatpush2.msra.mxu0 0.0
    %478 = vmatprep.subr.mxu0 0.0
    %479 = vmatpush2.msra.mxu0 0.0
    %480 = vmatprep.subr.mxu0 0.0
    %481 = vmatpush2.msra.mxu0 0.0
    %482 = vmatprep.subr.mxu0 0.0
    %483 = vmatpush2.msra.mxu0 0.0
    %484 = vmatprep.subr.mxu0 0.0
    %485 = vmatpush2.msra.mxu0 0.0
    %486 = vmatprep.subr.mxu0 0.0
    %487 = vmatpush2.msra.mxu0 0.0
    %488 = vmatprep.subr.mxu0 0.0
    %489 = vmatpush2.msra.mxu0 0.0
    %490 = vmatprep.mubr.f32.mxu0 0.0
    %491 = vmatmul.mubr.f32.gmra.mxu0 %v421
    %v492 = vpop.f32.mrf.mxu0
    %v493 = vadd.f32 %v418, %v492
    %v494 = vpop.f32.mrf.mxu0
    %495 = vmatprep.mubr.f32.mxu0 0.0
    %496 = vmatmul.mubr.f32.gmra.mxu0 %v424
    %v497 = vpop.f32.mrf.mxu0
    %v498 = vadd.f32 %v418, %v497
    %v499 = vpop.f32.mrf.mxu0
    %500 = vdwg.mxu0
    %503 = vrot.lane.b32.xlu0 %v493, 96
    %v504 = vpop.permute.xlu0 %503
    %505 = vrot.lane.b32.xlu0 %v498, 96
    %v506 = vpop.permute.xlu0 %505
    %vm507 = vcmask 64512
    %v508 = vsel %vm507, %v493, 0
    %v510 = vsel %vm507, %v498, 0
    %v512 = vsel %vm507, %v504, 0
    %v514 = vsel %vm507, %v506, 0
    %516 = vmatprep.subr.mxu0 0.0
    %517 = vmatpush1.xpose.msra.mxu0 0.0
    %518 = vmatprep.subr.mxu0 0.0
    %519 = vmatpush1.xpose.msra.mxu0 0.0
    %520 = vmatprep.subr.mxu0 0.0
    %521 = vmatpush1.xpose.msra.mxu0 0.0
    %522 = vmatprep.subr.mxu0 0.0
    %523 = vmatpush1.xpose.msra.mxu0 0.0
    %524 = vmatprep.subr.mxu0 0.0
    %525 = vmatpush1.xpose.msra.mxu0 0.0
    %526 = vmatprep.subr.mxu0 0.0
    %527 = vmatpush1.xpose.msra.mxu0 0.0
    %528 = vmatprep.subr.mxu0 0.0
    %529 = vmatpush1.xpose.msra.mxu0 0.0
    %530 = vmatprep.subr.mxu0 0.0
    %531 = vmatpush1.xpose.msra.mxu0 0.0
    %532 = vmatprep.subr.mxu0 0.0
    %533 = vmatpush1.xpose.msra.mxu0 0.0
    %534 = vmatprep.subr.mxu0 0.0
    %535 = vmatpush1.xpose.msra.mxu0 0.0
    %536 = vmatprep.subr.mxu0 0.0
    %537 = vmatpush1.xpose.msra.mxu0 0.0
    %538 = vmatprep.subr.mxu0 0.0
    %539 = vmatpush1.xpose.msra.mxu0 0.0
    %540 = vmatprep.subr.mxu0 0.0
    %541 = vmatpush1.xpose.msra.mxu0 0.0
    %542 = vmatprep.subr.mxu0 0.0
    %543 = vmatpush1.xpose.msra.mxu0 0.0
    %544 = vmatprep.subr.mxu0 0.0
    %545 = vmatpush1.xpose.msra.mxu0 %v514
    %546 = vmatprep.subr.mxu0 0.0
    %547 = vmatpush1.xpose.msra.mxu0 %v512
    %548 = vmatprep.subr.mxu0 0.0
    %549 = vmatpush2.xpose.msra.mxu0 0.0
    %550 = vmatprep.subr.mxu0 0.0
    %551 = vmatpush2.xpose.msra.mxu0 0.0
    %552 = vmatprep.subr.mxu0 0.0
    %553 = vmatpush2.xpose.msra.mxu0 0.0
    %554 = vmatprep.subr.mxu0 0.0
    %555 = vmatpush2.xpose.msra.mxu0 0.0
    %556 = vmatprep.subr.mxu0 0.0
    %557 = vmatpush2.xpose.msra.mxu0 0.0
    %558 = vmatprep.subr.mxu0 0.0
    %559 = vmatpush2.xpose.msra.mxu0 0.0
    %560 = vmatprep.subr.mxu0 0.0
    %561 = vmatpush2.xpose.msra.mxu0 0.0
    %562 = vmatprep.subr.mxu0 0.0
    %563 = vmatpush2.xpose.msra.mxu0 0.0
    %564 = vmatprep.subr.mxu0 0.0
    %565 = vmatpush2.xpose.msra.mxu0 0.0
    %566 = vmatprep.subr.mxu0 0.0
    %567 = vmatpush2.xpose.msra.mxu0 0.0
    %568 = vmatprep.subr.mxu0 0.0
    %569 = vmatpush2.xpose.msra.mxu0 0.0
    %570 = vmatprep.subr.mxu0 0.0
    %571 = vmatpush2.xpose.msra.mxu0 0.0
    %572 = vmatprep.subr.mxu0 0.0
    %573 = vmatpush2.xpose.msra.mxu0 0.0
    %574 = vmatprep.subr.mxu0 0.0
    %575 = vmatpush2.xpose.msra.mxu0 0.0
    %576 = vmatprep.subr.mxu0 0.0
    %577 = vmatpush2.xpose.msra.mxu0 0.0
    %578 = vmatprep.subr.mxu0 0.0
    %579 = vmatpush2.xpose.msra.mxu0 0.0
    %580 = vmatprep.mubr.f32.mxu0 0.0
    %581 = vmatmul.mubr.f32.gmra.mxu0 %v508
    %v582 = vpop.f32.mrf.mxu0
    %v583 = vadd.f32 0.0, %v582
    %v584 = vpop.f32.mrf.mxu0
    %585 = vmatprep.mubr.f32.mxu0 0.0
    %586 = vmatmul.mubr.f32.gmra.mxu0 %v510
    %v587 = vpop.f32.mrf.mxu0
    %v588 = vadd.f32 0.0, %v587
    %v589 = vpop.f32.mrf.mxu0
    %590 = vdwg.mxu0
    %v591 = vmul.f32 %v583, 0.35355338
    %v592 = vmul.f32 %v588, 0.35355338
    %v593 = vadd.f32 %v591, %v412
    %v594 = vadd.f32 %v592, %v413
    %vm595 = vcmask 130048
    %v596 = vsel %vm595, %v593, -inf
    %597 = vmax.xlane.f32.xlu0 %v596
    %v598 = vpop.xlane.xlu0 %597
    %v599 = vsel %vm595, %v594, -inf
    %600 = vmax.xlane.f32.xlu0 %v599
    %v601 = vpop.xlane.xlu0 %600
    %v602 = vsub.f32 %v593, %v598
    %v603 = vsub.f32 %v594, %v601
    %v604 = vmul.f32 %v602, 1.442695
    %v605 = vpow.pop %v604
    %v606 = vmul.f32 %v603, 1.442695
    %v607 = vpow.pop %v606
    %v608 = vsel %vm595, %v605, 0.0
    %609 = vadd.xlane.f32.xlu0 %v608
    %v610 = vpop.xlane.xlu0 %609
    %v611 = vsel %vm595, %v607, 0.0
    %612 = vadd.xlane.f32.xlu0 %v611
    %v613 = vpop.xlane.xlu0 %612
    %v614 = vrcp.pop %v610
    %v615 = vmul.f32 %v605, %v614
    %v616 = vrcp.pop %v613
    %v617 = vmul.f32 %v607, %v616
    %618 = vrot.lane.b32.xlu0 %v493, 64
    %v619 = vpop.permute.xlu0 %618
    %620 = vrot.lane.b32.xlu0 %v498, 64
    %v621 = vpop.permute.xlu0 %620
    %v625 = vsel %vm595, %v615, 0
    %v628 = vsel %vm595, %v617, 0
    %630 = vmatprep.subr.mxu0 0.0
    %631 = vmatpush1.msra.mxu0 0.0
    %632 = vmatprep.subr.mxu0 0.0
    %633 = vmatpush1.msra.mxu0 0.0
    %634 = vmatprep.subr.mxu0 0.0
    %635 = vmatpush1.msra.mxu0 0.0
    %636 = vmatprep.subr.mxu0 0.0
    %637 = vmatpush1.msra.mxu0 0.0
    %638 = vmatprep.subr.mxu0 0.0
    %639 = vmatpush1.msra.mxu0 0.0
    %640 = vmatprep.subr.mxu0 0.0
    %641 = vmatpush1.msra.mxu0 0.0
    %642 = vmatprep.subr.mxu0 0.0
    %643 = vmatpush1.msra.mxu0 0.0
    %644 = vmatprep.subr.mxu0 0.0
    %645 = vmatpush1.msra.mxu0 0.0
    %646 = vmatprep.subr.mxu0 0.0
    %647 = vmatpush1.msra.mxu0 0.0
    %648 = vmatprep.subr.mxu0 0.0
    %649 = vmatpush1.msra.mxu0 0.0
    %650 = vmatprep.subr.mxu0 0.0
    %651 = vmatpush1.msra.mxu0 0.0
    %652 = vmatprep.subr.mxu0 0.0
    %653 = vmatpush1.msra.mxu0 0.0
    %654 = vmatprep.subr.mxu0 0.0
    %655 = vmatpush1.msra.mxu0 0.0
    %656 = vmatprep.subr.mxu0 0.0
    %657 = vmatpush1.msra.mxu0 0.0
    %658 = vmatprep.subr.mxu0 0.0
    %659 = vmatpush1.msra.mxu0 %v621
    %660 = vmatprep.subr.mxu0 0.0
    %661 = vmatpush1.msra.mxu0 %v619
    %662 = vmatprep.subr.mxu0 0.0
    %663 = vmatpush2.msra.mxu0 0.0
    %664 = vmatprep.subr.mxu0 0.0
    %665 = vmatpush2.msra.mxu0 0.0
    %666 = vmatprep.subr.mxu0 0.0
    %667 = vmatpush2.msra.mxu0 0.0
    %668 = vmatprep.subr.mxu0 0.0
    %669 = vmatpush2.msra.mxu0 0.0
    %670 = vmatprep.subr.mxu0 0.0
    %671 = vmatpush2.msra.mxu0 0.0
    %672 = vmatprep.subr.mxu0 0.0
    %673 = vmatpush2.msra.mxu0 0.0
    %674 = vmatprep.subr.mxu0 0.0
    %675 = vmatpush2.msra.mxu0 0.0
    %676 = vmatprep.subr.mxu0 0.0
    %677 = vmatpush2.msra.mxu0 0.0
    %678 = vmatprep.subr.mxu0 0.0
    %679 = vmatpush2.msra.mxu0 0.0
    %680 = vmatprep.subr.mxu0 0.0
    %681 = vmatpush2.msra.mxu0 0.0
    %682 = vmatprep.subr.mxu0 0.0
    %683 = vmatpush2.msra.mxu0 0.0
    %684 = vmatprep.subr.mxu0 0.0
    %685 = vmatpush2.msra.mxu0 0.0
    %686 = vmatprep.subr.mxu0 0.0
    %687 = vmatpush2.msra.mxu0 0.0
    %688 = vmatprep.subr.mxu0 0.0
    %689 = vmatpush2.msra.mxu0 0.0
    %690 = vmatprep.subr.mxu0 0.0
    %691 = vmatpush2.msra.mxu0 0.0
    %692 = vmatprep.subr.mxu0 0.0
    %693 = vmatpush2.msra.mxu0 0.0
    %694 = vmatprep.mubr.f32.mxu0 0.0
    %695 = vmatmul.mubr.f32.gmra.mxu0 %v625
    %v696 = vpop.f32.mrf.mxu0
    %v697 = vadd.f32 0.0, %v696
    %v698 = vpop.f32.mrf.mxu0
    %699 = vmatprep.mubr.f32.mxu0 0.0
    %700 = vmatmul.mubr.f32.gmra.mxu0 %v628
    %v701 = vpop.f32.mrf.mxu0
    %v702 = vadd.f32 0.0, %v701
    %v703 = vpop.f32.mrf.mxu0
    %704 = vdwg.mxu0
    %705 = vrot.lane.b32.xlu0 %v493, 120
    %v706 = vpop.permute.xlu0 %705
    %707 = vrot.lane.b32.xlu0 %v498, 120
    %v708 = vpop.permute.xlu0 %707
    %709 = vrot.lane.b32.xlu0 %v493, 88
    %v710 = vpop.permute.xlu0 %709
    %711 = vrot.lane.b32.xlu0 %v498, 88
    %v712 = vpop.permute.xlu0 %711
    %v713 = vsel %vm507, %v706, 0
    %v715 = vsel %vm507, %v708, 0
    %v717 = vsel %vm507, %v710, 0
    %v719 = vsel %vm507, %v712, 0
    %721 = vmatprep.subr.mxu0 0.0
    %722 = vmatpush1.xpose.msra.mxu0 0.0
    %723 = vmatprep.subr.mxu0 0.0
    %724 = vmatpush1.xpose.msra.mxu0 0.0
    %725 = vmatprep.subr.mxu0 0.0
    %726 = vmatpush1.xpose.msra.mxu0 0.0
    %727 = vmatprep.subr.mxu0 0.0
    %728 = vmatpush1.xpose.msra.mxu0 0.0
    %729 = vmatprep.subr.mxu0 0.0
    %730 = vmatpush1.xpose.msra.mxu0 0.0
    %731 = vmatprep.subr.mxu0 0.0
    %732 = vmatpush1.xpose.msra.mxu0 0.0
    %733 = vmatprep.subr.mxu0 0.0
    %734 = vmatpush1.xpose.msra.mxu0 0.0
    %735 = vmatprep.subr.mxu0 0.0
    %736 = vmatpush1.xpose.msra.mxu0 0.0
    %737 = vmatprep.subr.mxu0 0.0
    %738 = vmatpush1.xpose.msra.mxu0 0.0
    %739 = vmatprep.subr.mxu0 0.0
    %740 = vmatpush1.xpose.msra.mxu0 0.0
    %741 = vmatprep.subr.mxu0 0.0
    %742 = vmatpush1.xpose.msra.mxu0 0.0
    %743 = vmatprep.subr.mxu0 0.0
    %744 = vmatpush1.xpose.msra.mxu0 0.0
    %745 = vmatprep.subr.mxu0 0.0
    %746 = vmatpush1.xpose.msra.mxu0 0.0
    %747 = vmatprep.subr.mxu0 0.0
    %748 = vmatpush1.xpose.msra.mxu0 0.0
    %749 = vmatprep.subr.mxu0 0.0
    %750 = vmatpush1.xpose.msra.mxu0 %v719
    %751 = vmatprep.subr.mxu0 0.0
    %752 = vmatpush1.xpose.msra.mxu0 %v717
    %753 = vmatprep.subr.mxu0 0.0
    %754 = vmatpush2.xpose.msra.mxu0 0.0
    %755 = vmatprep.subr.mxu0 0.0
    %756 = vmatpush2.xpose.msra.mxu0 0.0
    %757 = vmatprep.subr.mxu0 0.0
    %758 = vmatpush2.xpose.msra.mxu0 0.0
    %759 = vmatprep.subr.mxu0 0.0
    %760 = vmatpush2.xpose.msra.mxu0 0.0
    %761 = vmatprep.subr.mxu0 0.0
    %762 = vmatpush2.xpose.msra.mxu0 0.0
    %763 = vmatprep.subr.mxu0 0.0
    %764 = vmatpush2.xpose.msra.mxu0 0.0
    %765 = vmatprep.subr.mxu0 0.0
    %766 = vmatpush2.xpose.msra.mxu0 0.0
    %767 = vmatprep.subr.mxu0 0.0
    %768 = vmatpush2.xpose.msra.mxu0 0.0
    %769 = vmatprep.subr.mxu0 0.0
    %770 = vmatpush2.xpose.msra.mxu0 0.0
    %771 = vmatprep.subr.mxu0 0.0
    %772 = vmatpush2.xpose.msra.mxu0 0.0
    %773 = vmatprep.subr.mxu0 0.0
    %774 = vmatpush2.xpose.msra.mxu0 0.0
    %775 = vmatprep.subr.mxu0 0.0
    %776 = vmatpush2.xpose.msra.mxu0 0.0
    %777 = vmatprep.subr.mxu0 0.0
    %778 = vmatpush2.xpose.msra.mxu0 0.0
    %779 = vmatprep.subr.mxu0 0.0
    %780 = vmatpush2.xpose.msra.mxu0 0.0
    %781 = vmatprep.subr.mxu0 0.0
    %782 = vmatpush2.xpose.msra.mxu0 0.0
    %783 = vmatprep.subr.mxu0 0.0
    %784 = vmatpush2.xpose.msra.mxu0 0.0
    %785 = vmatprep.mubr.f32.mxu0 0.0
    %786 = vmatmul.mubr.f32.gmra.mxu0 %v713
    %v787 = vpop.f32.mrf.mxu0
    %v788 = vadd.f32 0.0, %v787
    %v789 = vpop.f32.mrf.mxu0
    %790 = vmatprep.mubr.f32.mxu0 0.0
    %791 = vmatmul.mubr.f32.gmra.mxu0 %v715
    %v792 = vpop.f32.mrf.mxu0
    %v793 = vadd.f32 0.0, %v792
    %v794 = vpop.f32.mrf.mxu0
    %795 = vdwg.mxu0
    %v796 = vmul.f32 %v788, 0.35355338
    %v797 = vmul.f32 %v793, 0.35355338
    %v798 = vadd.f32 %v796, %v412
    %v799 = vadd.f32 %v797, %v413
    %v800 = vsel %vm595, %v798, -inf
    %801 = vmax.xlane.f32.xlu0 %v800
    %v802 = vpop.xlane.xlu0 %801
    %v803 = vsel %vm595, %v799, -inf
    %804 = vmax.xlane.f32.xlu0 %v803
    %v805 = vpop.xlane.xlu0 %804
    %v806 = vsub.f32 %v798, %v802
    %v807 = vsub.f32 %v799, %v805
    %v808 = vmul.f32 %v806, 1.442695
    %v809 = vpow.pop %v808
    %v810 = vmul.f32 %v807, 1.442695
    %v811 = vpow.pop %v810
    %v812 = vsel %vm595, %v809, 0.0
    %813 = vadd.xlane.f32.xlu0 %v812
    %v814 = vpop.xlane.xlu0 %813
    %v815 = vsel %vm595, %v811, 0.0
    %816 = vadd.xlane.f32.xlu0 %v815
    %v817 = vpop.xlane.xlu0 %816
    %v818 = vrcp.pop %v814
    %v819 = vmul.f32 %v809, %v818
    %v820 = vrcp.pop %v817
    %v821 = vmul.f32 %v811, %v820
    %822 = vrot.lane.b32.xlu0 %v493, 56
    %v823 = vpop.permute.xlu0 %822
    %824 = vrot.lane.b32.xlu0 %v498, 56
    %v825 = vpop.permute.xlu0 %824
    %v829 = vsel %vm595, %v819, 0
    %v832 = vsel %vm595, %v821, 0
    %834 = vmatprep.subr.mxu0 0.0
    %835 = vmatpush1.msra.mxu0 0.0
    %836 = vmatprep.subr.mxu0 0.0
    %837 = vmatpush1.msra.mxu0 0.0
    %838 = vmatprep.subr.mxu0 0.0
    %839 = vmatpush1.msra.mxu0 0.0
    %840 = vmatprep.subr.mxu0 0.0
    %841 = vmatpush1.msra.mxu0 0.0
    %842 = vmatprep.subr.mxu0 0.0
    %843 = vmatpush1.msra.mxu0 0.0
    %844 = vmatprep.subr.mxu0 0.0
    %845 = vmatpush1.msra.mxu0 0.0
    %846 = vmatprep.subr.mxu0 0.0
    %847 = vmatpush1.msra.mxu0 0.0
    %848 = vmatprep.subr.mxu0 0.0
    %849 = vmatpush1.msra.mxu0 0.0
    %850 = vmatprep.subr.mxu0 0.0
    %851 = vmatpush1.msra.mxu0 0.0
    %852 = vmatprep.subr.mxu0 0.0
    %853 = vmatpush1.msra.mxu0 0.0
    %854 = vmatprep.subr.mxu0 0.0
    %855 = vmatpush1.msra.mxu0 0.0
    %856 = vmatprep.subr.mxu0 0.0
    %857 = vmatpush1.msra.mxu0 0.0
    %858 = vmatprep.subr.mxu0 0.0
    %859 = vmatpush1.msra.mxu0 0.0
    %860 = vmatprep.subr.mxu0 0.0
    %861 = vmatpush1.msra.mxu0 0.0
    %862 = vmatprep.subr.mxu0 0.0
    %863 = vmatpush1.msra.mxu0 %v825
    %864 = vmatprep.subr.mxu0 0.0
    %865 = vmatpush1.msra.mxu0 %v823
    %866 = vmatprep.subr.mxu0 0.0
    %867 = vmatpush2.msra.mxu0 0.0
    %868 = vmatprep.subr.mxu0 0.0
    %869 = vmatpush2.msra.mxu0 0.0
    %870 = vmatprep.subr.mxu0 0.0
    %871 = vmatpush2.msra.mxu0 0.0
    %872 = vmatprep.subr.mxu0 0.0
    %873 = vmatpush2.msra.mxu0 0.0
    %874 = vmatprep.subr.mxu0 0.0
    %875 = vmatpush2.msra.mxu0 0.0
    %876 = vmatprep.subr.mxu0 0.0
    %877 = vmatpush2.msra.mxu0 0.0
    %878 = vmatprep.subr.mxu0 0.0
    %879 = vmatpush2.msra.mxu0 0.0
    %880 = vmatprep.subr.mxu0 0.0
    %881 = vmatpush2.msra.mxu0 0.0
    %882 = vmatprep.subr.mxu0 0.0
    %883 = vmatpush2.msra.mxu0 0.0
    %884 = vmatprep.subr.mxu0 0.0
    %885 = vmatpush2.msra.mxu0 0.0
    %886 = vmatprep.subr.mxu0 0.0
    %887 = vmatpush2.msra.mxu0 0.0
    %888 = vmatprep.subr.mxu0 0.0
    %889 = vmatpush2.msra.mxu0 0.0
    %890 = vmatprep.subr.mxu0 0.0
    %891 = vmatpush2.msra.mxu0 0.0
    %892 = vmatprep.subr.mxu0 0.0
    %893 = vmatpush2.msra.mxu0 0.0
    %894 = vmatprep.subr.mxu0 0.0
    %895 = vmatpush2.msra.mxu0 0.0
    %896 = vmatprep.subr.mxu0 0.0
    %897 = vmatpush2.msra.mxu0 0.0
    %898 = vmatprep.mubr.f32.mxu0 0.0
    %899 = vmatmul.mubr.f32.gmra.mxu0 %v829
    %v900 = vpop.f32.mrf.mxu0
    %v901 = vadd.f32 0.0, %v900
    %v902 = vpop.f32.mrf.mxu0
    %903 = vmatprep.mubr.f32.mxu0 0.0
    %904 = vmatmul.mubr.f32.gmra.mxu0 %v832
    %v905 = vpop.f32.mrf.mxu0
    %v906 = vadd.f32 0.0, %v905
    %v907 = vpop.f32.mrf.mxu0
    %908 = vdwg.mxu0
    %v910 = vsel %vm507, %v901, 0
    %v913 = vsel %vm507, %v906, 0
    %915 = vmatprep.subr.mxu0 0.0
    %916 = vmatpush1.msra.mxu0 0.0
    %917 = vmatprep.subr.mxu0 0.0
    %918 = vmatpush1.msra.mxu0 0.0
    %919 = vmatprep.subr.mxu0 0.0
    %920 = vmatpush1.msra.mxu0 0.0
    %921 = vmatprep.subr.mxu0 0.0
    %922 = vmatpush1.msra.mxu0 0.0
    %923 = vmatprep.subr.mxu0 0.0
    %924 = vmatpush1.msra.mxu0 0.0
    %925 = vmatprep.subr.mxu0 0.0
    %926 = vmatpush1.msra.mxu0 0.0
    %927 = vmatprep.subr.mxu0 0.0
    %928 = vmatpush1.msra.mxu0 0.0
    %929 = vmatprep.subr.mxu0 0.0
    %930 = vmatpush1.msra.mxu0 0.0
    %931 = vmatprep.subr.mxu0 0.0
    %932 = vmatpush1.msra.mxu0 0.0
    %933 = vmatprep.subr.mxu0 0.0
    %934 = vmatpush1.msra.mxu0 0.0
    %935 = vmatprep.subr.mxu0 0.0
    %936 = vmatpush1.msra.mxu0 0.0
    %937 = vmatprep.subr.mxu0 0.0
    %938 = vmatpush1.msra.mxu0 0.0
    %939 = vmatprep.subr.mxu0 0.0
    %940 = vmatpush1.msra.mxu0 0.0
    %941 = vmatprep.subr.mxu0 0.0
    %942 = vmatpush1.msra.mxu0 0.0
    %943 = vmatprep.subr.mxu0 0.0
    %944 = vmatpush1.msra.mxu0 0.0
    %945 = vmatprep.subr.mxu0 0.0
    %946 = vmatpush1.msra.mxu0 %v256
    %947 = vmatprep.subr.mxu0 0.0
    %948 = vmatpush2.msra.mxu0 0.0
    %949 = vmatprep.subr.mxu0 0.0
    %950 = vmatpush2.msra.mxu0 0.0
    %951 = vmatprep.subr.mxu0 0.0
    %952 = vmatpush2.msra.mxu0 0.0
    %953 = vmatprep.subr.mxu0 0.0
    %954 = vmatpush2.msra.mxu0 0.0
    %955 = vmatprep.subr.mxu0 0.0
    %956 = vmatpush2.msra.mxu0 0.0
    %957 = vmatprep.subr.mxu0 0.0
    %958 = vmatpush2.msra.mxu0 0.0
    %959 = vmatprep.subr.mxu0 0.0
    %960 = vmatpush2.msra.mxu0 0.0
    %961 = vmatprep.subr.mxu0 0.0
    %962 = vmatpush2.msra.mxu0 0.0
    %963 = vmatprep.subr.mxu0 0.0
    %964 = vmatpush2.msra.mxu0 0.0
    %965 = vmatprep.subr.mxu0 0.0
    %966 = vmatpush2.msra.mxu0 0.0
    %967 = vmatprep.subr.mxu0 0.0
    %968 = vmatpush2.msra.mxu0 0.0
    %969 = vmatprep.subr.mxu0 0.0
    %970 = vmatpush2.msra.mxu0 0.0
    %971 = vmatprep.subr.mxu0 0.0
    %972 = vmatpush2.msra.mxu0 0.0
    %973 = vmatprep.subr.mxu0 0.0
    %974 = vmatpush2.msra.mxu0 0.0
    %975 = vmatprep.subr.mxu0 0.0
    %976 = vmatpush2.msra.mxu0 0.0
    %977 = vmatprep.subr.mxu0 0.0
    %978 = vmatpush2.msra.mxu0 0.0
    %979 = vmatprep.mubr.f32.mxu0 0.0
    %980 = vmatmul.mubr.f32.gmra.mxu0 %v910
    %v981 = vpop.f32.mrf.mxu0
    %v982 = vadd.f32 0.0, %v981
    %v983 = vpop.f32.mrf.mxu0
    %984 = vmatprep.mubr.f32.mxu0 0.0
    %985 = vmatmul.mubr.f32.gmra.mxu0 %v913
    %v986 = vpop.f32.mrf.mxu0
    %v987 = vadd.f32 0.0, %v986
    %v988 = vpop.f32.mrf.mxu0
    %989 = vdwg.mxu0
    %v991 = vsel %vm507, %v697, 0
    %v994 = vsel %vm507, %v702, 0
    %996 = vmatprep.subr.mxu0 0.0
    %997 = vmatpush1.msra.mxu0 0.0
    %998 = vmatprep.subr.mxu0 0.0
    %999 = vmatpush1.msra.mxu0 0.0
    %1000 = vmatprep.subr.mxu0 0.0
    %1001 = vmatpush1.msra.mxu0 0.0
    %1002 = vmatprep.subr.mxu0 0.0
    %1003 = vmatpush1.msra.mxu0 0.0
    %1004 = vmatprep.subr.mxu0 0.0
    %1005 = vmatpush1.msra.mxu0 0.0
    %1006 = vmatprep.subr.mxu0 0.0
    %1007 = vmatpush1.msra.mxu0 0.0
    %1008 = vmatprep.subr.mxu0 0.0
    %1009 = vmatpush1.msra.mxu0 0.0
    %1010 = vmatprep.subr.mxu0 0.0
    %1011 = vmatpush1.msra.mxu0 0.0
    %1012 = vmatprep.subr.mxu0 0.0
    %1013 = vmatpush1.msra.mxu0 0.0
    %1014 = vmatprep.subr.mxu0 0.0
    %1015 = vmatpush1.msra.mxu0 0.0
    %1016 = vmatprep.subr.mxu0 0.0
    %1017 = vmatpush1.msra.mxu0 0.0
    %1018 = vmatprep.subr.mxu0 0.0
    %1019 = vmatpush1.msra.mxu0 0.0
    %1020 = vmatprep.subr.mxu0 0.0
    %1021 = vmatpush1.msra.mxu0 0.0
    %1022 = vmatprep.subr.mxu0 0.0
    %1023 = vmatpush1.msra.mxu0 0.0
    %1024 = vmatprep.subr.mxu0 0.0
    %1025 = vmatpush1.msra.mxu0 0.0
    %1026 = vmatprep.subr.mxu0 0.0
    %1027 = vmatpush1.msra.mxu0 %v255
    %1028 = vmatprep.subr.mxu0 0.0
    %1029 = vmatpush2.msra.mxu0 0.0
    %1030 = vmatprep.subr.mxu0 0.0
    %1031 = vmatpush2.msra.mxu0 0.0
    %1032 = vmatprep.subr.mxu0 0.0
    %1033 = vmatpush2.msra.mxu0 0.0
    %1034 = vmatprep.subr.mxu0 0.0
    %1035 = vmatpush2.msra.mxu0 0.0
    %1036 = vmatprep.subr.mxu0 0.0
    %1037 = vmatpush2.msra.mxu0 0.0
    %1038 = vmatprep.subr.mxu0 0.0
    %1039 = vmatpush2.msra.mxu0 0.0
    %1040 = vmatprep.subr.mxu0 0.0
    %1041 = vmatpush2.msra.mxu0 0.0
    %1042 = vmatprep.subr.mxu0 0.0
    %1043 = vmatpush2.msra.mxu0 0.0
    %1044 = vmatprep.subr.mxu0 0.0
    %1045 = vmatpush2.msra.mxu0 0.0
    %1046 = vmatprep.subr.mxu0 0.0
    %1047 = vmatpush2.msra.mxu0 0.0
    %1048 = vmatprep.subr.mxu0 0.0
    %1049 = vmatpush2.msra.mxu0 0.0
    %1050 = vmatprep.subr.mxu0 0.0
    %1051 = vmatpush2.msra.mxu0 0.0
    %1052 = vmatprep.subr.mxu0 0.0
    %1053 = vmatpush2.msra.mxu0 0.0
    %1054 = vmatprep.subr.mxu0 0.0
    %1055 = vmatpush2.msra.mxu0 0.0
    %1056 = vmatprep.subr.mxu0 0.0
    %1057 = vmatpush2.msra.mxu0 0.0
    %1058 = vmatprep.subr.mxu0 0.0
    %1059 = vmatpush2.msra.mxu0 0.0
    %1060 = vmatprep.mubr.f32.mxu0 0.0
    %1061 = vmatmul.mubr.f32.gmra.mxu0 %v991
    %v1062 = vpop.f32.mrf.mxu0
    %v1063 = vadd.f32 %v982, %v1062
    %v1064 = vpop.f32.mrf.mxu0
    %1065 = vmatprep.mubr.f32.mxu0 0.0
    %1066 = vmatmul.mubr.f32.gmra.mxu0 %v994
    %v1067 = vpop.f32.mrf.mxu0
    %v1068 = vadd.f32 %v987, %v1067
    %v1069 = vpop.f32.mrf.mxu0
    %1070 = vdwg.mxu0
    %1071 = vrot.lane.b32.xlu0 %v493, 112
    %v1072 = vpop.permute.xlu0 %1071
    %1073 = vrot.lane.b32.xlu0 %v498, 112
    %v1074 = vpop.permute.xlu0 %1073
    %1075 = vrot.lane.b32.xlu0 %v493, 80
    %v1076 = vpop.permute.xlu0 %1075
    %1077 = vrot.lane.b32.xlu0 %v498, 80
    %v1078 = vpop.permute.xlu0 %1077
    %v1079 = vsel %vm507, %v1072, 0
    %v1081 = vsel %vm507, %v1074, 0
    %v1083 = vsel %vm507, %v1076, 0
    %v1085 = vsel %vm507, %v1078, 0
    %1087 = vmatprep.subr.mxu0 0.0
    %1088 = vmatpush1.xpose.msra.mxu0 0.0
    %1089 = vmatprep.subr.mxu0 0.0
    %1090 = vmatpush1.xpose.msra.mxu0 0.0
    %1091 = vmatprep.subr.mxu0 0.0
    %1092 = vmatpush1.xpose.msra.mxu0 0.0
    %1093 = vmatprep.subr.mxu0 0.0
    %1094 = vmatpush1.xpose.msra.mxu0 0.0
    %1095 = vmatprep.subr.mxu0 0.0
    %1096 = vmatpush1.xpose.msra.mxu0 0.0
    %1097 = vmatprep.subr.mxu0 0.0
    %1098 = vmatpush1.xpose.msra.mxu0 0.0
    %1099 = vmatprep.subr.mxu0 0.0
    %1100 = vmatpush1.xpose.msra.mxu0 0.0
    %1101 = vmatprep.subr.mxu0 0.0
    %1102 = vmatpush1.xpose.msra.mxu0 0.0
    %1103 = vmatprep.subr.mxu0 0.0
    %1104 = vmatpush1.xpose.msra.mxu0 0.0
    %1105 = vmatprep.subr.mxu0 0.0
    %1106 = vmatpush1.xpose.msra.mxu0 0.0
    %1107 = vmatprep.subr.mxu0 0.0
    %1108 = vmatpush1.xpose.msra.mxu0 0.0
    %1109 = vmatprep.subr.mxu0 0.0
    %1110 = vmatpush1.xpose.msra.mxu0 0.0
    %1111 = vmatprep.subr.mxu0 0.0
    %1112 = vmatpush1.xpose.msra.mxu0 0.0
    %1113 = vmatprep.subr.mxu0 0.0
    %1114 = vmatpush1.xpose.msra.mxu0 0.0
    %1115 = vmatprep.subr.mxu0 0.0
    %1116 = vmatpush1.xpose.msra.mxu0 %v1085
    %1117 = vmatprep.subr.mxu0 0.0
    %1118 = vmatpush1.xpose.msra.mxu0 %v1083
    %1119 = vmatprep.subr.mxu0 0.0
    %1120 = vmatpush2.xpose.msra.mxu0 0.0
    %1121 = vmatprep.subr.mxu0 0.0
    %1122 = vmatpush2.xpose.msra.mxu0 0.0
    %1123 = vmatprep.subr.mxu0 0.0
    %1124 = vmatpush2.xpose.msra.mxu0 0.0
    %1125 = vmatprep.subr.mxu0 0.0
    %1126 = vmatpush2.xpose.msra.mxu0 0.0
    %1127 = vmatprep.subr.mxu0 0.0
    %1128 = vmatpush2.xpose.msra.mxu0 0.0
    %1129 = vmatprep.subr.mxu0 0.0
    %1130 = vmatpush2.xpose.msra.mxu0 0.0
    %1131 = vmatprep.subr.mxu0 0.0
    %1132 = vmatpush2.xpose.msra.mxu0 0.0
    %1133 = vmatprep.subr.mxu0 0.0
    %1134 = vmatpush2.xpose.msra.mxu0 0.0
    %1135 = vmatprep.subr.mxu0 0.0
    %1136 = vmatpush2.xpose.msra.mxu0 0.0
    %1137 = vmatprep.subr.mxu0 0.0
    %1138 = vmatpush2.xpose.msra.mxu0 0.0
    %1139 = vmatprep.subr.mxu0 0.0
    %1140 = vmatpush2.xpose.msra.mxu0 0.0
    %1141 = vmatprep.subr.mxu0 0.0
    %1142 = vmatpush2.xpose.msra.mxu0 0.0
    %1143 = vmatprep.subr.mxu0 0.0
    %1144 = vmatpush2.xpose.msra.mxu0 0.0
    %1145 = vmatprep.subr.mxu0 0.0
    %1146 = vmatpush2.xpose.msra.mxu0 0.0
    %1147 = vmatprep.subr.mxu0 0.0
    %1148 = vmatpush2.xpose.msra.mxu0 0.0
    %1149 = vmatprep.subr.mxu0 0.0
    %1150 = vmatpush2.xpose.msra.mxu0 0.0
    %1151 = vmatprep.mubr.f32.mxu0 0.0
    %1152 = vmatmul.mubr.f32.gmra.mxu0 %v1079
    %v1153 = vpop.f32.mrf.mxu0
    %v1154 = vadd.f32 0.0, %v1153
    %v1155 = vpop.f32.mrf.mxu0
    %1156 = vmatprep.mubr.f32.mxu0 0.0
    %1157 = vmatmul.mubr.f32.gmra.mxu0 %v1081
    %v1158 = vpop.f32.mrf.mxu0
    %v1159 = vadd.f32 0.0, %v1158
    %v1160 = vpop.f32.mrf.mxu0
    %1161 = vdwg.mxu0
    %v1162 = vmul.f32 %v1154, 0.35355338
    %v1163 = vmul.f32 %v1159, 0.35355338
    %v1164 = vadd.f32 %v1162, %v412
    %v1165 = vadd.f32 %v1163, %v413
    %v1166 = vsel %vm595, %v1164, -inf
    %1167 = vmax.xlane.f32.xlu0 %v1166
    %v1168 = vpop.xlane.xlu0 %1167
    %v1169 = vsel %vm595, %v1165, -inf
    %1170 = vmax.xlane.f32.xlu0 %v1169
    %v1171 = vpop.xlane.xlu0 %1170
    %v1172 = vsub.f32 %v1164, %v1168
    %v1173 = vsub.f32 %v1165, %v1171
    %v1174 = vmul.f32 %v1172, 1.442695
    %v1175 = vpow.pop %v1174
    %v1176 = vmul.f32 %v1173, 1.442695
    %v1177 = vpow.pop %v1176
    %v1178 = vsel %vm595, %v1175, 0.0
    %1179 = vadd.xlane.f32.xlu0 %v1178
    %v1180 = vpop.xlane.xlu0 %1179
    %v1181 = vsel %vm595, %v1177, 0.0
    %1182 = vadd.xlane.f32.xlu0 %v1181
    %v1183 = vpop.xlane.xlu0 %1182
    %v1184 = vrcp.pop %v1180
    %v1185 = vmul.f32 %v1175, %v1184
    %v1186 = vrcp.pop %v1183
    %v1187 = vmul.f32 %v1177, %v1186
    %1188 = vrot.lane.b32.xlu0 %v493, 48
    %v1189 = vpop.permute.xlu0 %1188
    %1190 = vrot.lane.b32.xlu0 %v498, 48
    %v1191 = vpop.permute.xlu0 %1190
    %v1195 = vsel %vm595, %v1185, 0
    %v1198 = vsel %vm595, %v1187, 0
    %1200 = vmatprep.subr.mxu0 0.0
    %1201 = vmatpush1.msra.mxu0 0.0
    %1202 = vmatprep.subr.mxu0 0.0
    %1203 = vmatpush1.msra.mxu0 0.0
    %1204 = vmatprep.subr.mxu0 0.0
    %1205 = vmatpush1.msra.mxu0 0.0
    %1206 = vmatprep.subr.mxu0 0.0
    %1207 = vmatpush1.msra.mxu0 0.0
    %1208 = vmatprep.subr.mxu0 0.0
    %1209 = vmatpush1.msra.mxu0 0.0
    %1210 = vmatprep.subr.mxu0 0.0
    %1211 = vmatpush1.msra.mxu0 0.0
    %1212 = vmatprep.subr.mxu0 0.0
    %1213 = vmatpush1.msra.mxu0 0.0
    %1214 = vmatprep.subr.mxu0 0.0
    %1215 = vmatpush1.msra.mxu0 0.0
    %1216 = vmatprep.subr.mxu0 0.0
    %1217 = vmatpush1.msra.mxu0 0.0
    %1218 = vmatprep.subr.mxu0 0.0
    %1219 = vmatpush1.msra.mxu0 0.0
    %1220 = vmatprep.subr.mxu0 0.0
    %1221 = vmatpush1.msra.mxu0 0.0
    %1222 = vmatprep.subr.mxu0 0.0
    %1223 = vmatpush1.msra.mxu0 0.0
    %1224 = vmatprep.subr.mxu0 0.0
    %1225 = vmatpush1.msra.mxu0 0.0
    %1226 = vmatprep.subr.mxu0 0.0
    %1227 = vmatpush1.msra.mxu0 0.0
    %1228 = vmatprep.subr.mxu0 0.0
    %1229 = vmatpush1.msra.mxu0 %v1191
    %1230 = vmatprep.subr.mxu0 0.0
    %1231 = vmatpush1.msra.mxu0 %v1189
    %1232 = vmatprep.subr.mxu0 0.0
    %1233 = vmatpush2.msra.mxu0 0.0
    %1234 = vmatprep.subr.mxu0 0.0
    %1235 = vmatpush2.msra.mxu0 0.0
    %1236 = vmatprep.subr.mxu0 0.0
    %1237 = vmatpush2.msra.mxu0 0.0
    %1238 = vmatprep.subr.mxu0 0.0
    %1239 = vmatpush2.msra.mxu0 0.0
    %1240 = vmatprep.subr.mxu0 0.0
    %1241 = vmatpush2.msra.mxu0 0.0
    %1242 = vmatprep.subr.mxu0 0.0
    %1243 = vmatpush2.msra.mxu0 0.0
    %1244 = vmatprep.subr.mxu0 0.0
    %1245 = vmatpush2.msra.mxu0 0.0
    %1246 = vmatprep.subr.mxu0 0.0
    %1247 = vmatpush2.msra.mxu0 0.0
    %1248 = vmatprep.subr.mxu0 0.0
    %1249 = vmatpush2.msra.mxu0 0.0
    %1250 = vmatprep.subr.mxu0 0.0
    %1251 = vmatpush2.msra.mxu0 0.0
    %1252 = vmatprep.subr.mxu0 0.0
    %1253 = vmatpush2.msra.mxu0 0.0
    %1254 = vmatprep.subr.mxu0 0.0
    %1255 = vmatpush2.msra.mxu0 0.0
    %1256 = vmatprep.subr.mxu0 0.0
    %1257 = vmatpush2.msra.mxu0 0.0
    %1258 = vmatprep.subr.mxu0 0.0
    %1259 = vmatpush2.msra.mxu0 0.0
    %1260 = vmatprep.subr.mxu0 0.0
    %1261 = vmatpush2.msra.mxu0 0.0
    %1262 = vmatprep.subr.mxu0 0.0
    %1263 = vmatpush2.msra.mxu0 0.0
    %1264 = vmatprep.mubr.f32.mxu0 0.0
    %1265 = vmatmul.mubr.f32.gmra.mxu0 %v1195
    %v1266 = vpop.f32.mrf.mxu0
    %v1267 = vadd.f32 0.0, %v1266
    %v1268 = vpop.f32.mrf.mxu0
    %1269 = vmatprep.mubr.f32.mxu0 0.0
    %1270 = vmatmul.mubr.f32.gmra.mxu0 %v1198
    %v1271 = vpop.f32.mrf.mxu0
    %v1272 = vadd.f32 0.0, %v1271
    %v1273 = vpop.f32.mrf.mxu0
    %1274 = vdwg.mxu0
    %v1276 = vsel %vm507, %v1267, 0
    %v1279 = vsel %vm507, %v1272, 0
    %1281 = vmatprep.subr.mxu0 0.0
    %1282 = vmatpush1.msra.mxu0 0.0
    %1283 = vmatprep.subr.mxu0 0.0
    %1284 = vmatpush1.msra.mxu0 0.0
    %1285 = vmatprep.subr.mxu0 0.0
    %1286 = vmatpush1.msra.mxu0 0.0
    %1287 = vmatprep.subr.mxu0 0.0
    %1288 = vmatpush1.msra.mxu0 0.0
    %1289 = vmatprep.subr.mxu0 0.0
    %1290 = vmatpush1.msra.mxu0 0.0
    %1291 = vmatprep.subr.mxu0 0.0
    %1292 = vmatpush1.msra.mxu0 0.0
    %1293 = vmatprep.subr.mxu0 0.0
    %1294 = vmatpush1.msra.mxu0 0.0
    %1295 = vmatprep.subr.mxu0 0.0
    %1296 = vmatpush1.msra.mxu0 0.0
    %1297 = vmatprep.subr.mxu0 0.0
    %1298 = vmatpush1.msra.mxu0 0.0
    %1299 = vmatprep.subr.mxu0 0.0
    %1300 = vmatpush1.msra.mxu0 0.0
    %1301 = vmatprep.subr.mxu0 0.0
    %1302 = vmatpush1.msra.mxu0 0.0
    %1303 = vmatprep.subr.mxu0 0.0
    %1304 = vmatpush1.msra.mxu0 0.0
    %1305 = vmatprep.subr.mxu0 0.0
    %1306 = vmatpush1.msra.mxu0 0.0
    %1307 = vmatprep.subr.mxu0 0.0
    %1308 = vmatpush1.msra.mxu0 0.0
    %1309 = vmatprep.subr.mxu0 0.0
    %1310 = vmatpush1.msra.mxu0 0.0
    %1311 = vmatprep.subr.mxu0 0.0
    %1312 = vmatpush1.msra.mxu0 %v257
    %1313 = vmatprep.subr.mxu0 0.0
    %1314 = vmatpush2.msra.mxu0 0.0
    %1315 = vmatprep.subr.mxu0 0.0
    %1316 = vmatpush2.msra.mxu0 0.0
    %1317 = vmatprep.subr.mxu0 0.0
    %1318 = vmatpush2.msra.mxu0 0.0
    %1319 = vmatprep.subr.mxu0 0.0
    %1320 = vmatpush2.msra.mxu0 0.0
    %1321 = vmatprep.subr.mxu0 0.0
    %1322 = vmatpush2.msra.mxu0 0.0
    %1323 = vmatprep.subr.mxu0 0.0
    %1324 = vmatpush2.msra.mxu0 0.0
    %1325 = vmatprep.subr.mxu0 0.0
    %1326 = vmatpush2.msra.mxu0 0.0
    %1327 = vmatprep.subr.mxu0 0.0
    %1328 = vmatpush2.msra.mxu0 0.0
    %1329 = vmatprep.subr.mxu0 0.0
    %1330 = vmatpush2.msra.mxu0 0.0
    %1331 = vmatprep.subr.mxu0 0.0
    %1332 = vmatpush2.msra.mxu0 0.0
    %1333 = vmatprep.subr.mxu0 0.0
    %1334 = vmatpush2.msra.mxu0 0.0
    %1335 = vmatprep.subr.mxu0 0.0
    %1336 = vmatpush2.msra.mxu0 0.0
    %1337 = vmatprep.subr.mxu0 0.0
    %1338 = vmatpush2.msra.mxu0 0.0
    %1339 = vmatprep.subr.mxu0 0.0
    %1340 = vmatpush2.msra.mxu0 0.0
    %1341 = vmatprep.subr.mxu0 0.0
    %1342 = vmatpush2.msra.mxu0 0.0
    %1343 = vmatprep.subr.mxu0 0.0
    %1344 = vmatpush2.msra.mxu0 0.0
    %1345 = vmatprep.mubr.f32.mxu0 0.0
    %1346 = vmatmul.mubr.f32.gmra.mxu0 %v1276
    %v1347 = vpop.f32.mrf.mxu0
    %v1348 = vadd.f32 0.0, %v1347
    %v1349 = vpop.f32.mrf.mxu0
    %1350 = vmatprep.mubr.f32.mxu0 0.0
    %1351 = vmatmul.mubr.f32.gmra.mxu0 %v1279
    %v1352 = vpop.f32.mrf.mxu0
    %v1353 = vadd.f32 0.0, %v1352
    %v1354 = vpop.f32.mrf.mxu0
    %1355 = vdwg.mxu0
    %v1356 = vadd.f32 %v1063, %v1348
    %v1357 = vadd.f32 %v1068, %v1353
    %1358 = vrot.lane.b32.xlu0 %v493, 104
    %v1359 = vpop.permute.xlu0 %1358
    %1360 = vrot.lane.b32.xlu0 %v498, 104
    %v1361 = vpop.permute.xlu0 %1360
    %1362 = vrot.lane.b32.xlu0 %v493, 72
    %v1363 = vpop.permute.xlu0 %1362
    %1364 = vrot.lane.b32.xlu0 %v498, 72
    %v1365 = vpop.permute.xlu0 %1364
    %v1366 = vsel %vm507, %v1359, 0
    %v1368 = vsel %vm507, %v1361, 0
    %v1370 = vsel %vm507, %v1363, 0
    %v1372 = vsel %vm507, %v1365, 0
    %1374 = vmatprep.subr.mxu0 0.0
    %1375 = vmatpush1.xpose.msra.mxu0 0.0
    %1376 = vmatprep.subr.mxu0 0.0
    %1377 = vmatpush1.xpose.msra.mxu0 0.0
    %1378 = vmatprep.subr.mxu0 0.0
    %1379 = vmatpush1.xpose.msra.mxu0 0.0
    %1380 = vmatprep.subr.mxu0 0.0
    %1381 = vmatpush1.xpose.msra.mxu0 0.0
    %1382 = vmatprep.subr.mxu0 0.0
    %1383 = vmatpush1.xpose.msra.mxu0 0.0
    %1384 = vmatprep.subr.mxu0 0.0
    %1385 = vmatpush1.xpose.msra.mxu0 0.0
    %1386 = vmatprep.subr.mxu0 0.0
    %1387 = vmatpush1.xpose.msra.mxu0 0.0
    %1388 = vmatprep.subr.mxu0 0.0
    %1389 = vmatpush1.xpose.msra.mxu0 0.0
    %1390 = vmatprep.subr.mxu0 0.0
    %1391 = vmatpush1.xpose.msra.mxu0 0.0
    %1392 = vmatprep.subr.mxu0 0.0
    %1393 = vmatpush1.xpose.msra.mxu0 0.0
    %1394 = vmatprep.subr.mxu0 0.0
    %1395 = vmatpush1.xpose.msra.mxu0 0.0
    %1396 = vmatprep.subr.mxu0 0.0
    %1397 = vmatpush1.xpose.msra.mxu0 0.0
    %1398 = vmatprep.subr.mxu0 0.0
    %1399 = vmatpush1.xpose.msra.mxu0 0.0
    %1400 = vmatprep.subr.mxu0 0.0
    %1401 = vmatpush1.xpose.msra.mxu0 0.0
    %1402 = vmatprep.subr.mxu0 0.0
    %1403 = vmatpush1.xpose.msra.mxu0 %v1372
    %1404 = vmatprep.subr.mxu0 0.0
    %1405 = vmatpush1.xpose.msra.mxu0 %v1370
    %1406 = vmatprep.subr.mxu0 0.0
    %1407 = vmatpush2.xpose.msra.mxu0 0.0
    %1408 = vmatprep.subr.mxu0 0.0
    %1409 = vmatpush2.xpose.msra.mxu0 0.0
    %1410 = vmatprep.subr.mxu0 0.0
    %1411 = vmatpush2.xpose.msra.mxu0 0.0
    %1412 = vmatprep.subr.mxu0 0.0
    %1413 = vmatpush2.xpose.msra.mxu0 0.0
    %1414 = vmatprep.subr.mxu0 0.0
    %1415 = vmatpush2.xpose.msra.mxu0 0.0
    %1416 = vmatprep.subr.mxu0 0.0
    %1417 = vmatpush2.xpose.msra.mxu0 0.0
    %1418 = vmatprep.subr.mxu0 0.0
    %1419 = vmatpush2.xpose.msra.mxu0 0.0
    %1420 = vmatprep.subr.mxu0 0.0
    %1421 = vmatpush2.xpose.msra.mxu0 0.0
    %1422 = vmatprep.subr.mxu0 0.0
    %1423 = vmatpush2.xpose.msra.mxu0 0.0
    %1424 = vmatprep.subr.mxu0 0.0
    %1425 = vmatpush2.xpose.msra.mxu0 0.0
    %1426 = vmatprep.subr.mxu0 0.0
    %1427 = vmatpush2.xpose.msra.mxu0 0.0
    %1428 = vmatprep.subr.mxu0 0.0
    %1429 = vmatpush2.xpose.msra.mxu0 0.0
    %1430 = vmatprep.subr.mxu0 0.0
    %1431 = vmatpush2.xpose.msra.mxu0 0.0
    %1432 = vmatprep.subr.mxu0 0.0
    %1433 = vmatpush2.xpose.msra.mxu0 0.0
    %1434 = vmatprep.subr.mxu0 0.0
    %1435 = vmatpush2.xpose.msra.mxu0 0.0
    %1436 = vmatprep.subr.mxu0 0.0
    %1437 = vmatpush2.xpose.msra.mxu0 0.0
    %1438 = vmatprep.mubr.f32.mxu0 0.0
    %1439 = vmatmul.mubr.f32.gmra.mxu0 %v1366
    %v1440 = vpop.f32.mrf.mxu0
    %v1441 = vadd.f32 0.0, %v1440
    %v1442 = vpop.f32.mrf.mxu0
    %1443 = vmatprep.mubr.f32.mxu0 0.0
    %1444 = vmatmul.mubr.f32.gmra.mxu0 %v1368
    %v1445 = vpop.f32.mrf.mxu0
    %v1446 = vadd.f32 0.0, %v1445
    %v1447 = vpop.f32.mrf.mxu0
    %1448 = vdwg.mxu0
    %v1449 = vmul.f32 %v1441, 0.35355338
    %v1450 = vmul.f32 %v1446, 0.35355338
    %v1451 = vadd.f32 %v1449, %v412
    %v1452 = vadd.f32 %v1450, %v413
    %v1453 = vsel %vm595, %v1451, -inf
    %1454 = vmax.xlane.f32.xlu0 %v1453
    %v1455 = vpop.xlane.xlu0 %1454
    %v1456 = vsel %vm595, %v1452, -inf
    %1457 = vmax.xlane.f32.xlu0 %v1456
    %v1458 = vpop.xlane.xlu0 %1457
    %v1459 = vsub.f32 %v1451, %v1455
    %v1460 = vsub.f32 %v1452, %v1458
    %v1461 = vmul.f32 %v1459, 1.442695
    %v1462 = vpow.pop %v1461
    %v1463 = vmul.f32 %v1460, 1.442695
    %v1464 = vpow.pop %v1463
    %v1465 = vsel %vm595, %v1462, 0.0
    %1466 = vadd.xlane.f32.xlu0 %v1465
    %v1467 = vpop.xlane.xlu0 %1466
    %v1468 = vsel %vm595, %v1464, 0.0
    %1469 = vadd.xlane.f32.xlu0 %v1468
    %v1470 = vpop.xlane.xlu0 %1469
    %v1471 = vrcp.pop %v1467
    %v1472 = vmul.f32 %v1462, %v1471
    %v1473 = vrcp.pop %v1470
    %v1474 = vmul.f32 %v1464, %v1473
    %1475 = vrot.lane.b32.xlu0 %v493, 40
    %v1476 = vpop.permute.xlu0 %1475
    %1477 = vrot.lane.b32.xlu0 %v498, 40
    %v1478 = vpop.permute.xlu0 %1477
    %v1482 = vsel %vm595, %v1472, 0
    %v1485 = vsel %vm595, %v1474, 0
    %1487 = vmatprep.subr.mxu0 0.0
    %1488 = vmatpush1.msra.mxu0 0.0
    %1489 = vmatprep.subr.mxu0 0.0
    %1490 = vmatpush1.msra.mxu0 0.0
    %1491 = vmatprep.subr.mxu0 0.0
    %1492 = vmatpush1.msra.mxu0 0.0
    %1493 = vmatprep.subr.mxu0 0.0
    %1494 = vmatpush1.msra.mxu0 0.0
    %1495 = vmatprep.subr.mxu0 0.0
    %1496 = vmatpush1.msra.mxu0 0.0
    %1497 = vmatprep.subr.mxu0 0.0
    %1498 = vmatpush1.msra.mxu0 0.0
    %1499 = vmatprep.subr.mxu0 0.0
    %1500 = vmatpush1.msra.mxu0 0.0
    %1501 = vmatprep.subr.mxu0 0.0
    %1502 = vmatpush1.msra.mxu0 0.0
    %1503 = vmatprep.subr.mxu0 0.0
    %1504 = vmatpush1.msra.mxu0 0.0
    %1505 = vmatprep.subr.mxu0 0.0
    %1506 = vmatpush1.msra.mxu0 0.0
    %1507 = vmatprep.subr.mxu0 0.0
    %1508 = vmatpush1.msra.mxu0 0.0
    %1509 = vmatprep.subr.mxu0 0.0
    %1510 = vmatpush1.msra.mxu0 0.0
    %1511 = vmatprep.subr.mxu0 0.0
    %1512 = vmatpush1.msra.mxu0 0.0
    %1513 = vmatprep.subr.mxu0 0.0
    %1514 = vmatpush1.msra.mxu0 0.0
    %1515 = vmatprep.subr.mxu0 0.0
    %1516 = vmatpush1.msra.mxu0 %v1478
    %1517 = vmatprep.subr.mxu0 0.0
    %1518 = vmatpush1.msra.mxu0 %v1476
    %1519 = vmatprep.subr.mxu0 0.0
    %1520 = vmatpush2.msra.mxu0 0.0
    %1521 = vmatprep.subr.mxu0 0.0
    %1522 = vmatpush2.msra.mxu0 0.0
    %1523 = vmatprep.subr.mxu0 0.0
    %1524 = vmatpush2.msra.mxu0 0.0
    %1525 = vmatprep.subr.mxu0 0.0
    %1526 = vmatpush2.msra.mxu0 0.0
    %1527 = vmatprep.subr.mxu0 0.0
    %1528 = vmatpush2.msra.mxu0 0.0
    %1529 = vmatprep.subr.mxu0 0.0
    %1530 = vmatpush2.msra.mxu0 0.0
    %1531 = vmatprep.subr.mxu0 0.0
    %1532 = vmatpush2.msra.mxu0 0.0
    %1533 = vmatprep.subr.mxu0 0.0
    %1534 = vmatpush2.msra.mxu0 0.0
    %1535 = vmatprep.subr.mxu0 0.0
    %1536 = vmatpush2.msra.mxu0 0.0
    %1537 = vmatprep.subr.mxu0 0.0
    %1538 = vmatpush2.msra.mxu0 0.0
    %1539 = vmatprep.subr.mxu0 0.0
    %1540 = vmatpush2.msra.mxu0 0.0
    %1541 = vmatprep.subr.mxu0 0.0
    %1542 = vmatpush2.msra.mxu0 0.0
    %1543 = vmatprep.subr.mxu0 0.0
    %1544 = vmatpush2.msra.mxu0 0.0
    %1545 = vmatprep.subr.mxu0 0.0
    %1546 = vmatpush2.msra.mxu0 0.0
    %1547 = vmatprep.subr.mxu0 0.0
    %1548 = vmatpush2.msra.mxu0 0.0
    %1549 = vmatprep.subr.mxu0 0.0
    %1550 = vmatpush2.msra.mxu0 0.0
    %1551 = vmatprep.mubr.f32.mxu0 0.0
    %1552 = vmatmul.mubr.f32.gmra.mxu0 %v1482
    %v1553 = vpop.f32.mrf.mxu0
    %v1554 = vadd.f32 0.0, %v1553
    %v1555 = vpop.f32.mrf.mxu0
    %1556 = vmatprep.mubr.f32.mxu0 0.0
    %1557 = vmatmul.mubr.f32.gmra.mxu0 %v1485
    %v1558 = vpop.f32.mrf.mxu0
    %v1559 = vadd.f32 0.0, %v1558
    %v1560 = vpop.f32.mrf.mxu0
    %1561 = vdwg.mxu0
    %v1563 = vsel %vm507, %v1554, 0
    %v1566 = vsel %vm507, %v1559, 0
    %1568 = vmatprep.subr.mxu0 0.0
    %1569 = vmatpush1.msra.mxu0 0.0
    %1570 = vmatprep.subr.mxu0 0.0
    %1571 = vmatpush1.msra.mxu0 0.0
    %1572 = vmatprep.subr.mxu0 0.0
    %1573 = vmatpush1.msra.mxu0 0.0
    %1574 = vmatprep.subr.mxu0 0.0
    %1575 = vmatpush1.msra.mxu0 0.0
    %1576 = vmatprep.subr.mxu0 0.0
    %1577 = vmatpush1.msra.mxu0 0.0
    %1578 = vmatprep.subr.mxu0 0.0
    %1579 = vmatpush1.msra.mxu0 0.0
    %1580 = vmatprep.subr.mxu0 0.0
    %1581 = vmatpush1.msra.mxu0 0.0
    %1582 = vmatprep.subr.mxu0 0.0
    %1583 = vmatpush1.msra.mxu0 0.0
    %1584 = vmatprep.subr.mxu0 0.0
    %1585 = vmatpush1.msra.mxu0 0.0
    %1586 = vmatprep.subr.mxu0 0.0
    %1587 = vmatpush1.msra.mxu0 0.0
    %1588 = vmatprep.subr.mxu0 0.0
    %1589 = vmatpush1.msra.mxu0 0.0
    %1590 = vmatprep.subr.mxu0 0.0
    %1591 = vmatpush1.msra.mxu0 0.0
    %1592 = vmatprep.subr.mxu0 0.0
    %1593 = vmatpush1.msra.mxu0 0.0
    %1594 = vmatprep.subr.mxu0 0.0
    %1595 = vmatpush1.msra.mxu0 0.0
    %1596 = vmatprep.subr.mxu0 0.0
    %1597 = vmatpush1.msra.mxu0 0.0
    %1598 = vmatprep.subr.mxu0 0.0
    %1599 = vmatpush1.msra.mxu0 %v258
    %1600 = vmatprep.subr.mxu0 0.0
    %1601 = vmatpush2.msra.mxu0 0.0
    %1602 = vmatprep.subr.mxu0 0.0
    %1603 = vmatpush2.msra.mxu0 0.0
    %1604 = vmatprep.subr.mxu0 0.0
    %1605 = vmatpush2.msra.mxu0 0.0
    %1606 = vmatprep.subr.mxu0 0.0
    %1607 = vmatpush2.msra.mxu0 0.0
    %1608 = vmatprep.subr.mxu0 0.0
    %1609 = vmatpush2.msra.mxu0 0.0
    %1610 = vmatprep.subr.mxu0 0.0
    %1611 = vmatpush2.msra.mxu0 0.0
    %1612 = vmatprep.subr.mxu0 0.0
    %1613 = vmatpush2.msra.mxu0 0.0
    %1614 = vmatprep.subr.mxu0 0.0
    %1615 = vmatpush2.msra.mxu0 0.0
    %1616 = vmatprep.subr.mxu0 0.0
    %1617 = vmatpush2.msra.mxu0 0.0
    %1618 = vmatprep.subr.mxu0 0.0
    %1619 = vmatpush2.msra.mxu0 0.0
    %1620 = vmatprep.subr.mxu0 0.0
    %1621 = vmatpush2.msra.mxu0 0.0
    %1622 = vmatprep.subr.mxu0 0.0
    %1623 = vmatpush2.msra.mxu0 0.0
    %1624 = vmatprep.subr.mxu0 0.0
    %1625 = vmatpush2.msra.mxu0 0.0
    %1626 = vmatprep.subr.mxu0 0.0
    %1627 = vmatpush2.msra.mxu0 0.0
    %1628 = vmatprep.subr.mxu0 0.0
    %1629 = vmatpush2.msra.mxu0 0.0
    %1630 = vmatprep.subr.mxu0 0.0
    %1631 = vmatpush2.msra.mxu0 0.0
    %1632 = vmatprep.mubr.f32.mxu0 0.0
    %1633 = vmatmul.mubr.f32.gmra.mxu0 %v1563
    %v1634 = vpop.f32.mrf.mxu0
    %v1635 = vadd.f32 0.0, %v1634
    %v1636 = vpop.f32.mrf.mxu0
    %1637 = vmatprep.mubr.f32.mxu0 0.0
    %1638 = vmatmul.mubr.f32.gmra.mxu0 %v1566
    %v1639 = vpop.f32.mrf.mxu0
    %v1640 = vadd.f32 0.0, %v1639
    %v1641 = vpop.f32.mrf.mxu0
    %1642 = vdwg.mxu0
    %v1643 = vadd.f32 %v1356, %v1635
    %v1644 = vadd.f32 %v1357, %v1640
    %v1646 = vlaneseq
    %v1647 = vshrl.u32 %v1646, 7
    %v1648 = vsub.s32 0, %v1647
    %v1649 = vrot.slane %v253, %v1648
    %v1651 = vadd.f32 %v1643, %v1649
    %v1652 = vadd.f32 %v1644, %v1649
    %v1653 = vadd.f32 %v410, %v1651
    %v1654 = vadd.f32 %v411, %v1652
    %v1655 = vsel %vm368, %v1653, 0.0
    %1656 = vadd.xlane.f32.xlu0 %v1655
    %v1657 = vpop.xlane.xlu0 %1656
    %v1658 = vsel %vm368, %v1654, 0.0
    %1659 = vadd.xlane.f32.xlu0 %v1658
    %v1660 = vpop.xlane.xlu0 %1659
    %v1661 = vmul.f32 %v1657, %v375
    %v1662 = vmul.f32 %v1660, %v375
    %v1663 = vsub.f32 %v1653, %v1661
    %v1664 = vsub.f32 %v1654, %v1662
    %v1665 = vmul.f32 %v1663, %v1663
    %v1666 = vmul.f32 %v1664, %v1664
    %v1667 = vsel %vm368, %v1665, 0.0
    %1668 = vadd.xlane.f32.xlu0 %v1667
    %v1669 = vpop.xlane.xlu0 %1668
    %v1670 = vsel %vm368, %v1666, 0.0
    %1671 = vadd.xlane.f32.xlu0 %v1670
    %v1672 = vpop.xlane.xlu0 %1671
    %v1673 = vmul.f32 %v1669, %v375
    %v1674 = vmul.f32 %v1672, %v375
    %v1675 = vadd.f32 %v1673, 1e-05
    %v1676 = vadd.f32 %v1674, 1e-05
    %v1677 = vrsqrt.pop %v1675
    %v1678 = vrsqrt.pop %v1676
    %v1679 = vmul.f32 %v1663, %v1677
    %v1680 = vmul.f32 %v1664, %v1678
    %v1682 = vlaneseq
    %v1683 = vshrl.u32 %v1682, 7
    %v1684 = vsub.s32 0, %v1683
    %v1685 = vrot.slane %v250, %v1684
    %v1687 = vmul.f32 %v1679, %v1685
    %v1688 = vmul.f32 %v1680, %v1685
    %v1690 = vlaneseq
    %v1691 = vshrl.u32 %v1690, 7
    %v1692 = vsub.s32 0, %v1691
    %v1693 = vrot.slane %v249, %v1692
    %v1695 = vadd.f32 %v1687, %v1693
    %v1696 = vadd.f32 %v1688, %v1693
    %v1698 = vlaneseq
    %v1699 = vshrl.u32 %v1698, 7
    %v1700 = vsub.s32 0, %v1699
    %v1701 = vrot.slane %v235, %v1700
    %v1704 = vsel %vm368, %v1695, 0
    %v1707 = vsel %vm368, %v1696, 0
    %1709 = vmatprep.subr.mxu0 0.0
    %1710 = vmatpush1.msra.mxu0 0.0
    %1711 = vmatprep.subr.mxu0 0.0
    %1712 = vmatpush1.msra.mxu0 0.0
    %1713 = vmatprep.subr.mxu0 0.0
    %1714 = vmatpush1.msra.mxu0 0.0
    %1715 = vmatprep.subr.mxu0 0.0
    %1716 = vmatpush1.msra.mxu0 0.0
    %1717 = vmatprep.subr.mxu0 0.0
    %1718 = vmatpush1.msra.mxu0 0.0
    %1719 = vmatprep.subr.mxu0 0.0
    %1720 = vmatpush1.msra.mxu0 0.0
    %1721 = vmatprep.subr.mxu0 0.0
    %1722 = vmatpush1.msra.mxu0 0.0
    %1723 = vmatprep.subr.mxu0 0.0
    %1724 = vmatpush1.msra.mxu0 0.0
    %1725 = vmatprep.subr.mxu0 0.0
    %1726 = vmatpush1.msra.mxu0 0.0
    %1727 = vmatprep.subr.mxu0 0.0
    %1728 = vmatpush1.msra.mxu0 0.0
    %1729 = vmatprep.subr.mxu0 0.0
    %1730 = vmatpush1.msra.mxu0 0.0
    %1731 = vmatprep.subr.mxu0 0.0
    %1732 = vmatpush1.msra.mxu0 0.0
    %1733 = vmatprep.subr.mxu0 0.0
    %1734 = vmatpush1.msra.mxu0 %v240
    %1735 = vmatprep.subr.mxu0 0.0
    %1736 = vmatpush1.msra.mxu0 %v239
    %1737 = vmatprep.subr.mxu0 0.0
    %1738 = vmatpush1.msra.mxu0 %v238
    %1739 = vmatprep.subr.mxu0 0.0
    %1740 = vmatpush1.msra.mxu0 %v237
    %1741 = vmatprep.subr.mxu0 0.0
    %1742 = vmatpush2.msra.mxu0 0.0
    %1743 = vmatprep.subr.mxu0 0.0
    %1744 = vmatpush2.msra.mxu0 0.0
    %1745 = vmatprep.subr.mxu0 0.0
    %1746 = vmatpush2.msra.mxu0 0.0
    %1747 = vmatprep.subr.mxu0 0.0
    %1748 = vmatpush2.msra.mxu0 0.0
    %1749 = vmatprep.subr.mxu0 0.0
    %1750 = vmatpush2.msra.mxu0 0.0
    %1751 = vmatprep.subr.mxu0 0.0
    %1752 = vmatpush2.msra.mxu0 0.0
    %1753 = vmatprep.subr.mxu0 0.0
    %1754 = vmatpush2.msra.mxu0 0.0
    %1755 = vmatprep.subr.mxu0 0.0
    %1756 = vmatpush2.msra.mxu0 0.0
    %1757 = vmatprep.subr.mxu0 0.0
    %1758 = vmatpush2.msra.mxu0 0.0
    %1759 = vmatprep.subr.mxu0 0.0
    %1760 = vmatpush2.msra.mxu0 0.0
    %1761 = vmatprep.subr.mxu0 0.0
    %1762 = vmatpush2.msra.mxu0 0.0
    %1763 = vmatprep.subr.mxu0 0.0
    %1764 = vmatpush2.msra.mxu0 0.0
    %1765 = vmatprep.subr.mxu0 0.0
    %1766 = vmatpush2.msra.mxu0 0.0
    %1767 = vmatprep.subr.mxu0 0.0
    %1768 = vmatpush2.msra.mxu0 0.0
    %1769 = vmatprep.subr.mxu0 0.0
    %1770 = vmatpush2.msra.mxu0 0.0
    %1771 = vmatprep.subr.mxu0 0.0
    %1772 = vmatpush2.msra.mxu0 0.0
    %1773 = vmatprep.mubr.f32.mxu0 0.0
    %1774 = vmatmul.mubr.f32.gmra.mxu0 %v1704
    %v1775 = vpop.f32.mrf.mxu0
    %v1776 = vadd.f32 %v1701, %v1775
    %v1777 = vpop.f32.mrf.mxu0
    %1778 = vmatprep.mubr.f32.mxu0 0.0
    %1779 = vmatmul.mubr.f32.gmra.mxu0 %v1707
    %v1780 = vpop.f32.mrf.mxu0
    %v1781 = vadd.f32 %v1701, %v1780
    %v1782 = vpop.f32.mrf.mxu0
    %1783 = vdwg.mxu0
    %v1784 = vxor.u32 %v1776, 2147483648
    %v1785 = vxor.u32 %v1781, 2147483648
    %v1786 = vmul.f32 %v1784, 1.442695
    %v1787 = vpow.pop %v1786
    %v1788 = vmul.f32 %v1785, 1.442695
    %v1789 = vpow.pop %v1788
    %v1790 = vadd.f32 %v1787, 1.0
    %v1791 = vadd.f32 %v1789, 1.0
    %v1792 = vrcp.pop %v1790
    %v1793 = vmul.f32 1.0, %v1792
    %v1794 = vrcp.pop %v1791
    %v1795 = vmul.f32 1.0, %v1794
    %v1796 = vmul.f32 %v1776, %v1793
    %v1797 = vmul.f32 %v1781, %v1795
    %v1799 = vlaneseq
    %v1800 = vshrl.u32 %v1799, 7
    %v1801 = vsub.s32 0, %v1800
    %v1802 = vrot.slane %v236, %v1801
    %v1805 = vsel %vm280, %v1796, 0
    %v1808 = vsel %vm280, %v1797, 0
    %1810 = vmatprep.subr.mxu0 0.0
    %1811 = vmatpush1.msra.mxu0 0.0
    %1812 = vmatprep.subr.mxu0 0.0
    %1813 = vmatpush1.msra.mxu0 0.0
    %1814 = vmatprep.subr.mxu0 0.0
    %1815 = vmatpush1.msra.mxu0 0.0
    %1816 = vmatprep.subr.mxu0 0.0
    %1817 = vmatpush1.msra.mxu0 0.0
    %1818 = vmatprep.subr.mxu0 0.0
    %1819 = vmatpush1.msra.mxu0 0.0
    %1820 = vmatprep.subr.mxu0 0.0
    %1821 = vmatpush1.msra.mxu0 0.0
    %1822 = vmatprep.subr.mxu0 0.0
    %1823 = vmatpush1.msra.mxu0 0.0
    %1824 = vmatprep.subr.mxu0 0.0
    %1825 = vmatpush1.msra.mxu0 0.0
    %1826 = vmatprep.subr.mxu0 0.0
    %1827 = vmatpush1.msra.mxu0 %v248
    %1828 = vmatprep.subr.mxu0 0.0
    %1829 = vmatpush1.msra.mxu0 %v247
    %1830 = vmatprep.subr.mxu0 0.0
    %1831 = vmatpush1.msra.mxu0 %v246
    %1832 = vmatprep.subr.mxu0 0.0
    %1833 = vmatpush1.msra.mxu0 %v245
    %1834 = vmatprep.subr.mxu0 0.0
    %1835 = vmatpush1.msra.mxu0 %v244
    %1836 = vmatprep.subr.mxu0 0.0
    %1837 = vmatpush1.msra.mxu0 %v243
    %1838 = vmatprep.subr.mxu0 0.0
    %1839 = vmatpush1.msra.mxu0 %v242
    %1840 = vmatprep.subr.mxu0 0.0
    %1841 = vmatpush1.msra.mxu0 %v241
    %1842 = vmatprep.subr.mxu0 0.0
    %1843 = vmatpush2.msra.mxu0 0.0
    %1844 = vmatprep.subr.mxu0 0.0
    %1845 = vmatpush2.msra.mxu0 0.0
    %1846 = vmatprep.subr.mxu0 0.0
    %1847 = vmatpush2.msra.mxu0 0.0
    %1848 = vmatprep.subr.mxu0 0.0
    %1849 = vmatpush2.msra.mxu0 0.0
    %1850 = vmatprep.subr.mxu0 0.0
    %1851 = vmatpush2.msra.mxu0 0.0
    %1852 = vmatprep.subr.mxu0 0.0
    %1853 = vmatpush2.msra.mxu0 0.0
    %1854 = vmatprep.subr.mxu0 0.0
    %1855 = vmatpush2.msra.mxu0 0.0
    %1856 = vmatprep.subr.mxu0 0.0
    %1857 = vmatpush2.msra.mxu0 0.0
    %1858 = vmatprep.subr.mxu0 0.0
    %1859 = vmatpush2.msra.mxu0 0.0
    %1860 = vmatprep.subr.mxu0 0.0
    %1861 = vmatpush2.msra.mxu0 0.0
    %1862 = vmatprep.subr.mxu0 0.0
    %1863 = vmatpush2.msra.mxu0 0.0
    %1864 = vmatprep.subr.mxu0 0.0
    %1865 = vmatpush2.msra.mxu0 0.0
    %1866 = vmatprep.subr.mxu0 0.0
    %1867 = vmatpush2.msra.mxu0 0.0
    %1868 = vmatprep.subr.mxu0 0.0
    %1869 = vmatpush2.msra.mxu0 0.0
    %1870 = vmatprep.subr.mxu0 0.0
    %1871 = vmatpush2.msra.mxu0 0.0
    %1872 = vmatprep.subr.mxu0 0.0
    %1873 = vmatpush2.msra.mxu0 0.0
    %1874 = vmatprep.mubr.f32.mxu0 0.0
    %1875 = vmatmul.mubr.f32.gmra.mxu0 %v1805
    %v1876 = vpop.f32.mrf.mxu0
    %v1877 = vadd.f32 %v1802, %v1876
    %v1878 = vpop.f32.mrf.mxu0
    %1879 = vmatprep.mubr.f32.mxu0 0.0
    %1880 = vmatmul.mubr.f32.gmra.mxu0 %v1808
    %v1881 = vpop.f32.mrf.mxu0
    %v1882 = vadd.f32 %v1802, %v1881
    %v1883 = vpop.f32.mrf.mxu0
    %1884 = vdwg.mxu0
    %v1885 = vadd.f32 %v1695, %v1877
    %v1886 = vadd.f32 %v1696, %v1882
    %v1887 = vsel %vm368, %v1885, 0.0
    %1888 = vadd.xlane.f32.xlu0 %v1887
    %v1889 = vpop.xlane.xlu0 %1888
    %v1890 = vsel %vm368, %v1886, 0.0
    %1891 = vadd.xlane.f32.xlu0 %v1890
    %v1892 = vpop.xlane.xlu0 %1891
    %v1893 = vmul.f32 %v1889, %v375
    %v1894 = vmul.f32 %v1892, %v375
    %v1895 = vsub.f32 %v1885, %v1893
    %v1896 = vsub.f32 %v1886, %v1894
    %v1897 = vmul.f32 %v1895, %v1895
    %v1898 = vmul.f32 %v1896, %v1896
    %v1899 = vsel %vm368, %v1897, 0.0
    %1900 = vadd.xlane.f32.xlu0 %v1899
    %v1901 = vpop.xlane.xlu0 %1900
    %v1902 = vsel %vm368, %v1898, 0.0
    %1903 = vadd.xlane.f32.xlu0 %v1902
    %v1904 = vpop.xlane.xlu0 %1903
    %v1905 = vmul.f32 %v1901, %v375
    %v1906 = vmul.f32 %v1904, %v375
    %v1907 = vadd.f32 %v1905, 1e-05
    %v1908 = vadd.f32 %v1906, 1e-05
    %v1909 = vrsqrt.pop %v1907
    %v1910 = vrsqrt.pop %v1908
    %v1911 = vmul.f32 %v1895, %v1909
    %v1912 = vmul.f32 %v1896, %v1910
    %v1914 = vlaneseq
    %v1915 = vshrl.u32 %v1914, 7
    %v1916 = vsub.s32 0, %v1915
    %v1917 = vrot.slane %v252, %v1916
    %v1919 = vmul.f32 %v1911, %v1917
    %v1920 = vmul.f32 %v1912, %v1917
    %v1922 = vlaneseq
    %v1923 = vshrl.u32 %v1922, 7
    %v1924 = vsub.s32 0, %v1923
    %v1925 = vrot.slane %v251, %v1924
    %v1927 = vadd.f32 %v1919, %v1925
    %v1928 = vadd.f32 %v1920, %v1925
    %v1929 = vld [vmem:[%s3] sm:$0xff]
    %v1930 = vld [vmem:[%s3 + $0x8] sm:$0x3f]
    %1931 = vset.pattern.permute.xlu0 0
    %1932 = vperm.xlu0 %1931, %v1929
    %v1933 = vpop.permute.xlu0 %1932
    %1934 = vset.pattern.permute.xlu0 0
    %1935 = vperm.xlu0 %1934, %v1930
    %v1936 = vpop.permute.xlu0 %1935
    %vm1937 = vcmp.eq.s32.totalorder %v267, %v1933
    %vm1938 = vcmp.eq.s32.totalorder %v267, %v1936
    %v1939 = vsel %vm1937, 1, 0
    %v1940 = vsel %vm1938, 1, 0
    %v1941 = vcvt.s32.f32 %v1939
    %v1942 = vcvt.s32.f32 %v1940
    %v1944 = vsel %vm280, %v1941, 0
    %v1947 = vsel %vm280, %v1942, 0
    %1949 = vmatprep.subr.mxu0 0.0
    %1950 = vmatpush1.msra.mxu0 0.0
    %1951 = vmatprep.subr.mxu0 0.0
    %1952 = vmatpush1.msra.mxu0 0.0
    %1953 = vmatprep.subr.mxu0 0.0
    %1954 = vmatpush1.msra.mxu0 0.0
    %1955 = vmatprep.subr.mxu0 0.0
    %1956 = vmatpush1.msra.mxu0 0.0
    %1957 = vmatprep.subr.mxu0 0.0
    %1958 = vmatpush1.msra.mxu0 0.0
    %1959 = vmatprep.subr.mxu0 0.0
    %1960 = vmatpush1.msra.mxu0 0.0
    %1961 = vmatprep.subr.mxu0 0.0
    %1962 = vmatpush1.msra.mxu0 0.0
    %1963 = vmatprep.subr.mxu0 0.0
    %1964 = vmatpush1.msra.mxu0 0.0
    %1965 = vmatprep.subr.mxu0 0.0
    %1966 = vmatpush1.msra.mxu0 %v232
    %1967 = vmatprep.subr.mxu0 0.0
    %1968 = vmatpush1.msra.mxu0 %v231
    %1969 = vmatprep.subr.mxu0 0.0
    %1970 = vmatpush1.msra.mxu0 %v230
    %1971 = vmatprep.subr.mxu0 0.0
    %1972 = vmatpush1.msra.mxu0 %v229
    %1973 = vmatprep.subr.mxu0 0.0
    %1974 = vmatpush1.msra.mxu0 %v228
    %1975 = vmatprep.subr.mxu0 0.0
    %1976 = vmatpush1.msra.mxu0 %v227
    %1977 = vmatprep.subr.mxu0 0.0
    %1978 = vmatpush1.msra.mxu0 %v226
    %1979 = vmatprep.subr.mxu0 0.0
    %1980 = vmatpush1.msra.mxu0 %v225
    %1981 = vmatprep.subr.mxu0 0.0
    %1982 = vmatpush2.msra.mxu0 0.0
    %1983 = vmatprep.subr.mxu0 0.0
    %1984 = vmatpush2.msra.mxu0 0.0
    %1985 = vmatprep.subr.mxu0 0.0
    %1986 = vmatpush2.msra.mxu0 0.0
    %1987 = vmatprep.subr.mxu0 0.0
    %1988 = vmatpush2.msra.mxu0 0.0
    %1989 = vmatprep.subr.mxu0 0.0
    %1990 = vmatpush2.msra.mxu0 0.0
    %1991 = vmatprep.subr.mxu0 0.0
    %1992 = vmatpush2.msra.mxu0 0.0
    %1993 = vmatprep.subr.mxu0 0.0
    %1994 = vmatpush2.msra.mxu0 0.0
    %1995 = vmatprep.subr.mxu0 0.0
    %1996 = vmatpush2.msra.mxu0 0.0
    %1997 = vmatprep.subr.mxu0 0.0
    %1998 = vmatpush2.msra.mxu0 0.0
    %1999 = vmatprep.subr.mxu0 0.0
    %2000 = vmatpush2.msra.mxu0 0.0
    %2001 = vmatprep.subr.mxu0 0.0
    %2002 = vmatpush2.msra.mxu0 0.0
    %2003 = vmatprep.subr.mxu0 0.0
    %2004 = vmatpush2.msra.mxu0 0.0
    %2005 = vmatprep.subr.mxu0 0.0
    %2006 = vmatpush2.msra.mxu0 0.0
    %2007 = vmatprep.subr.mxu0 0.0
    %2008 = vmatpush2.msra.mxu0 0.0
    %2009 = vmatprep.subr.mxu0 0.0
    %2010 = vmatpush2.msra.mxu0 0.0
    %2011 = vmatprep.subr.mxu0 0.0
    %2012 = vmatpush2.msra.mxu0 0.0
    %2013 = vmatprep.mubr.f32.mxu0 0.0
    %2014 = vmatmul.mubr.f32.gmra.mxu0 %v1944
    %v2015 = vpop.f32.mrf.mxu0
    %v2016 = vadd.f32 0.0, %v2015
    %v2017 = vpop.f32.mrf.mxu0
    %2018 = vmatprep.mubr.f32.mxu0 0.0
    %2019 = vmatmul.mubr.f32.gmra.mxu0 %v1947
    %v2020 = vpop.f32.mrf.mxu0
    %v2021 = vadd.f32 0.0, %v2020
    %v2022 = vpop.f32.mrf.mxu0
    %2023 = vdwg.mxu0
    %v2024 = vmul.f32 %v2016, 5.656854
    %v2025 = vmul.f32 %v2021, 5.656854
    %v2026 = vld [vmem:[%s9] sm:$0xff]
    %v2027 = vld [vmem:[%s9 + $0x8] sm:$0x3f]
    %v2028 = vadd.f32 %v2024, %v2026
    %v2029 = vadd.f32 %v2025, %v2027
    %v2030 = vsel %vm368, %v2028, 0.0
    %2031 = vadd.xlane.f32.xlu0 %v2030
    %v2032 = vpop.xlane.xlu0 %2031
    %vm2033 = vcmask 259072
    %v2034 = vsel %vm2033, %v2029, 0.0
    %2035 = vadd.xlane.f32.xlu0 %v2034
    %v2036 = vpop.xlane.xlu0 %2035
    %v2037 = vmul.f32 %v2032, %v375
    %v2038 = vmul.f32 %v2036, %v375
    %v2039 = vsub.f32 %v2028, %v2037
    %v2040 = vsub.f32 %v2029, %v2038
    %v2041 = vmul.f32 %v2039, %v2039
    %v2042 = vmul.f32 %v2040, %v2040
    %v2043 = vsel %vm368, %v2041, 0.0
    %2044 = vadd.xlane.f32.xlu0 %v2043
    %v2045 = vpop.xlane.xlu0 %2044
    %v2046 = vsel %vm2033, %v2042, 0.0
    %2047 = vadd.xlane.f32.xlu0 %v2046
    %v2048 = vpop.xlane.xlu0 %2047
    %v2049 = vmul.f32 %v2045, %v375
    %v2050 = vmul.f32 %v2048, %v375
    %v2051 = vadd.f32 %v2049, 1e-05
    %v2052 = vadd.f32 %v2050, 1e-05
    %v2053 = vrsqrt.pop %v2051
    %v2054 = vrsqrt.pop %v2052
    %v2055 = vmul.f32 %v2039, %v2053
    %v2056 = vmul.f32 %v2040, %v2054
    %v2058 = vlaneseq
    %v2059 = vshrl.u32 %v2058, 7
    %v2060 = vsub.s32 0, %v2059
    %v2061 = vrot.slane %v184, %v2060
    %v2063 = vmul.f32 %v2055, %v2061
    %v2064 = vmul.f32 %v2056, %v2061
    %v2066 = vlaneseq
    %v2067 = vshrl.u32 %v2066, 7
    %v2068 = vsub.s32 0, %v2067
    %v2069 = vrot.slane %v183, %v2068
    %v2071 = vadd.f32 %v2063, %v2069
    %v2072 = vadd.f32 %v2064, %v2069
    %v2073 = vld [vmem:[%s13] sm:$0xff]
    %v2074 = vld [vmem:[%s13 + $0x8] sm:$0x3f]
    %v2075 = vld [vmem:[%s15] sm:$0xff]
    %v2076 = vld [vmem:[%s15 + $0x8] sm:$0x3f]
    %v2078 = vlaneseq
    %v2079 = vshrl.u32 %v2078, 7
    %v2080 = vsub.s32 0, %v2079
    %v2081 = vrot.slane %v216, %v2080
    %v2084 = vsel %vm368, %v2071, 0
    %v2087 = vsel %vm368, %v2072, 0
    %2089 = vmatprep.subr.mxu0 0.0
    %2090 = vmatpush1.msra.mxu0 0.0
    %2091 = vmatprep.subr.mxu0 0.0
    %2092 = vmatpush1.msra.mxu0 0.0
    %2093 = vmatprep.subr.mxu0 0.0
    %2094 = vmatpush1.msra.mxu0 0.0
    %2095 = vmatprep.subr.mxu0 0.0
    %2096 = vmatpush1.msra.mxu0 0.0
    %2097 = vmatprep.subr.mxu0 0.0
    %2098 = vmatpush1.msra.mxu0 0.0
    %2099 = vmatprep.subr.mxu0 0.0
    %2100 = vmatpush1.msra.mxu0 0.0
    %2101 = vmatprep.subr.mxu0 0.0
    %2102 = vmatpush1.msra.mxu0 0.0
    %2103 = vmatprep.subr.mxu0 0.0
    %2104 = vmatpush1.msra.mxu0 0.0
    %2105 = vmatprep.subr.mxu0 0.0
    %2106 = vmatpush1.msra.mxu0 0.0
    %2107 = vmatprep.subr.mxu0 0.0
    %2108 = vmatpush1.msra.mxu0 0.0
    %2109 = vmatprep.subr.mxu0 0.0
    %2110 = vmatpush1.msra.mxu0 0.0
    %2111 = vmatprep.subr.mxu0 0.0
    %2112 = vmatpush1.msra.mxu0 0.0
    %2113 = vmatprep.subr.mxu0 0.0
    %2114 = vmatpush1.msra.mxu0 %v224
    %2115 = vmatprep.subr.mxu0 0.0
    %2116 = vmatpush1.msra.mxu0 %v223
    %2117 = vmatprep.subr.mxu0 0.0
    %2118 = vmatpush1.msra.mxu0 %v222
    %2119 = vmatprep.subr.mxu0 0.0
    %2120 = vmatpush1.msra.mxu0 %v221
    %2121 = vmatprep.subr.mxu0 0.0
    %2122 = vmatpush2.msra.mxu0 0.0
    %2123 = vmatprep.subr.mxu0 0.0
    %2124 = vmatpush2.msra.mxu0 0.0
    %2125 = vmatprep.subr.mxu0 0.0
    %2126 = vmatpush2.msra.mxu0 0.0
    %2127 = vmatprep.subr.mxu0 0.0
    %2128 = vmatpush2.msra.mxu0 0.0
    %2129 = vmatprep.subr.mxu0 0.0
    %2130 = vmatpush2.msra.mxu0 0.0
    %2131 = vmatprep.subr.mxu0 0.0
    %2132 = vmatpush2.msra.mxu0 0.0
    %2133 = vmatprep.subr.mxu0 0.0
    %2134 = vmatpush2.msra.mxu0 0.0
    %2135 = vmatprep.subr.mxu0 0.0
    %2136 = vmatpush2.msra.mxu0 0.0
    %2137 = vmatprep.subr.mxu0 0.0
    %2138 = vmatpush2.msra.mxu0 0.0
    %2139 = vmatprep.subr.mxu0 0.0
    %2140 = vmatpush2.msra.mxu0 0.0
    %2141 = vmatprep.subr.mxu0 0.0
    %2142 = vmatpush2.msra.mxu0 0.0
    %2143 = vmatprep.subr.mxu0 0.0
    %2144 = vmatpush2.msra.mxu0 0.0
    %2145 = vmatprep.subr.mxu0 0.0
    %2146 = vmatpush2.msra.mxu0 0.0
    %2147 = vmatprep.subr.mxu0 0.0
    %2148 = vmatpush2.msra.mxu0 0.0
    %2149 = vmatprep.subr.mxu0 0.0
    %2150 = vmatpush2.msra.mxu0 0.0
    %2151 = vmatprep.subr.mxu0 0.0
    %2152 = vmatpush2.msra.mxu0 0.0
    %2153 = vmatprep.mubr.f32.mxu0 0.0
    %2154 = vmatmul.mubr.f32.gmra.mxu0 %v2084
    %v2155 = vpop.f32.mrf.mxu0
    %v2156 = vadd.f32 %v2081, %v2155
    %v2157 = vpop.f32.mrf.mxu0
    %2158 = vmatprep.mubr.f32.mxu0 0.0
    %2159 = vmatmul.mubr.f32.gmra.mxu0 %v2087
    %v2160 = vpop.f32.mrf.mxu0
    %v2161 = vadd.f32 %v2081, %v2160
    %v2162 = vpop.f32.mrf.mxu0
    %2163 = vdwg.mxu0
    %2166 = vrot.lane.b32.xlu0 %v2156, 96
    %v2167 = vpop.permute.xlu0 %2166
    %2168 = vrot.lane.b32.xlu0 %v2161, 96
    %v2169 = vpop.permute.xlu0 %2168
    %v2170 = vsel %vm507, %v2156, 0
    %v2172 = vsel %vm507, %v2161, 0
    %v2174 = vsel %vm507, %v2167, 0
    %v2176 = vsel %vm507, %v2169, 0
    %2178 = vmatprep.subr.mxu0 0.0
    %2179 = vmatpush1.xpose.msra.mxu0 0.0
    %2180 = vmatprep.subr.mxu0 0.0
    %2181 = vmatpush1.xpose.msra.mxu0 0.0
    %2182 = vmatprep.subr.mxu0 0.0
    %2183 = vmatpush1.xpose.msra.mxu0 0.0
    %2184 = vmatprep.subr.mxu0 0.0
    %2185 = vmatpush1.xpose.msra.mxu0 0.0
    %2186 = vmatprep.subr.mxu0 0.0
    %2187 = vmatpush1.xpose.msra.mxu0 0.0
    %2188 = vmatprep.subr.mxu0 0.0
    %2189 = vmatpush1.xpose.msra.mxu0 0.0
    %2190 = vmatprep.subr.mxu0 0.0
    %2191 = vmatpush1.xpose.msra.mxu0 0.0
    %2192 = vmatprep.subr.mxu0 0.0
    %2193 = vmatpush1.xpose.msra.mxu0 0.0
    %2194 = vmatprep.subr.mxu0 0.0
    %2195 = vmatpush1.xpose.msra.mxu0 0.0
    %2196 = vmatprep.subr.mxu0 0.0
    %2197 = vmatpush1.xpose.msra.mxu0 0.0
    %2198 = vmatprep.subr.mxu0 0.0
    %2199 = vmatpush1.xpose.msra.mxu0 0.0
    %2200 = vmatprep.subr.mxu0 0.0
    %2201 = vmatpush1.xpose.msra.mxu0 0.0
    %2202 = vmatprep.subr.mxu0 0.0
    %2203 = vmatpush1.xpose.msra.mxu0 0.0
    %2204 = vmatprep.subr.mxu0 0.0
    %2205 = vmatpush1.xpose.msra.mxu0 0.0
    %2206 = vmatprep.subr.mxu0 0.0
    %2207 = vmatpush1.xpose.msra.mxu0 %v2176
    %2208 = vmatprep.subr.mxu0 0.0
    %2209 = vmatpush1.xpose.msra.mxu0 %v2174
    %2210 = vmatprep.subr.mxu0 0.0
    %2211 = vmatpush2.xpose.msra.mxu0 0.0
    %2212 = vmatprep.subr.mxu0 0.0
    %2213 = vmatpush2.xpose.msra.mxu0 0.0
    %2214 = vmatprep.subr.mxu0 0.0
    %2215 = vmatpush2.xpose.msra.mxu0 0.0
    %2216 = vmatprep.subr.mxu0 0.0
    %2217 = vmatpush2.xpose.msra.mxu0 0.0
    %2218 = vmatprep.subr.mxu0 0.0
    %2219 = vmatpush2.xpose.msra.mxu0 0.0
    %2220 = vmatprep.subr.mxu0 0.0
    %2221 = vmatpush2.xpose.msra.mxu0 0.0
    %2222 = vmatprep.subr.mxu0 0.0
    %2223 = vmatpush2.xpose.msra.mxu0 0.0
    %2224 = vmatprep.subr.mxu0 0.0
    %2225 = vmatpush2.xpose.msra.mxu0 0.0
    %2226 = vmatprep.subr.mxu0 0.0
    %2227 = vmatpush2.xpose.msra.mxu0 0.0
    %2228 = vmatprep.subr.mxu0 0.0
    %2229 = vmatpush2.xpose.msra.mxu0 0.0
    %2230 = vmatprep.subr.mxu0 0.0
    %2231 = vmatpush2.xpose.msra.mxu0 0.0
    %2232 = vmatprep.subr.mxu0 0.0
    %2233 = vmatpush2.xpose.msra.mxu0 0.0
    %2234 = vmatprep.subr.mxu0 0.0
    %2235 = vmatpush2.xpose.msra.mxu0 0.0
    %2236 = vmatprep.subr.mxu0 0.0
    %2237 = vmatpush2.xpose.msra.mxu0 0.0
    %2238 = vmatprep.subr.mxu0 0.0
    %2239 = vmatpush2.xpose.msra.mxu0 0.0
    %2240 = vmatprep.subr.mxu0 0.0
    %2241 = vmatpush2.xpose.msra.mxu0 0.0
    %2242 = vmatprep.mubr.f32.mxu0 0.0
    %2243 = vmatmul.mubr.f32.gmra.mxu0 %v2170
    %v2244 = vpop.f32.mrf.mxu0
    %v2245 = vadd.f32 0.0, %v2244
    %v2246 = vpop.f32.mrf.mxu0
    %2247 = vmatprep.mubr.f32.mxu0 0.0
    %2248 = vmatmul.mubr.f32.gmra.mxu0 %v2172
    %v2249 = vpop.f32.mrf.mxu0
    %v2250 = vadd.f32 0.0, %v2249
    %v2251 = vpop.f32.mrf.mxu0
    %2252 = vdwg.mxu0
    %v2253 = vmul.f32 %v2245, 0.35355338
    %v2254 = vmul.f32 %v2250, 0.35355338
    %v2255 = vadd.f32 %v2253, %v2073
    %v2256 = vadd.f32 %v2254, %v2074
    %vm2257 = vcmask 113664
    %v2258 = vsel %vm2257, %v2255, -inf
    %2259 = vmax.xlane.f32.xlu0 %v2258
    %v2260 = vpop.xlane.xlu0 %2259
    %vm2261 = vcmask 111616
    %v2262 = vsel %vm2261, %v2256, -inf
    %2263 = vmax.xlane.f32.xlu0 %v2262
    %v2264 = vpop.xlane.xlu0 %2263
    %v2265 = vsub.f32 %v2255, %v2260
    %v2266 = vsub.f32 %v2256, %v2264
    %v2267 = vmul.f32 %v2265, 1.442695
    %v2268 = vpow.pop %v2267
    %v2269 = vmul.f32 %v2266, 1.442695
    %v2270 = vpow.pop %v2269
    %v2271 = vsel %vm2257, %v2268, 0.0
    %2272 = vadd.xlane.f32.xlu0 %v2271
    %v2273 = vpop.xlane.xlu0 %2272
    %v2274 = vsel %vm2261, %v2270, 0.0
    %2275 = vadd.xlane.f32.xlu0 %v2274
    %v2276 = vpop.xlane.xlu0 %2275
    %v2277 = vrcp.pop %v2273
    %v2278 = vmul.f32 %v2268, %v2277
    %v2279 = vrcp.pop %v2276
    %v2280 = vmul.f32 %v2270, %v2279
    %2281 = vrot.lane.b32.xlu0 %v2156, 64
    %v2282 = vpop.permute.xlu0 %2281
    %2283 = vrot.lane.b32.xlu0 %v2161, 64
    %v2284 = vpop.permute.xlu0 %2283
    %v2287 = vsel %vm2257, %v2278, 0
    %v2290 = vsel %vm2257, %v2280, 0
    %vm2292 = vcmask 1045504
    %v2293 = vsel %vm2292, %v2284, 0
    %2295 = vmatprep.subr.mxu0 0.0
    %2296 = vmatpush1.msra.mxu0 0.0
    %2297 = vmatprep.subr.mxu0 0.0
    %2298 = vmatpush1.msra.mxu0 0.0
    %2299 = vmatprep.subr.mxu0 0.0
    %2300 = vmatpush1.msra.mxu0 0.0
    %2301 = vmatprep.subr.mxu0 0.0
    %2302 = vmatpush1.msra.mxu0 0.0
    %2303 = vmatprep.subr.mxu0 0.0
    %2304 = vmatpush1.msra.mxu0 0.0
    %2305 = vmatprep.subr.mxu0 0.0
    %2306 = vmatpush1.msra.mxu0 0.0
    %2307 = vmatprep.subr.mxu0 0.0
    %2308 = vmatpush1.msra.mxu0 0.0
    %2309 = vmatprep.subr.mxu0 0.0
    %2310 = vmatpush1.msra.mxu0 0.0
    %2311 = vmatprep.subr.mxu0 0.0
    %2312 = vmatpush1.msra.mxu0 0.0
    %2313 = vmatprep.subr.mxu0 0.0
    %2314 = vmatpush1.msra.mxu0 0.0
    %2315 = vmatprep.subr.mxu0 0.0
    %2316 = vmatpush1.msra.mxu0 0.0
    %2317 = vmatprep.subr.mxu0 0.0
    %2318 = vmatpush1.msra.mxu0 0.0
    %2319 = vmatprep.subr.mxu0 0.0
    %2320 = vmatpush1.msra.mxu0 0.0
    %2321 = vmatprep.subr.mxu0 0.0
    %2322 = vmatpush1.msra.mxu0 0.0
    %2323 = vmatprep.subr.mxu0 0.0
    %2324 = vmatpush1.msra.mxu0 %v2293
    %2325 = vmatprep.subr.mxu0 0.0
    %2326 = vmatpush1.msra.mxu0 %v2282
    %2327 = vmatprep.subr.mxu0 0.0
    %2328 = vmatpush2.msra.mxu0 0.0
    %2329 = vmatprep.subr.mxu0 0.0
    %2330 = vmatpush2.msra.mxu0 0.0
    %2331 = vmatprep.subr.mxu0 0.0
    %2332 = vmatpush2.msra.mxu0 0.0
    %2333 = vmatprep.subr.mxu0 0.0
    %2334 = vmatpush2.msra.mxu0 0.0
    %2335 = vmatprep.subr.mxu0 0.0
    %2336 = vmatpush2.msra.mxu0 0.0
    %2337 = vmatprep.subr.mxu0 0.0
    %2338 = vmatpush2.msra.mxu0 0.0
    %2339 = vmatprep.subr.mxu0 0.0
    %2340 = vmatpush2.msra.mxu0 0.0
    %2341 = vmatprep.subr.mxu0 0.0
    %2342 = vmatpush2.msra.mxu0 0.0
    %2343 = vmatprep.subr.mxu0 0.0
    %2344 = vmatpush2.msra.mxu0 0.0
    %2345 = vmatprep.subr.mxu0 0.0
    %2346 = vmatpush2.msra.mxu0 0.0
    %2347 = vmatprep.subr.mxu0 0.0
    %2348 = vmatpush2.msra.mxu0 0.0
    %2349 = vmatprep.subr.mxu0 0.0
    %2350 = vmatpush2.msra.mxu0 0.0
    %2351 = vmatprep.subr.mxu0 0.0
    %2352 = vmatpush2.msra.mxu0 0.0
    %2353 = vmatprep.subr.mxu0 0.0
    %2354 = vmatpush2.msra.mxu0 0.0
    %2355 = vmatprep.subr.mxu0 0.0
    %2356 = vmatpush2.msra.mxu0 0.0
    %2357 = vmatprep.subr.mxu0 0.0
    %2358 = vmatpush2.msra.mxu0 0.0
    %2359 = vmatprep.mubr.f32.mxu0 0.0
    %2360 = vmatmul.mubr.f32.gmra.mxu0 %v2287
    %v2361 = vpop.f32.mrf.mxu0
    %v2362 = vadd.f32 0.0, %v2361
    %v2363 = vpop.f32.mrf.mxu0
    %2364 = vmatprep.mubr.f32.mxu0 0.0
    %2365 = vmatmul.mubr.f32.gmra.mxu0 %v2290
    %v2366 = vpop.f32.mrf.mxu0
    %v2367 = vadd.f32 0.0, %v2366
    %v2368 = vpop.f32.mrf.mxu0
    %2369 = vdwg.mxu0
    %2370 = vrot.lane.b32.xlu0 %v2156, 120
    %v2371 = vpop.permute.xlu0 %2370
    %2372 = vrot.lane.b32.xlu0 %v2161, 120
    %v2373 = vpop.permute.xlu0 %2372
    %2374 = vrot.lane.b32.xlu0 %v2156, 88
    %v2375 = vpop.permute.xlu0 %2374
    %2376 = vrot.lane.b32.xlu0 %v2161, 88
    %v2377 = vpop.permute.xlu0 %2376
    %v2378 = vsel %vm507, %v2371, 0
    %v2380 = vsel %vm507, %v2373, 0
    %v2382 = vsel %vm507, %v2375, 0
    %v2384 = vsel %vm507, %v2377, 0
    %2386 = vmatprep.subr.mxu0 0.0
    %2387 = vmatpush1.xpose.msra.mxu0 0.0
    %2388 = vmatprep.subr.mxu0 0.0
    %2389 = vmatpush1.xpose.msra.mxu0 0.0
    %2390 = vmatprep.subr.mxu0 0.0
    %2391 = vmatpush1.xpose.msra.mxu0 0.0
    %2392 = vmatprep.subr.mxu0 0.0
    %2393 = vmatpush1.xpose.msra.mxu0 0.0
    %2394 = vmatprep.subr.mxu0 0.0
    %2395 = vmatpush1.xpose.msra.mxu0 0.0
    %2396 = vmatprep.subr.mxu0 0.0
    %2397 = vmatpush1.xpose.msra.mxu0 0.0
    %2398 = vmatprep.subr.mxu0 0.0
    %2399 = vmatpush1.xpose.msra.mxu0 0.0
    %2400 = vmatprep.subr.mxu0 0.0
    %2401 = vmatpush1.xpose.msra.mxu0 0.0
    %2402 = vmatprep.subr.mxu0 0.0
    %2403 = vmatpush1.xpose.msra.mxu0 0.0
    %2404 = vmatprep.subr.mxu0 0.0
    %2405 = vmatpush1.xpose.msra.mxu0 0.0
    %2406 = vmatprep.subr.mxu0 0.0
    %2407 = vmatpush1.xpose.msra.mxu0 0.0
    %2408 = vmatprep.subr.mxu0 0.0
    %2409 = vmatpush1.xpose.msra.mxu0 0.0
    %2410 = vmatprep.subr.mxu0 0.0
    %2411 = vmatpush1.xpose.msra.mxu0 0.0
    %2412 = vmatprep.subr.mxu0 0.0
    %2413 = vmatpush1.xpose.msra.mxu0 0.0
    %2414 = vmatprep.subr.mxu0 0.0
    %2415 = vmatpush1.xpose.msra.mxu0 %v2384
    %2416 = vmatprep.subr.mxu0 0.0
    %2417 = vmatpush1.xpose.msra.mxu0 %v2382
    %2418 = vmatprep.subr.mxu0 0.0
    %2419 = vmatpush2.xpose.msra.mxu0 0.0
    %2420 = vmatprep.subr.mxu0 0.0
    %2421 = vmatpush2.xpose.msra.mxu0 0.0
    %2422 = vmatprep.subr.mxu0 0.0
    %2423 = vmatpush2.xpose.msra.mxu0 0.0
    %2424 = vmatprep.subr.mxu0 0.0
    %2425 = vmatpush2.xpose.msra.mxu0 0.0
    %2426 = vmatprep.subr.mxu0 0.0
    %2427 = vmatpush2.xpose.msra.mxu0 0.0
    %2428 = vmatprep.subr.mxu0 0.0
    %2429 = vmatpush2.xpose.msra.mxu0 0.0
    %2430 = vmatprep.subr.mxu0 0.0
    %2431 = vmatpush2.xpose.msra.mxu0 0.0
    %2432 = vmatprep.subr.mxu0 0.0
    %2433 = vmatpush2.xpose.msra.mxu0 0.0
    %2434 = vmatprep.subr.mxu0 0.0
    %2435 = vmatpush2.xpose.msra.mxu0 0.0
    %2436 = vmatprep.subr.mxu0 0.0
    %2437 = vmatpush2.xpose.msra.mxu0 0.0
    %2438 = vmatprep.subr.mxu0 0.0
    %2439 = vmatpush2.xpose.msra.mxu0 0.0
    %2440 = vmatprep.subr.mxu0 0.0
    %2441 = vmatpush2.xpose.msra.mxu0 0.0
    %2442 = vmatprep.subr.mxu0 0.0
    %2443 = vmatpush2.xpose.msra.mxu0 0.0
    %2444 = vmatprep.subr.mxu0 0.0
    %2445 = vmatpush2.xpose.msra.mxu0 0.0
    %2446 = vmatprep.subr.mxu0 0.0
    %2447 = vmatpush2.xpose.msra.mxu0 0.0
    %2448 = vmatprep.subr.mxu0 0.0
    %2449 = vmatpush2.xpose.msra.mxu0 0.0
    %2450 = vmatprep.mubr.f32.mxu0 0.0
    %2451 = vmatmul.mubr.f32.gmra.mxu0 %v2378
    %v2452 = vpop.f32.mrf.mxu0
    %v2453 = vadd.f32 0.0, %v2452
    %v2454 = vpop.f32.mrf.mxu0
    %2455 = vmatprep.mubr.f32.mxu0 0.0
    %2456 = vmatmul.mubr.f32.gmra.mxu0 %v2380
    %v2457 = vpop.f32.mrf.mxu0
    %v2458 = vadd.f32 0.0, %v2457
    %v2459 = vpop.f32.mrf.mxu0
    %2460 = vdwg.mxu0
    %v2461 = vmul.f32 %v2453, 0.35355338
    %v2462 = vmul.f32 %v2458, 0.35355338
    %v2463 = vadd.f32 %v2461, %v2073
    %v2464 = vadd.f32 %v2462, %v2074
    %v2465 = vsel %vm2257, %v2463, -inf
    %2466 = vmax.xlane.f32.xlu0 %v2465
    %v2467 = vpop.xlane.xlu0 %2466
    %v2468 = vsel %vm2261, %v2464, -inf
    %2469 = vmax.xlane.f32.xlu0 %v2468
    %v2470 = vpop.xlane.xlu0 %2469
    %v2471 = vsub.f32 %v2463, %v2467
    %v2472 = vsub.f32 %v2464, %v2470
    %v2473 = vmul.f32 %v2471, 1.442695
    %v2474 = vpow.pop %v2473
    %v2475 = vmul.f32 %v2472, 1.442695
    %v2476 = vpow.pop %v2475
    %v2477 = vsel %vm2257, %v2474, 0.0
    %2478 = vadd.xlane.f32.xlu0 %v2477
    %v2479 = vpop.xlane.xlu0 %2478
    %v2480 = vsel %vm2261, %v2476, 0.0
    %2481 = vadd.xlane.f32.xlu0 %v2480
    %v2482 = vpop.xlane.xlu0 %2481
    %v2483 = vrcp.pop %v2479
    %v2484 = vmul.f32 %v2474, %v2483
    %v2485 = vrcp.pop %v2482
    %v2486 = vmul.f32 %v2476, %v2485
    %2487 = vrot.lane.b32.xlu0 %v2156, 56
    %v2488 = vpop.permute.xlu0 %2487
    %2489 = vrot.lane.b32.xlu0 %v2161, 56
    %v2490 = vpop.permute.xlu0 %2489
    %v2493 = vsel %vm2257, %v2484, 0
    %v2496 = vsel %vm2257, %v2486, 0
    %v2498 = vsel %vm2292, %v2490, 0
    %2500 = vmatprep.subr.mxu0 0.0
    %2501 = vmatpush1.msra.mxu0 0.0
    %2502 = vmatprep.subr.mxu0 0.0
    %2503 = vmatpush1.msra.mxu0 0.0
    %2504 = vmatprep.subr.mxu0 0.0
    %2505 = vmatpush1.msra.mxu0 0.0
    %2506 = vmatprep.subr.mxu0 0.0
    %2507 = vmatpush1.msra.mxu0 0.0
    %2508 = vmatprep.subr.mxu0 0.0
    %2509 = vmatpush1.msra.mxu0 0.0
    %2510 = vmatprep.subr.mxu0 0.0
    %2511 = vmatpush1.msra.mxu0 0.0
    %2512 = vmatprep.subr.mxu0 0.0
    %2513 = vmatpush1.msra.mxu0 0.0
    %2514 = vmatprep.subr.mxu0 0.0
    %2515 = vmatpush1.msra.mxu0 0.0
    %2516 = vmatprep.subr.mxu0 0.0
    %2517 = vmatpush1.msra.mxu0 0.0
    %2518 = vmatprep.subr.mxu0 0.0
    %2519 = vmatpush1.msra.mxu0 0.0
    %2520 = vmatprep.subr.mxu0 0.0
    %2521 = vmatpush1.msra.mxu0 0.0
    %2522 = vmatprep.subr.mxu0 0.0
    %2523 = vmatpush1.msra.mxu0 0.0
    %2524 = vmatprep.subr.mxu0 0.0
    %2525 = vmatpush1.msra.mxu0 0.0
    %2526 = vmatprep.subr.mxu0 0.0
    %2527 = vmatpush1.msra.mxu0 0.0
    %2528 = vmatprep.subr.mxu0 0.0
    %2529 = vmatpush1.msra.mxu0 %v2498
    %2530 = vmatprep.subr.mxu0 0.0
    %2531 = vmatpush1.msra.mxu0 %v2488
    %2532 = vmatprep.subr.mxu0 0.0
    %2533 = vmatpush2.msra.mxu0 0.0
    %2534 = vmatprep.subr.mxu0 0.0
    %2535 = vmatpush2.msra.mxu0 0.0
    %2536 = vmatprep.subr.mxu0 0.0
    %2537 = vmatpush2.msra.mxu0 0.0
    %2538 = vmatprep.subr.mxu0 0.0
    %2539 = vmatpush2.msra.mxu0 0.0
    %2540 = vmatprep.subr.mxu0 0.0
    %2541 = vmatpush2.msra.mxu0 0.0
    %2542 = vmatprep.subr.mxu0 0.0
    %2543 = vmatpush2.msra.mxu0 0.0
    %2544 = vmatprep.subr.mxu0 0.0
    %2545 = vmatpush2.msra.mxu0 0.0
    %2546 = vmatprep.subr.mxu0 0.0
    %2547 = vmatpush2.msra.mxu0 0.0
    %2548 = vmatprep.subr.mxu0 0.0
    %2549 = vmatpush2.msra.mxu0 0.0
    %2550 = vmatprep.subr.mxu0 0.0
    %2551 = vmatpush2.msra.mxu0 0.0
    %2552 = vmatprep.subr.mxu0 0.0
    %2553 = vmatpush2.msra.mxu0 0.0
    %2554 = vmatprep.subr.mxu0 0.0
    %2555 = vmatpush2.msra.mxu0 0.0
    %2556 = vmatprep.subr.mxu0 0.0
    %2557 = vmatpush2.msra.mxu0 0.0
    %2558 = vmatprep.subr.mxu0 0.0
    %2559 = vmatpush2.msra.mxu0 0.0
    %2560 = vmatprep.subr.mxu0 0.0
    %2561 = vmatpush2.msra.mxu0 0.0
    %2562 = vmatprep.subr.mxu0 0.0
    %2563 = vmatpush2.msra.mxu0 0.0
    %2564 = vmatprep.mubr.f32.mxu0 0.0
    %2565 = vmatmul.mubr.f32.gmra.mxu0 %v2493
    %v2566 = vpop.f32.mrf.mxu0
    %v2567 = vadd.f32 0.0, %v2566
    %v2568 = vpop.f32.mrf.mxu0
    %2569 = vmatprep.mubr.f32.mxu0 0.0
    %2570 = vmatmul.mubr.f32.gmra.mxu0 %v2496
    %v2571 = vpop.f32.mrf.mxu0
    %v2572 = vadd.f32 0.0, %v2571
    %v2573 = vpop.f32.mrf.mxu0
    %2574 = vdwg.mxu0
    %v2576 = vsel %vm507, %v2567, 0
    %v2579 = vsel %vm507, %v2572, 0
    %2581 = vmatprep.subr.mxu0 0.0
    %2582 = vmatpush1.msra.mxu0 0.0
    %2583 = vmatprep.subr.mxu0 0.0
    %2584 = vmatpush1.msra.mxu0 0.0
    %2585 = vmatprep.subr.mxu0 0.0
    %2586 = vmatpush1.msra.mxu0 0.0
    %2587 = vmatprep.subr.mxu0 0.0
    %2588 = vmatpush1.msra.mxu0 0.0
    %2589 = vmatprep.subr.mxu0 0.0
    %2590 = vmatpush1.msra.mxu0 0.0
    %2591 = vmatprep.subr.mxu0 0.0
    %2592 = vmatpush1.msra.mxu0 0.0
    %2593 = vmatprep.subr.mxu0 0.0
    %2594 = vmatpush1.msra.mxu0 0.0
    %2595 = vmatprep.subr.mxu0 0.0
    %2596 = vmatpush1.msra.mxu0 0.0
    %2597 = vmatprep.subr.mxu0 0.0
    %2598 = vmatpush1.msra.mxu0 0.0
    %2599 = vmatprep.subr.mxu0 0.0
    %2600 = vmatpush1.msra.mxu0 0.0
    %2601 = vmatprep.subr.mxu0 0.0
    %2602 = vmatpush1.msra.mxu0 0.0
    %2603 = vmatprep.subr.mxu0 0.0
    %2604 = vmatpush1.msra.mxu0 0.0
    %2605 = vmatprep.subr.mxu0 0.0
    %2606 = vmatpush1.msra.mxu0 0.0
    %2607 = vmatprep.subr.mxu0 0.0
    %2608 = vmatpush1.msra.mxu0 0.0
    %2609 = vmatprep.subr.mxu0 0.0
    %2610 = vmatpush1.msra.mxu0 0.0
    %2611 = vmatprep.subr.mxu0 0.0
    %2612 = vmatpush1.msra.mxu0 %v218
    %2613 = vmatprep.subr.mxu0 0.0
    %2614 = vmatpush2.msra.mxu0 0.0
    %2615 = vmatprep.subr.mxu0 0.0
    %2616 = vmatpush2.msra.mxu0 0.0
    %2617 = vmatprep.subr.mxu0 0.0
    %2618 = vmatpush2.msra.mxu0 0.0
    %2619 = vmatprep.subr.mxu0 0.0
    %2620 = vmatpush2.msra.mxu0 0.0
    %2621 = vmatprep.subr.mxu0 0.0
    %2622 = vmatpush2.msra.mxu0 0.0
    %2623 = vmatprep.subr.mxu0 0.0
    %2624 = vmatpush2.msra.mxu0 0.0
    %2625 = vmatprep.subr.mxu0 0.0
    %2626 = vmatpush2.msra.mxu0 0.0
    %2627 = vmatprep.subr.mxu0 0.0
    %2628 = vmatpush2.msra.mxu0 0.0
    %2629 = vmatprep.subr.mxu0 0.0
    %2630 = vmatpush2.msra.mxu0 0.0
    %2631 = vmatprep.subr.mxu0 0.0
    %2632 = vmatpush2.msra.mxu0 0.0
    %2633 = vmatprep.subr.mxu0 0.0
    %2634 = vmatpush2.msra.mxu0 0.0
    %2635 = vmatprep.subr.mxu0 0.0
    %2636 = vmatpush2.msra.mxu0 0.0
    %2637 = vmatprep.subr.mxu0 0.0
    %2638 = vmatpush2.msra.mxu0 0.0
    %2639 = vmatprep.subr.mxu0 0.0
    %2640 = vmatpush2.msra.mxu0 0.0
    %2641 = vmatprep.subr.mxu0 0.0
    %2642 = vmatpush2.msra.mxu0 0.0
    %2643 = vmatprep.subr.mxu0 0.0
    %2644 = vmatpush2.msra.mxu0 0.0
    %2645 = vmatprep.mubr.f32.mxu0 0.0
    %2646 = vmatmul.mubr.f32.gmra.mxu0 %v2576
    %v2647 = vpop.f32.mrf.mxu0
    %v2648 = vadd.f32 0.0, %v2647
    %v2649 = vpop.f32.mrf.mxu0
    %2650 = vmatprep.mubr.f32.mxu0 0.0
    %2651 = vmatmul.mubr.f32.gmra.mxu0 %v2579
    %v2652 = vpop.f32.mrf.mxu0
    %v2653 = vadd.f32 0.0, %v2652
    %v2654 = vpop.f32.mrf.mxu0
    %2655 = vdwg.mxu0
    %v2657 = vsel %vm507, %v2362, 0
    %v2660 = vsel %vm507, %v2367, 0
    %2662 = vmatprep.subr.mxu0 0.0
    %2663 = vmatpush1.msra.mxu0 0.0
    %2664 = vmatprep.subr.mxu0 0.0
    %2665 = vmatpush1.msra.mxu0 0.0
    %2666 = vmatprep.subr.mxu0 0.0
    %2667 = vmatpush1.msra.mxu0 0.0
    %2668 = vmatprep.subr.mxu0 0.0
    %2669 = vmatpush1.msra.mxu0 0.0
    %2670 = vmatprep.subr.mxu0 0.0
    %2671 = vmatpush1.msra.mxu0 0.0
    %2672 = vmatprep.subr.mxu0 0.0
    %2673 = vmatpush1.msra.mxu0 0.0
    %2674 = vmatprep.subr.mxu0 0.0
    %2675 = vmatpush1.msra.mxu0 0.0
    %2676 = vmatprep.subr.mxu0 0.0
    %2677 = vmatpush1.msra.mxu0 0.0
    %2678 = vmatprep.subr.mxu0 0.0
    %2679 = vmatpush1.msra.mxu0 0.0
    %2680 = vmatprep.subr.mxu0 0.0
    %2681 = vmatpush1.msra.mxu0 0.0
    %2682 = vmatprep.subr.mxu0 0.0
    %2683 = vmatpush1.msra.mxu0 0.0
    %2684 = vmatprep.subr.mxu0 0.0
    %2685 = vmatpush1.msra.mxu0 0.0
    %2686 = vmatprep.subr.mxu0 0.0
    %2687 = vmatpush1.msra.mxu0 0.0
    %2688 = vmatprep.subr.mxu0 0.0
    %2689 = vmatpush1.msra.mxu0 0.0
    %2690 = vmatprep.subr.mxu0 0.0
    %2691 = vmatpush1.msra.mxu0 0.0
    %2692 = vmatprep.subr.mxu0 0.0
    %2693 = vmatpush1.msra.mxu0 %v217
    %2694 = vmatprep.subr.mxu0 0.0
    %2695 = vmatpush2.msra.mxu0 0.0
    %2696 = vmatprep.subr.mxu0 0.0
    %2697 = vmatpush2.msra.mxu0 0.0
    %2698 = vmatprep.subr.mxu0 0.0
    %2699 = vmatpush2.msra.mxu0 0.0
    %2700 = vmatprep.subr.mxu0 0.0
    %2701 = vmatpush2.msra.mxu0 0.0
    %2702 = vmatprep.subr.mxu0 0.0
    %2703 = vmatpush2.msra.mxu0 0.0
    %2704 = vmatprep.subr.mxu0 0.0
    %2705 = vmatpush2.msra.mxu0 0.0
    %2706 = vmatprep.subr.mxu0 0.0
    %2707 = vmatpush2.msra.mxu0 0.0
    %2708 = vmatprep.subr.mxu0 0.0
    %2709 = vmatpush2.msra.mxu0 0.0
    %2710 = vmatprep.subr.mxu0 0.0
    %2711 = vmatpush2.msra.mxu0 0.0
    %2712 = vmatprep.subr.mxu0 0.0
    %2713 = vmatpush2.msra.mxu0 0.0
    %2714 = vmatprep.subr.mxu0 0.0
    %2715 = vmatpush2.msra.mxu0 0.0
    %2716 = vmatprep.subr.mxu0 0.0
    %2717 = vmatpush2.msra.mxu0 0.0
    %2718 = vmatprep.subr.mxu0 0.0
    %2719 = vmatpush2.msra.mxu0 0.0
    %2720 = vmatprep.subr.mxu0 0.0
    %2721 = vmatpush2.msra.mxu0 0.0
    %2722 = vmatprep.subr.mxu0 0.0
    %2723 = vmatpush2.msra.mxu0 0.0
    %2724 = vmatprep.subr.mxu0 0.0
    %2725 = vmatpush2.msra.mxu0 0.0
    %2726 = vmatprep.mubr.f32.mxu0 0.0
    %2727 = vmatmul.mubr.f32.gmra.mxu0 %v2657
    %v2728 = vpop.f32.mrf.mxu0
    %v2729 = vadd.f32 %v2648, %v2728
    %v2730 = vpop.f32.mrf.mxu0
    %2731 = vmatprep.mubr.f32.mxu0 0.0
    %2732 = vmatmul.mubr.f32.gmra.mxu0 %v2660
    %v2733 = vpop.f32.mrf.mxu0
    %v2734 = vadd.f32 %v2653, %v2733
    %v2735 = vpop.f32.mrf.mxu0
    %2736 = vdwg.mxu0
    %2737 = vrot.lane.b32.xlu0 %v2156, 112
    %v2738 = vpop.permute.xlu0 %2737
    %2739 = vrot.lane.b32.xlu0 %v2161, 112
    %v2740 = vpop.permute.xlu0 %2739
    %2741 = vrot.lane.b32.xlu0 %v2156, 80
    %v2742 = vpop.permute.xlu0 %2741
    %2743 = vrot.lane.b32.xlu0 %v2161, 80
    %v2744 = vpop.permute.xlu0 %2743
    %v2745 = vsel %vm507, %v2738, 0
    %v2747 = vsel %vm507, %v2740, 0
    %v2749 = vsel %vm507, %v2742, 0
    %v2751 = vsel %vm507, %v2744, 0
    %2753 = vmatprep.subr.mxu0 0.0
    %2754 = vmatpush1.xpose.msra.mxu0 0.0
    %2755 = vmatprep.subr.mxu0 0.0
    %2756 = vmatpush1.xpose.msra.mxu0 0.0
    %2757 = vmatprep.subr.mxu0 0.0
    %2758 = vmatpush1.xpose.msra.mxu0 0.0
    %2759 = vmatprep.subr.mxu0 0.0
    %2760 = vmatpush1.xpose.msra.mxu0 0.0
    %2761 = vmatprep.subr.mxu0 0.0
    %2762 = vmatpush1.xpose.msra.mxu0 0.0
    %2763 = vmatprep.subr.mxu0 0.0
    %2764 = vmatpush1.xpose.msra.mxu0 0.0
    %2765 = vmatprep.subr.mxu0 0.0
    %2766 = vmatpush1.xpose.msra.mxu0 0.0
    %2767 = vmatprep.subr.mxu0 0.0
    %2768 = vmatpush1.xpose.msra.mxu0 0.0
    %2769 = vmatprep.subr.mxu0 0.0
    %2770 = vmatpush1.xpose.msra.mxu0 0.0
    %2771 = vmatprep.subr.mxu0 0.0
    %2772 = vmatpush1.xpose.msra.mxu0 0.0
    %2773 = vmatprep.subr.mxu0 0.0
    %2774 = vmatpush1.xpose.msra.mxu0 0.0
    %2775 = vmatprep.subr.mxu0 0.0
    %2776 = vmatpush1.xpose.msra.mxu0 0.0
    %2777 = vmatprep.subr.mxu0 0.0
    %2778 = vmatpush1.xpose.msra.mxu0 0.0
    %2779 = vmatprep.subr.mxu0 0.0
    %2780 = vmatpush1.xpose.msra.mxu0 0.0
    %2781 = vmatprep.subr.mxu0 0.0
    %2782 = vmatpush1.xpose.msra.mxu0 %v2751
    %2783 = vmatprep.subr.mxu0 0.0
    %2784 = vmatpush1.xpose.msra.mxu0 %v2749
    %2785 = vmatprep.subr.mxu0 0.0
    %2786 = vmatpush2.xpose.msra.mxu0 0.0
    %2787 = vmatprep.subr.mxu0 0.0
    %2788 = vmatpush2.xpose.msra.mxu0 0.0
    %2789 = vmatprep.subr.mxu0 0.0
    %2790 = vmatpush2.xpose.msra.mxu0 0.0
    %2791 = vmatprep.subr.mxu0 0.0
    %2792 = vmatpush2.xpose.msra.mxu0 0.0
    %2793 = vmatprep.subr.mxu0 0.0
    %2794 = vmatpush2.xpose.msra.mxu0 0.0
    %2795 = vmatprep.subr.mxu0 0.0
    %2796 = vmatpush2.xpose.msra.mxu0 0.0
    %2797 = vmatprep.subr.mxu0 0.0
    %2798 = vmatpush2.xpose.msra.mxu0 0.0
    %2799 = vmatprep.subr.mxu0 0.0
    %2800 = vmatpush2.xpose.msra.mxu0 0.0
    %2801 = vmatprep.subr.mxu0 0.0
    %2802 = vmatpush2.xpose.msra.mxu0 0.0
    %2803 = vmatprep.subr.mxu0 0.0
    %2804 = vmatpush2.xpose.msra.mxu0 0.0
    %2805 = vmatprep.subr.mxu0 0.0
    %2806 = vmatpush2.xpose.msra.mxu0 0.0
    %2807 = vmatprep.subr.mxu0 0.0
    %2808 = vmatpush2.xpose.msra.mxu0 0.0
    %2809 = vmatprep.subr.mxu0 0.0
    %2810 = vmatpush2.xpose.msra.mxu0 0.0
    %2811 = vmatprep.subr.mxu0 0.0
    %2812 = vmatpush2.xpose.msra.mxu0 0.0
    %2813 = vmatprep.subr.mxu0 0.0
    %2814 = vmatpush2.xpose.msra.mxu0 0.0
    %2815 = vmatprep.subr.mxu0 0.0
    %2816 = vmatpush2.xpose.msra.mxu0 0.0
    %2817 = vmatprep.mubr.f32.mxu0 0.0
    %2818 = vmatmul.mubr.f32.gmra.mxu0 %v2745
    %v2819 = vpop.f32.mrf.mxu0
    %v2820 = vadd.f32 0.0, %v2819
    %v2821 = vpop.f32.mrf.mxu0
    %2822 = vmatprep.mubr.f32.mxu0 0.0
    %2823 = vmatmul.mubr.f32.gmra.mxu0 %v2747
    %v2824 = vpop.f32.mrf.mxu0
    %v2825 = vadd.f32 0.0, %v2824
    %v2826 = vpop.f32.mrf.mxu0
    %2827 = vdwg.mxu0
    %v2828 = vmul.f32 %v2820, 0.35355338
    %v2829 = vmul.f32 %v2825, 0.35355338
    %v2830 = vadd.f32 %v2828, %v2073
    %v2831 = vadd.f32 %v2829, %v2074
    %v2832 = vsel %vm2257, %v2830, -inf
    %2833 = vmax.xlane.f32.xlu0 %v2832
    %v2834 = vpop.xlane.xlu0 %2833
    %v2835 = vsel %vm2261, %v2831, -inf
    %2836 = vmax.xlane.f32.xlu0 %v2835
    %v2837 = vpop.xlane.xlu0 %2836
    %v2838 = vsub.f32 %v2830, %v2834
    %v2839 = vsub.f32 %v2831, %v2837
    %v2840 = vmul.f32 %v2838, 1.442695
    %v2841 = vpow.pop %v2840
    %v2842 = vmul.f32 %v2839, 1.442695
    %v2843 = vpow.pop %v2842
    %v2844 = vsel %vm2257, %v2841, 0.0
    %2845 = vadd.xlane.f32.xlu0 %v2844
    %v2846 = vpop.xlane.xlu0 %2845
    %v2847 = vsel %vm2261, %v2843, 0.0
    %2848 = vadd.xlane.f32.xlu0 %v2847
    %v2849 = vpop.xlane.xlu0 %2848
    %v2850 = vrcp.pop %v2846
    %v2851 = vmul.f32 %v2841, %v2850
    %v2852 = vrcp.pop %v2849
    %v2853 = vmul.f32 %v2843, %v2852
    %2854 = vrot.lane.b32.xlu0 %v2156, 48
    %v2855 = vpop.permute.xlu0 %2854
    %2856 = vrot.lane.b32.xlu0 %v2161, 48
    %v2857 = vpop.permute.xlu0 %2856
    %v2860 = vsel %vm2257, %v2851, 0
    %v2863 = vsel %vm2257, %v2853, 0
    %v2865 = vsel %vm2292, %v2857, 0
    %2867 = vmatprep.subr.mxu0 0.0
    %2868 = vmatpush1.msra.mxu0 0.0
    %2869 = vmatprep.subr.mxu0 0.0
    %2870 = vmatpush1.msra.mxu0 0.0
    %2871 = vmatprep.subr.mxu0 0.0
    %2872 = vmatpush1.msra.mxu0 0.0
    %2873 = vmatprep.subr.mxu0 0.0
    %2874 = vmatpush1.msra.mxu0 0.0
    %2875 = vmatprep.subr.mxu0 0.0
    %2876 = vmatpush1.msra.mxu0 0.0
    %2877 = vmatprep.subr.mxu0 0.0
    %2878 = vmatpush1.msra.mxu0 0.0
    %2879 = vmatprep.subr.mxu0 0.0
    %2880 = vmatpush1.msra.mxu0 0.0
    %2881 = vmatprep.subr.mxu0 0.0
    %2882 = vmatpush1.msra.mxu0 0.0
    %2883 = vmatprep.subr.mxu0 0.0
    %2884 = vmatpush1.msra.mxu0 0.0
    %2885 = vmatprep.subr.mxu0 0.0
    %2886 = vmatpush1.msra.mxu0 0.0
    %2887 = vmatprep.subr.mxu0 0.0
    %2888 = vmatpush1.msra.mxu0 0.0
    %2889 = vmatprep.subr.mxu0 0.0
    %2890 = vmatpush1.msra.mxu0 0.0
    %2891 = vmatprep.subr.mxu0 0.0
    %2892 = vmatpush1.msra.mxu0 0.0
    %2893 = vmatprep.subr.mxu0 0.0
    %2894 = vmatpush1.msra.mxu0 0.0
    %2895 = vmatprep.subr.mxu0 0.0
    %2896 = vmatpush1.msra.mxu0 %v2865
    %2897 = vmatprep.subr.mxu0 0.0
    %2898 = vmatpush1.msra.mxu0 %v2855
    %2899 = vmatprep.subr.mxu0 0.0
    %2900 = vmatpush2.msra.mxu0 0.0
    %2901 = vmatprep.subr.mxu0 0.0
    %2902 = vmatpush2.msra.mxu0 0.0
    %2903 = vmatprep.subr.mxu0 0.0
    %2904 = vmatpush2.msra.mxu0 0.0
    %2905 = vmatprep.subr.mxu0 0.0
    %2906 = vmatpush2.msra.mxu0 0.0
    %2907 = vmatprep.subr.mxu0 0.0
    %2908 = vmatpush2.msra.mxu0 0.0
    %2909 = vmatprep.subr.mxu0 0.0
    %2910 = vmatpush2.msra.mxu0 0.0
    %2911 = vmatprep.subr.mxu0 0.0
    %2912 = vmatpush2.msra.mxu0 0.0
    %2913 = vmatprep.subr.mxu0 0.0
    %2914 = vmatpush2.msra.mxu0 0.0
    %2915 = vmatprep.subr.mxu0 0.0
    %2916 = vmatpush2.msra.mxu0 0.0
    %2917 = vmatprep.subr.mxu0 0.0
    %2918 = vmatpush2.msra.mxu0 0.0
    %2919 = vmatprep.subr.mxu0 0.0
    %2920 = vmatpush2.msra.mxu0 0.0
    %2921 = vmatprep.subr.mxu0 0.0
    %2922 = vmatpush2.msra.mxu0 0.0
    %2923 = vmatprep.subr.mxu0 0.0
    %2924 = vmatpush2.msra.mxu0 0.0
    %2925 = vmatprep.subr.mxu0 0.0
    %2926 = vmatpush2.msra.mxu0 0.0
    %2927 = vmatprep.subr.mxu0 0.0
    %2928 = vmatpush2.msra.mxu0 0.0
    %2929 = vmatprep.subr.mxu0 0.0
    %2930 = vmatpush2.msra.mxu0 0.0
    %2931 = vmatprep.mubr.f32.mxu0 0.0
    %2932 = vmatmul.mubr.f32.gmra.mxu0 %v2860
    %v2933 = vpop.f32.mrf.mxu0
    %v2934 = vadd.f32 0.0, %v2933
    %v2935 = vpop.f32.mrf.mxu0
    %2936 = vmatprep.mubr.f32.mxu0 0.0
    %2937 = vmatmul.mubr.f32.gmra.mxu0 %v2863
    %v2938 = vpop.f32.mrf.mxu0
    %v2939 = vadd.f32 0.0, %v2938
    %v2940 = vpop.f32.mrf.mxu0
    %2941 = vdwg.mxu0
    %v2943 = vsel %vm507, %v2934, 0
    %v2946 = vsel %vm507, %v2939, 0
    %2948 = vmatprep.subr.mxu0 0.0
    %2949 = vmatpush1.msra.mxu0 0.0
    %2950 = vmatprep.subr.mxu0 0.0
    %2951 = vmatpush1.msra.mxu0 0.0
    %2952 = vmatprep.subr.mxu0 0.0
    %2953 = vmatpush1.msra.mxu0 0.0
    %2954 = vmatprep.subr.mxu0 0.0
    %2955 = vmatpush1.msra.mxu0 0.0
    %2956 = vmatprep.subr.mxu0 0.0
    %2957 = vmatpush1.msra.mxu0 0.0
    %2958 = vmatprep.subr.mxu0 0.0
    %2959 = vmatpush1.msra.mxu0 0.0
    %2960 = vmatprep.subr.mxu0 0.0
    %2961 = vmatpush1.msra.mxu0 0.0
    %2962 = vmatprep.subr.mxu0 0.0
    %2963 = vmatpush1.msra.mxu0 0.0
    %2964 = vmatprep.subr.mxu0 0.0
    %2965 = vmatpush1.msra.mxu0 0.0
    %2966 = vmatprep.subr.mxu0 0.0
    %2967 = vmatpush1.msra.mxu0 0.0
    %2968 = vmatprep.subr.mxu0 0.0
    %2969 = vmatpush1.msra.mxu0 0.0
    %2970 = vmatprep.subr.mxu0 0.0
    %2971 = vmatpush1.msra.mxu0 0.0
    %2972 = vmatprep.subr.mxu0 0.0
    %2973 = vmatpush1.msra.mxu0 0.0
    %2974 = vmatprep.subr.mxu0 0.0
    %2975 = vmatpush1.msra.mxu0 0.0
    %2976 = vmatprep.subr.mxu0 0.0
    %2977 = vmatpush1.msra.mxu0 0.0
    %2978 = vmatprep.subr.mxu0 0.0
    %2979 = vmatpush1.msra.mxu0 %v219
    %2980 = vmatprep.subr.mxu0 0.0
    %2981 = vmatpush2.msra.mxu0 0.0
    %2982 = vmatprep.subr.mxu0 0.0
    %2983 = vmatpush2.msra.mxu0 0.0
    %2984 = vmatprep.subr.mxu0 0.0
    %2985 = vmatpush2.msra.mxu0 0.0
    %2986 = vmatprep.subr.mxu0 0.0
    %2987 = vmatpush2.msra.mxu0 0.0
    %2988 = vmatprep.subr.mxu0 0.0
    %2989 = vmatpush2.msra.mxu0 0.0
    %2990 = vmatprep.subr.mxu0 0.0
    %2991 = vmatpush2.msra.mxu0 0.0
    %2992 = vmatprep.subr.mxu0 0.0
    %2993 = vmatpush2.msra.mxu0 0.0
    %2994 = vmatprep.subr.mxu0 0.0
    %2995 = vmatpush2.msra.mxu0 0.0
    %2996 = vmatprep.subr.mxu0 0.0
    %2997 = vmatpush2.msra.mxu0 0.0
    %2998 = vmatprep.subr.mxu0 0.0
    %2999 = vmatpush2.msra.mxu0 0.0
    %3000 = vmatprep.subr.mxu0 0.0
    %3001 = vmatpush2.msra.mxu0 0.0
    %3002 = vmatprep.subr.mxu0 0.0
    %3003 = vmatpush2.msra.mxu0 0.0
    %3004 = vmatprep.subr.mxu0 0.0
    %3005 = vmatpush2.msra.mxu0 0.0
    %3006 = vmatprep.subr.mxu0 0.0
    %3007 = vmatpush2.msra.mxu0 0.0
    %3008 = vmatprep.subr.mxu0 0.0
    %3009 = vmatpush2.msra.mxu0 0.0
    %3010 = vmatprep.subr.mxu0 0.0
    %3011 = vmatpush2.msra.mxu0 0.0
    %3012 = vmatprep.mubr.f32.mxu0 0.0
    %3013 = vmatmul.mubr.f32.gmra.mxu0 %v2943
    %v3014 = vpop.f32.mrf.mxu0
    %v3015 = vadd.f32 0.0, %v3014
    %v3016 = vpop.f32.mrf.mxu0
    %3017 = vmatprep.mubr.f32.mxu0 0.0
    %3018 = vmatmul.mubr.f32.gmra.mxu0 %v2946
    %v3019 = vpop.f32.mrf.mxu0
    %v3020 = vadd.f32 0.0, %v3019
    %v3021 = vpop.f32.mrf.mxu0
    %3022 = vdwg.mxu0
    %v3023 = vadd.f32 %v2729, %v3015
    %v3024 = vadd.f32 %v2734, %v3020
    %3025 = vrot.lane.b32.xlu0 %v2156, 104
    %v3026 = vpop.permute.xlu0 %3025
    %3027 = vrot.lane.b32.xlu0 %v2161, 104
    %v3028 = vpop.permute.xlu0 %3027
    %3029 = vrot.lane.b32.xlu0 %v2156, 72
    %v3030 = vpop.permute.xlu0 %3029
    %3031 = vrot.lane.b32.xlu0 %v2161, 72
    %v3032 = vpop.permute.xlu0 %3031
    %v3033 = vsel %vm507, %v3026, 0
    %v3035 = vsel %vm507, %v3028, 0
    %v3037 = vsel %vm507, %v3030, 0
    %v3039 = vsel %vm507, %v3032, 0
    %3041 = vmatprep.subr.mxu0 0.0
    %3042 = vmatpush1.xpose.msra.mxu0 0.0
    %3043 = vmatprep.subr.mxu0 0.0
    %3044 = vmatpush1.xpose.msra.mxu0 0.0
    %3045 = vmatprep.subr.mxu0 0.0
    %3046 = vmatpush1.xpose.msra.mxu0 0.0
    %3047 = vmatprep.subr.mxu0 0.0
    %3048 = vmatpush1.xpose.msra.mxu0 0.0
    %3049 = vmatprep.subr.mxu0 0.0
    %3050 = vmatpush1.xpose.msra.mxu0 0.0
    %3051 = vmatprep.subr.mxu0 0.0
    %3052 = vmatpush1.xpose.msra.mxu0 0.0
    %3053 = vmatprep.subr.mxu0 0.0
    %3054 = vmatpush1.xpose.msra.mxu0 0.0
    %3055 = vmatprep.subr.mxu0 0.0
    %3056 = vmatpush1.xpose.msra.mxu0 0.0
    %3057 = vmatprep.subr.mxu0 0.0
    %3058 = vmatpush1.xpose.msra.mxu0 0.0
    %3059 = vmatprep.subr.mxu0 0.0
    %3060 = vmatpush1.xpose.msra.mxu0 0.0
    %3061 = vmatprep.subr.mxu0 0.0
    %3062 = vmatpush1.xpose.msra.mxu0 0.0
    %3063 = vmatprep.subr.mxu0 0.0
    %3064 = vmatpush1.xpose.msra.mxu0 0.0
    %3065 = vmatprep.subr.mxu0 0.0
    %3066 = vmatpush1.xpose.msra.mxu0 0.0
    %3067 = vmatprep.subr.mxu0 0.0
    %3068 = vmatpush1.xpose.msra.mxu0 0.0
    %3069 = vmatprep.subr.mxu0 0.0
    %3070 = vmatpush1.xpose.msra.mxu0 %v3039
    %3071 = vmatprep.subr.mxu0 0.0
    %3072 = vmatpush1.xpose.msra.mxu0 %v3037
    %3073 = vmatprep.subr.mxu0 0.0
    %3074 = vmatpush2.xpose.msra.mxu0 0.0
    %3075 = vmatprep.subr.mxu0 0.0
    %3076 = vmatpush2.xpose.msra.mxu0 0.0
    %3077 = vmatprep.subr.mxu0 0.0
    %3078 = vmatpush2.xpose.msra.mxu0 0.0
    %3079 = vmatprep.subr.mxu0 0.0
    %3080 = vmatpush2.xpose.msra.mxu0 0.0
    %3081 = vmatprep.subr.mxu0 0.0
    %3082 = vmatpush2.xpose.msra.mxu0 0.0
    %3083 = vmatprep.subr.mxu0 0.0
    %3084 = vmatpush2.xpose.msra.mxu0 0.0
    %3085 = vmatprep.subr.mxu0 0.0
    %3086 = vmatpush2.xpose.msra.mxu0 0.0
    %3087 = vmatprep.subr.mxu0 0.0
    %3088 = vmatpush2.xpose.msra.mxu0 0.0
    %3089 = vmatprep.subr.mxu0 0.0
    %3090 = vmatpush2.xpose.msra.mxu0 0.0
    %3091 = vmatprep.subr.mxu0 0.0
    %3092 = vmatpush2.xpose.msra.mxu0 0.0
    %3093 = vmatprep.subr.mxu0 0.0
    %3094 = vmatpush2.xpose.msra.mxu0 0.0
    %3095 = vmatprep.subr.mxu0 0.0
    %3096 = vmatpush2.xpose.msra.mxu0 0.0
    %3097 = vmatprep.subr.mxu0 0.0
    %3098 = vmatpush2.xpose.msra.mxu0 0.0
    %3099 = vmatprep.subr.mxu0 0.0
    %3100 = vmatpush2.xpose.msra.mxu0 0.0
    %3101 = vmatprep.subr.mxu0 0.0
    %3102 = vmatpush2.xpose.msra.mxu0 0.0
    %3103 = vmatprep.subr.mxu0 0.0
    %3104 = vmatpush2.xpose.msra.mxu0 0.0
    %3105 = vmatprep.mubr.f32.mxu0 0.0
    %3106 = vmatmul.mubr.f32.gmra.mxu0 %v3033
    %v3107 = vpop.f32.mrf.mxu0
    %v3108 = vadd.f32 0.0, %v3107
    %v3109 = vpop.f32.mrf.mxu0
    %3110 = vmatprep.mubr.f32.mxu0 0.0
    %3111 = vmatmul.mubr.f32.gmra.mxu0 %v3035
    %v3112 = vpop.f32.mrf.mxu0
    %v3113 = vadd.f32 0.0, %v3112
    %v3114 = vpop.f32.mrf.mxu0
    %3115 = vdwg.mxu0
    %v3116 = vmul.f32 %v3108, 0.35355338
    %v3117 = vmul.f32 %v3113, 0.35355338
    %v3118 = vadd.f32 %v3116, %v2073
    %v3119 = vadd.f32 %v3117, %v2074
    %v3120 = vsel %vm2257, %v3118, -inf
    %3121 = vmax.xlane.f32.xlu0 %v3120
    %v3122 = vpop.xlane.xlu0 %3121
    %v3123 = vsel %vm2261, %v3119, -inf
    %3124 = vmax.xlane.f32.xlu0 %v3123
    %v3125 = vpop.xlane.xlu0 %3124
    %v3126 = vsub.f32 %v3118, %v3122
    %v3127 = vsub.f32 %v3119, %v3125
    %v3128 = vmul.f32 %v3126, 1.442695
    %v3129 = vpow.pop %v3128
    %v3130 = vmul.f32 %v3127, 1.442695
    %v3131 = vpow.pop %v3130
    %v3132 = vsel %vm2257, %v3129, 0.0
    %3133 = vadd.xlane.f32.xlu0 %v3132
    %v3134 = vpop.xlane.xlu0 %3133
    %v3135 = vsel %vm2261, %v3131, 0.0
    %3136 = vadd.xlane.f32.xlu0 %v3135
    %v3137 = vpop.xlane.xlu0 %3136
    %v3138 = vrcp.pop %v3134
    %v3139 = vmul.f32 %v3129, %v3138
    %v3140 = vrcp.pop %v3137
    %v3141 = vmul.f32 %v3131, %v3140
    %3142 = vrot.lane.b32.xlu0 %v2156, 40
    %v3143 = vpop.permute.xlu0 %3142
    %3144 = vrot.lane.b32.xlu0 %v2161, 40
    %v3145 = vpop.permute.xlu0 %3144
    %v3148 = vsel %vm2257, %v3139, 0
    %v3151 = vsel %vm2257, %v3141, 0
    %v3153 = vsel %vm2292, %v3145, 0
    %3155 = vmatprep.subr.mxu0 0.0
    %3156 = vmatpush1.msra.mxu0 0.0
    %3157 = vmatprep.subr.mxu0 0.0
    %3158 = vmatpush1.msra.mxu0 0.0
    %3159 = vmatprep.subr.mxu0 0.0
    %3160 = vmatpush1.msra.mxu0 0.0
    %3161 = vmatprep.subr.mxu0 0.0
    %3162 = vmatpush1.msra.mxu0 0.0
    %3163 = vmatprep.subr.mxu0 0.0
    %3164 = vmatpush1.msra.mxu0 0.0
    %3165 = vmatprep.subr.mxu0 0.0
    %3166 = vmatpush1.msra.mxu0 0.0
    %3167 = vmatprep.subr.mxu0 0.0
    %3168 = vmatpush1.msra.mxu0 0.0
    %3169 = vmatprep.subr.mxu0 0.0
    %3170 = vmatpush1.msra.mxu0 0.0
    %3171 = vmatprep.subr.mxu0 0.0
    %3172 = vmatpush1.msra.mxu0 0.0
    %3173 = vmatprep.subr.mxu0 0.0
    %3174 = vmatpush1.msra.mxu0 0.0
    %3175 = vmatprep.subr.mxu0 0.0
    %3176 = vmatpush1.msra.mxu0 0.0
    %3177 = vmatprep.subr.mxu0 0.0
    %3178 = vmatpush1.msra.mxu0 0.0
    %3179 = vmatprep.subr.mxu0 0.0
    %3180 = vmatpush1.msra.mxu0 0.0
    %3181 = vmatprep.subr.mxu0 0.0
    %3182 = vmatpush1.msra.mxu0 0.0
    %3183 = vmatprep.subr.mxu0 0.0
    %3184 = vmatpush1.msra.mxu0 %v3153
    %3185 = vmatprep.subr.mxu0 0.0
    %3186 = vmatpush1.msra.mxu0 %v3143
    %3187 = vmatprep.subr.mxu0 0.0
    %3188 = vmatpush2.msra.mxu0 0.0
    %3189 = vmatprep.subr.mxu0 0.0
    %3190 = vmatpush2.msra.mxu0 0.0
    %3191 = vmatprep.subr.mxu0 0.0
    %3192 = vmatpush2.msra.mxu0 0.0
    %3193 = vmatprep.subr.mxu0 0.0
    %3194 = vmatpush2.msra.mxu0 0.0
    %3195 = vmatprep.subr.mxu0 0.0
    %3196 = vmatpush2.msra.mxu0 0.0
    %3197 = vmatprep.subr.mxu0 0.0
    %3198 = vmatpush2.msra.mxu0 0.0
    %3199 = vmatprep.subr.mxu0 0.0
    %3200 = vmatpush2.msra.mxu0 0.0
    %3201 = vmatprep.subr.mxu0 0.0
    %3202 = vmatpush2.msra.mxu0 0.0
    %3203 = vmatprep.subr.mxu0 0.0
    %3204 = vmatpush2.msra.mxu0 0.0
    %3205 = vmatprep.subr.mxu0 0.0
    %3206 = vmatpush2.msra.mxu0 0.0
    %3207 = vmatprep.subr.mxu0 0.0
    %3208 = vmatpush2.msra.mxu0 0.0
    %3209 = vmatprep.subr.mxu0 0.0
    %3210 = vmatpush2.msra.mxu0 0.0
    %3211 = vmatprep.subr.mxu0 0.0
    %3212 = vmatpush2.msra.mxu0 0.0
    %3213 = vmatprep.subr.mxu0 0.0
    %3214 = vmatpush2.msra.mxu0 0.0
    %3215 = vmatprep.subr.mxu0 0.0
    %3216 = vmatpush2.msra.mxu0 0.0
    %3217 = vmatprep.subr.mxu0 0.0
    %3218 = vmatpush2.msra.mxu0 0.0
    %3219 = vmatprep.mubr.f32.mxu0 0.0
    %3220 = vmatmul.mubr.f32.gmra.mxu0 %v3148
    %v3221 = vpop.f32.mrf.mxu0
    %v3222 = vadd.f32 0.0, %v3221
    %v3223 = vpop.f32.mrf.mxu0
    %3224 = vmatprep.mubr.f32.mxu0 0.0
    %3225 = vmatmul.mubr.f32.gmra.mxu0 %v3151
    %v3226 = vpop.f32.mrf.mxu0
    %v3227 = vadd.f32 0.0, %v3226
    %v3228 = vpop.f32.mrf.mxu0
    %3229 = vdwg.mxu0
    %v3231 = vsel %vm507, %v3222, 0
    %v3234 = vsel %vm507, %v3227, 0
    %3236 = vmatprep.subr.mxu0 0.0
    %3237 = vmatpush1.msra.mxu0 0.0
    %3238 = vmatprep.subr.mxu0 0.0
    %3239 = vmatpush1.msra.mxu0 0.0
    %3240 = vmatprep.subr.mxu0 0.0
    %3241 = vmatpush1.msra.mxu0 0.0
    %3242 = vmatprep.subr.mxu0 0.0
    %3243 = vmatpush1.msra.mxu0 0.0
    %3244 = vmatprep.subr.mxu0 0.0
    %3245 = vmatpush1.msra.mxu0 0.0
    %3246 = vmatprep.subr.mxu0 0.0
    %3247 = vmatpush1.msra.mxu0 0.0
    %3248 = vmatprep.subr.mxu0 0.0
    %3249 = vmatpush1.msra.mxu0 0.0
    %3250 = vmatprep.subr.mxu0 0.0
    %3251 = vmatpush1.msra.mxu0 0.0
    %3252 = vmatprep.subr.mxu0 0.0
    %3253 = vmatpush1.msra.mxu0 0.0
    %3254 = vmatprep.subr.mxu0 0.0
    %3255 = vmatpush1.msra.mxu0 0.0
    %3256 = vmatprep.subr.mxu0 0.0
    %3257 = vmatpush1.msra.mxu0 0.0
    %3258 = vmatprep.subr.mxu0 0.0
    %3259 = vmatpush1.msra.mxu0 0.0
    %3260 = vmatprep.subr.mxu0 0.0
    %3261 = vmatpush1.msra.mxu0 0.0
    %3262 = vmatprep.subr.mxu0 0.0
    %3263 = vmatpush1.msra.mxu0 0.0
    %3264 = vmatprep.subr.mxu0 0.0
    %3265 = vmatpush1.msra.mxu0 0.0
    %3266 = vmatprep.subr.mxu0 0.0
    %3267 = vmatpush1.msra.mxu0 %v220
    %3268 = vmatprep.subr.mxu0 0.0
    %3269 = vmatpush2.msra.mxu0 0.0
    %3270 = vmatprep.subr.mxu0 0.0
    %3271 = vmatpush2.msra.mxu0 0.0
    %3272 = vmatprep.subr.mxu0 0.0
    %3273 = vmatpush2.msra.mxu0 0.0
    %3274 = vmatprep.subr.mxu0 0.0
    %3275 = vmatpush2.msra.mxu0 0.0
    %3276 = vmatprep.subr.mxu0 0.0
    %3277 = vmatpush2.msra.mxu0 0.0
    %3278 = vmatprep.subr.mxu0 0.0
    %3279 = vmatpush2.msra.mxu0 0.0
    %3280 = vmatprep.subr.mxu0 0.0
    %3281 = vmatpush2.msra.mxu0 0.0
    %3282 = vmatprep.subr.mxu0 0.0
    %3283 = vmatpush2.msra.mxu0 0.0
    %3284 = vmatprep.subr.mxu0 0.0
    %3285 = vmatpush2.msra.mxu0 0.0
    %3286 = vmatprep.subr.mxu0 0.0
    %3287 = vmatpush2.msra.mxu0 0.0
    %3288 = vmatprep.subr.mxu0 0.0
    %3289 = vmatpush2.msra.mxu0 0.0
    %3290 = vmatprep.subr.mxu0 0.0
    %3291 = vmatpush2.msra.mxu0 0.0
    %3292 = vmatprep.subr.mxu0 0.0
    %3293 = vmatpush2.msra.mxu0 0.0
    %3294 = vmatprep.subr.mxu0 0.0
    %3295 = vmatpush2.msra.mxu0 0.0
    %3296 = vmatprep.subr.mxu0 0.0
    %3297 = vmatpush2.msra.mxu0 0.0
    %3298 = vmatprep.subr.mxu0 0.0
    %3299 = vmatpush2.msra.mxu0 0.0
    %3300 = vmatprep.mubr.f32.mxu0 0.0
    %3301 = vmatmul.mubr.f32.gmra.mxu0 %v3231
    %v3302 = vpop.f32.mrf.mxu0
    %v3303 = vadd.f32 0.0, %v3302
    %v3304 = vpop.f32.mrf.mxu0
    %3305 = vmatprep.mubr.f32.mxu0 0.0
    %3306 = vmatmul.mubr.f32.gmra.mxu0 %v3234
    %v3307 = vpop.f32.mrf.mxu0
    %v3308 = vadd.f32 0.0, %v3307
    %v3309 = vpop.f32.mrf.mxu0
    %3310 = vdwg.mxu0
    %v3311 = vadd.f32 %v3023, %v3303
    %v3312 = vadd.f32 %v3024, %v3308
    %v3314 = vlaneseq
    %v3315 = vshrl.u32 %v3314, 7
    %v3316 = vsub.s32 0, %v3315
    %v3317 = vrot.slane %v215, %v3316
    %v3319 = vadd.f32 %v3311, %v3317
    %v3320 = vadd.f32 %v3312, %v3317
    %v3321 = vadd.f32 %v2071, %v3319
    %v3322 = vadd.f32 %v2072, %v3320
    %v3323 = vsel %vm368, %v3321, 0.0
    %3324 = vadd.xlane.f32.xlu0 %v3323
    %v3325 = vpop.xlane.xlu0 %3324
    %v3326 = vsel %vm2033, %v3322, 0.0
    %3327 = vadd.xlane.f32.xlu0 %v3326
    %v3328 = vpop.xlane.xlu0 %3327
    %v3329 = vmul.f32 %v3325, %v375
    %v3330 = vmul.f32 %v3328, %v375
    %v3331 = vsub.f32 %v3321, %v3329
    %v3332 = vsub.f32 %v3322, %v3330
    %v3333 = vmul.f32 %v3331, %v3331
    %v3334 = vmul.f32 %v3332, %v3332
    %v3335 = vsel %vm368, %v3333, 0.0
    %3336 = vadd.xlane.f32.xlu0 %v3335
    %v3337 = vpop.xlane.xlu0 %3336
    %v3338 = vsel %vm2033, %v3334, 0.0
    %3339 = vadd.xlane.f32.xlu0 %v3338
    %v3340 = vpop.xlane.xlu0 %3339
    %v3341 = vmul.f32 %v3337, %v375
    %v3342 = vmul.f32 %v3340, %v375
    %v3343 = vadd.f32 %v3341, 1e-05
    %v3344 = vadd.f32 %v3342, 1e-05
    %v3345 = vrsqrt.pop %v3343
    %v3346 = vrsqrt.pop %v3344
    %v3347 = vmul.f32 %v3331, %v3345
    %v3348 = vmul.f32 %v3332, %v3346
    %v3350 = vlaneseq
    %v3351 = vshrl.u32 %v3350, 7
    %v3352 = vsub.s32 0, %v3351
    %v3353 = vrot.slane %v210, %v3352
    %v3355 = vmul.f32 %v3347, %v3353
    %v3356 = vmul.f32 %v3348, %v3353
    %v3358 = vlaneseq
    %v3359 = vshrl.u32 %v3358, 7
    %v3360 = vsub.s32 0, %v3359
    %v3361 = vrot.slane %v209, %v3360
    %v3363 = vadd.f32 %v3355, %v3361
    %v3364 = vadd.f32 %v3356, %v3361
    %v3366 = vlaneseq
    %v3367 = vshrl.u32 %v3366, 7
    %v3368 = vsub.s32 0, %v3367
    %v3369 = vrot.slane %v186, %v3368
    %v3372 = vsel %vm368, %v3363, 0
    %v3375 = vsel %vm368, %v3364, 0
    %3377 = vmatprep.subr.mxu0 0.0
    %3378 = vmatpush1.msra.mxu0 0.0
    %3379 = vmatprep.subr.mxu0 0.0
    %3380 = vmatpush1.msra.mxu0 0.0
    %3381 = vmatprep.subr.mxu0 0.0
    %3382 = vmatpush1.msra.mxu0 0.0
    %3383 = vmatprep.subr.mxu0 0.0
    %3384 = vmatpush1.msra.mxu0 0.0
    %3385 = vmatprep.subr.mxu0 0.0
    %3386 = vmatpush1.msra.mxu0 0.0
    %3387 = vmatprep.subr.mxu0 0.0
    %3388 = vmatpush1.msra.mxu0 0.0
    %3389 = vmatprep.subr.mxu0 0.0
    %3390 = vmatpush1.msra.mxu0 0.0
    %3391 = vmatprep.subr.mxu0 0.0
    %3392 = vmatpush1.msra.mxu0 0.0
    %3393 = vmatprep.subr.mxu0 0.0
    %3394 = vmatpush1.msra.mxu0 0.0
    %3395 = vmatprep.subr.mxu0 0.0
    %3396 = vmatpush1.msra.mxu0 0.0
    %3397 = vmatprep.subr.mxu0 0.0
    %3398 = vmatpush1.msra.mxu0 0.0
    %3399 = vmatprep.subr.mxu0 0.0
    %3400 = vmatpush1.msra.mxu0 0.0
    %3401 = vmatprep.subr.mxu0 0.0
    %3402 = vmatpush1.msra.mxu0 %v194
    %3403 = vmatprep.subr.mxu0 0.0
    %3404 = vmatpush1.msra.mxu0 %v193
    %3405 = vmatprep.subr.mxu0 0.0
    %3406 = vmatpush1.msra.mxu0 %v192
    %3407 = vmatprep.subr.mxu0 0.0
    %3408 = vmatpush1.msra.mxu0 %v191
    %3409 = vmatprep.subr.mxu0 0.0
    %3410 = vmatpush2.msra.mxu0 0.0
    %3411 = vmatprep.subr.mxu0 0.0
    %3412 = vmatpush2.msra.mxu0 0.0
    %3413 = vmatprep.subr.mxu0 0.0
    %3414 = vmatpush2.msra.mxu0 0.0
    %3415 = vmatprep.subr.mxu0 0.0
    %3416 = vmatpush2.msra.mxu0 0.0
    %3417 = vmatprep.subr.mxu0 0.0
    %3418 = vmatpush2.msra.mxu0 0.0
    %3419 = vmatprep.subr.mxu0 0.0
    %3420 = vmatpush2.msra.mxu0 0.0
    %3421 = vmatprep.subr.mxu0 0.0
    %3422 = vmatpush2.msra.mxu0 0.0
    %3423 = vmatprep.subr.mxu0 0.0
    %3424 = vmatpush2.msra.mxu0 0.0
    %3425 = vmatprep.subr.mxu0 0.0
    %3426 = vmatpush2.msra.mxu0 0.0
    %3427 = vmatprep.subr.mxu0 0.0
    %3428 = vmatpush2.msra.mxu0 0.0
    %3429 = vmatprep.subr.mxu0 0.0
    %3430 = vmatpush2.msra.mxu0 0.0
    %3431 = vmatprep.subr.mxu0 0.0
    %3432 = vmatpush2.msra.mxu0 0.0
    %3433 = vmatprep.subr.mxu0 0.0
    %3434 = vmatpush2.msra.mxu0 0.0
    %3435 = vmatprep.subr.mxu0 0.0
    %3436 = vmatpush2.msra.mxu0 0.0
    %3437 = vmatprep.subr.mxu0 0.0
    %3438 = vmatpush2.msra.mxu0 0.0
    %3439 = vmatprep.subr.mxu0 0.0
    %3440 = vmatpush2.msra.mxu0 0.0
    %3441 = vmatprep.mubr.f32.mxu0 0.0
    %3442 = vmatmul.mubr.f32.gmra.mxu0 %v3372
    %v3443 = vpop.f32.mrf.mxu0
    %v3444 = vadd.f32 %v3369, %v3443
    %v3445 = vpop.f32.mrf.mxu0
    %3446 = vmatprep.mubr.f32.mxu0 0.0
    %3447 = vmatmul.mubr.f32.gmra.mxu0 %v3375
    %v3448 = vpop.f32.mrf.mxu0
    %v3449 = vadd.f32 %v3369, %v3448
    %v3450 = vpop.f32.mrf.mxu0
    %3451 = vdwg.mxu0
    %3456 = vrot.lane.b32.xlu0 %v191, 96
    %v3457 = vpop.permute.xlu0 %3456
    %3458 = vrot.lane.b32.xlu0 %v192, 96
    %v3459 = vpop.permute.xlu0 %3458
    %3460 = vrot.lane.b32.xlu0 %v193, 96
    %v3461 = vpop.permute.xlu0 %3460
    %3462 = vrot.lane.b32.xlu0 %v194, 96
    %v3463 = vpop.permute.xlu0 %3462
    %3468 = vrot.lane.b32.xlu0 %v3369, 96
    %v3469 = vpop.permute.xlu0 %3468
    %v3472 = vsel %vm368, %v1927, 0
    %v3475 = vsel %vm368, %v1928, 0
    %3477 = vmatprep.subr.mxu0 0.0
    %3478 = vmatpush1.msra.mxu0 0.0
    %3479 = vmatprep.subr.mxu0 0.0
    %3480 = vmatpush1.msra.mxu0 0.0
    %3481 = vmatprep.subr.mxu0 0.0
    %3482 = vmatpush1.msra.mxu0 0.0
    %3483 = vmatprep.subr.mxu0 0.0
    %3484 = vmatpush1.msra.mxu0 0.0
    %3485 = vmatprep.subr.mxu0 0.0
    %3486 = vmatpush1.msra.mxu0 0.0
    %3487 = vmatprep.subr.mxu0 0.0
    %3488 = vmatpush1.msra.mxu0 0.0
    %3489 = vmatprep.subr.mxu0 0.0
    %3490 = vmatpush1.msra.mxu0 0.0
    %3491 = vmatprep.subr.mxu0 0.0
    %3492 = vmatpush1.msra.mxu0 0.0
    %3493 = vmatprep.subr.mxu0 0.0
    %3494 = vmatpush1.msra.mxu0 0.0
    %3495 = vmatprep.subr.mxu0 0.0
    %3496 = vmatpush1.msra.mxu0 0.0
    %3497 = vmatprep.subr.mxu0 0.0
    %3498 = vmatpush1.msra.mxu0 0.0
    %3499 = vmatprep.subr.mxu0 0.0
    %3500 = vmatpush1.msra.mxu0 0.0
    %3501 = vmatprep.subr.mxu0 0.0
    %3502 = vmatpush1.msra.mxu0 %v3463
    %3503 = vmatprep.subr.mxu0 0.0
    %3504 = vmatpush1.msra.mxu0 %v3461
    %3505 = vmatprep.subr.mxu0 0.0
    %3506 = vmatpush1.msra.mxu0 %v3459
    %3507 = vmatprep.subr.mxu0 0.0
    %3508 = vmatpush1.msra.mxu0 %v3457
    %3509 = vmatprep.subr.mxu0 0.0
    %3510 = vmatpush2.msra.mxu0 0.0
    %3511 = vmatprep.subr.mxu0 0.0
    %3512 = vmatpush2.msra.mxu0 0.0
    %3513 = vmatprep.subr.mxu0 0.0
    %3514 = vmatpush2.msra.mxu0 0.0
    %3515 = vmatprep.subr.mxu0 0.0
    %3516 = vmatpush2.msra.mxu0 0.0
    %3517 = vmatprep.subr.mxu0 0.0
    %3518 = vmatpush2.msra.mxu0 0.0
    %3519 = vmatprep.subr.mxu0 0.0
    %3520 = vmatpush2.msra.mxu0 0.0
    %3521 = vmatprep.subr.mxu0 0.0
    %3522 = vmatpush2.msra.mxu0 0.0
    %3523 = vmatprep.subr.mxu0 0.0
    %3524 = vmatpush2.msra.mxu0 0.0
    %3525 = vmatprep.subr.mxu0 0.0
    %3526 = vmatpush2.msra.mxu0 0.0
    %3527 = vmatprep.subr.mxu0 0.0
    %3528 = vmatpush2.msra.mxu0 0.0
    %3529 = vmatprep.subr.mxu0 0.0
    %3530 = vmatpush2.msra.mxu0 0.0
    %3531 = vmatprep.subr.mxu0 0.0
    %3532 = vmatpush2.msra.mxu0 0.0
    %3533 = vmatprep.subr.mxu0 0.0
    %3534 = vmatpush2.msra.mxu0 0.0
    %3535 = vmatprep.subr.mxu0 0.0
    %3536 = vmatpush2.msra.mxu0 0.0
    %3537 = vmatprep.subr.mxu0 0.0
    %3538 = vmatpush2.msra.mxu0 0.0
    %3539 = vmatprep.subr.mxu0 0.0
    %3540 = vmatpush2.msra.mxu0 0.0
    %3541 = vmatprep.mubr.f32.mxu0 0.0
    %3542 = vmatmul.mubr.f32.gmra.mxu0 %v3472
    %v3543 = vpop.f32.mrf.mxu0
    %v3544 = vadd.f32 %v3469, %v3543
    %v3545 = vpop.f32.mrf.mxu0
    %3546 = vmatprep.mubr.f32.mxu0 0.0
    %3547 = vmatmul.mubr.f32.gmra.mxu0 %v3475
    %v3548 = vpop.f32.mrf.mxu0
    %v3549 = vadd.f32 %v3469, %v3548
    %v3550 = vpop.f32.mrf.mxu0
    %3551 = vdwg.mxu0
    %v3553 = vsel %vm507, %v3444, 0
    %v3556 = vsel %vm507, %v3449, 0
    %v3559 = vsel %vm507, %v3544, 0
    %v3562 = vsel %vm507, %v3549, 0
    %3564 = vmatprep.subr.mxu0 0.0
    %3565 = vmatpush1.xpose.msra.mxu0 0.0
    %3566 = vmatprep.subr.mxu0 0.0
    %3567 = vmatpush1.xpose.msra.mxu0 0.0
    %3568 = vmatprep.subr.mxu0 0.0
    %3569 = vmatpush1.xpose.msra.mxu0 0.0
    %3570 = vmatprep.subr.mxu0 0.0
    %3571 = vmatpush1.xpose.msra.mxu0 0.0
    %3572 = vmatprep.subr.mxu0 0.0
    %3573 = vmatpush1.xpose.msra.mxu0 0.0
    %3574 = vmatprep.subr.mxu0 0.0
    %3575 = vmatpush1.xpose.msra.mxu0 0.0
    %3576 = vmatprep.subr.mxu0 0.0
    %3577 = vmatpush1.xpose.msra.mxu0 0.0
    %3578 = vmatprep.subr.mxu0 0.0
    %3579 = vmatpush1.xpose.msra.mxu0 0.0
    %3580 = vmatprep.subr.mxu0 0.0
    %3581 = vmatpush1.xpose.msra.mxu0 0.0
    %3582 = vmatprep.subr.mxu0 0.0
    %3583 = vmatpush1.xpose.msra.mxu0 0.0
    %3584 = vmatprep.subr.mxu0 0.0
    %3585 = vmatpush1.xpose.msra.mxu0 0.0
    %3586 = vmatprep.subr.mxu0 0.0
    %3587 = vmatpush1.xpose.msra.mxu0 0.0
    %3588 = vmatprep.subr.mxu0 0.0
    %3589 = vmatpush1.xpose.msra.mxu0 0.0
    %3590 = vmatprep.subr.mxu0 0.0
    %3591 = vmatpush1.xpose.msra.mxu0 0.0
    %3592 = vmatprep.subr.mxu0 0.0
    %3593 = vmatpush1.xpose.msra.mxu0 %v3562
    %3594 = vmatprep.subr.mxu0 0.0
    %3595 = vmatpush1.xpose.msra.mxu0 %v3559
    %3596 = vmatprep.subr.mxu0 0.0
    %3597 = vmatpush2.xpose.msra.mxu0 0.0
    %3598 = vmatprep.subr.mxu0 0.0
    %3599 = vmatpush2.xpose.msra.mxu0 0.0
    %3600 = vmatprep.subr.mxu0 0.0
    %3601 = vmatpush2.xpose.msra.mxu0 0.0
    %3602 = vmatprep.subr.mxu0 0.0
    %3603 = vmatpush2.xpose.msra.mxu0 0.0
    %3604 = vmatprep.subr.mxu0 0.0
    %3605 = vmatpush2.xpose.msra.mxu0 0.0
    %3606 = vmatprep.subr.mxu0 0.0
    %3607 = vmatpush2.xpose.msra.mxu0 0.0
    %3608 = vmatprep.subr.mxu0 0.0
    %3609 = vmatpush2.xpose.msra.mxu0 0.0
    %3610 = vmatprep.subr.mxu0 0.0
    %3611 = vmatpush2.xpose.msra.mxu0 0.0
    %3612 = vmatprep.subr.mxu0 0.0
    %3613 = vmatpush2.xpose.msra.mxu0 0.0
    %3614 = vmatprep.subr.mxu0 0.0
    %3615 = vmatpush2.xpose.msra.mxu0 0.0
    %3616 = vmatprep.subr.mxu0 0.0
    %3617 = vmatpush2.xpose.msra.mxu0 0.0
    %3618 = vmatprep.subr.mxu0 0.0
    %3619 = vmatpush2.xpose.msra.mxu0 0.0
    %3620 = vmatprep.subr.mxu0 0.0
    %3621 = vmatpush2.xpose.msra.mxu0 0.0
    %3622 = vmatprep.subr.mxu0 0.0
    %3623 = vmatpush2.xpose.msra.mxu0 0.0
    %3624 = vmatprep.subr.mxu0 0.0
    %3625 = vmatpush2.xpose.msra.mxu0 0.0
    %3626 = vmatprep.subr.mxu0 0.0
    %3627 = vmatpush2.xpose.msra.mxu0 0.0
    %3628 = vmatprep.mubr.f32.mxu0 0.0
    %3629 = vmatmul.mubr.f32.gmra.mxu0 %v3553
    %v3630 = vpop.f32.mrf.mxu0
    %v3631 = vadd.f32 0.0, %v3630
    %v3632 = vpop.f32.mrf.mxu0
    %3633 = vmatprep.mubr.f32.mxu0 0.0
    %3634 = vmatmul.mubr.f32.gmra.mxu0 %v3556
    %v3635 = vpop.f32.mrf.mxu0
    %v3636 = vadd.f32 0.0, %v3635
    %v3637 = vpop.f32.mrf.mxu0
    %3638 = vdwg.mxu0
    %v3639 = vmul.f32 %v3631, 0.35355338
    %v3640 = vmul.f32 %v3636, 0.35355338
    %v3641 = vadd.f32 %v3639, %v2075
    %v3642 = vadd.f32 %v3640, %v2076
    %v3643 = vsel %vm595, %v3641, -inf
    %3644 = vmax.xlane.f32.xlu0 %v3643
    %v3645 = vpop.xlane.xlu0 %3644
    %vm3646 = vcmask 128000
    %v3647 = vsel %vm3646, %v3642, -inf
    %3648 = vmax.xlane.f32.xlu0 %v3647
    %v3649 = vpop.xlane.xlu0 %3648
    %v3650 = vsub.f32 %v3641, %v3645
    %v3651 = vsub.f32 %v3642, %v3649
    %v3652 = vmul.f32 %v3650, 1.442695
    %v3653 = vpow.pop %v3652
    %v3654 = vmul.f32 %v3651, 1.442695
    %v3655 = vpow.pop %v3654
    %v3656 = vsel %vm595, %v3653, 0.0
    %3657 = vadd.xlane.f32.xlu0 %v3656
    %v3658 = vpop.xlane.xlu0 %3657
    %v3659 = vsel %vm3646, %v3655, 0.0
    %3660 = vadd.xlane.f32.xlu0 %v3659
    %v3661 = vpop.xlane.xlu0 %3660
    %v3662 = vrcp.pop %v3658
    %v3663 = vmul.f32 %v3653, %v3662
    %v3664 = vrcp.pop %v3661
    %v3665 = vmul.f32 %v3655, %v3664
    %3666 = vrot.lane.b32.xlu0 %v3544, 96
    %v3667 = vpop.permute.xlu0 %3666
    %3668 = vrot.lane.b32.xlu0 %v3549, 96
    %v3669 = vpop.permute.xlu0 %3668
    %v3673 = vsel %vm595, %v3663, 0
    %v3676 = vsel %vm595, %v3665, 0
    %3678 = vmatprep.subr.mxu0 0.0
    %3679 = vmatpush1.msra.mxu0 0.0
    %3680 = vmatprep.subr.mxu0 0.0
    %3681 = vmatpush1.msra.mxu0 0.0
    %3682 = vmatprep.subr.mxu0 0.0
    %3683 = vmatpush1.msra.mxu0 0.0
    %3684 = vmatprep.subr.mxu0 0.0
    %3685 = vmatpush1.msra.mxu0 0.0
    %3686 = vmatprep.subr.mxu0 0.0
    %3687 = vmatpush1.msra.mxu0 0.0
    %3688 = vmatprep.subr.mxu0 0.0
    %3689 = vmatpush1.msra.mxu0 0.0
    %3690 = vmatprep.subr.mxu0 0.0
    %3691 = vmatpush1.msra.mxu0 0.0
    %3692 = vmatprep.subr.mxu0 0.0
    %3693 = vmatpush1.msra.mxu0 0.0
    %3694 = vmatprep.subr.mxu0 0.0
    %3695 = vmatpush1.msra.mxu0 0.0
    %3696 = vmatprep.subr.mxu0 0.0
    %3697 = vmatpush1.msra.mxu0 0.0
    %3698 = vmatprep.subr.mxu0 0.0
    %3699 = vmatpush1.msra.mxu0 0.0
    %3700 = vmatprep.subr.mxu0 0.0
    %3701 = vmatpush1.msra.mxu0 0.0
    %3702 = vmatprep.subr.mxu0 0.0
    %3703 = vmatpush1.msra.mxu0 0.0
    %3704 = vmatprep.subr.mxu0 0.0
    %3705 = vmatpush1.msra.mxu0 0.0
    %3706 = vmatprep.subr.mxu0 0.0
    %3707 = vmatpush1.msra.mxu0 %v3669
    %3708 = vmatprep.subr.mxu0 0.0
    %3709 = vmatpush1.msra.mxu0 %v3667
    %3710 = vmatprep.subr.mxu0 0.0
    %3711 = vmatpush2.msra.mxu0 0.0
    %3712 = vmatprep.subr.mxu0 0.0
    %3713 = vmatpush2.msra.mxu0 0.0
    %3714 = vmatprep.subr.mxu0 0.0
    %3715 = vmatpush2.msra.mxu0 0.0
    %3716 = vmatprep.subr.mxu0 0.0
    %3717 = vmatpush2.msra.mxu0 0.0
    %3718 = vmatprep.subr.mxu0 0.0
    %3719 = vmatpush2.msra.mxu0 0.0
    %3720 = vmatprep.subr.mxu0 0.0
    %3721 = vmatpush2.msra.mxu0 0.0
    %3722 = vmatprep.subr.mxu0 0.0
    %3723 = vmatpush2.msra.mxu0 0.0
    %3724 = vmatprep.subr.mxu0 0.0
    %3725 = vmatpush2.msra.mxu0 0.0
    %3726 = vmatprep.subr.mxu0 0.0
    %3727 = vmatpush2.msra.mxu0 0.0
    %3728 = vmatprep.subr.mxu0 0.0
    %3729 = vmatpush2.msra.mxu0 0.0
    %3730 = vmatprep.subr.mxu0 0.0
    %3731 = vmatpush2.msra.mxu0 0.0
    %3732 = vmatprep.subr.mxu0 0.0
    %3733 = vmatpush2.msra.mxu0 0.0
    %3734 = vmatprep.subr.mxu0 0.0
    %3735 = vmatpush2.msra.mxu0 0.0
    %3736 = vmatprep.subr.mxu0 0.0
    %3737 = vmatpush2.msra.mxu0 0.0
    %3738 = vmatprep.subr.mxu0 0.0
    %3739 = vmatpush2.msra.mxu0 0.0
    %3740 = vmatprep.subr.mxu0 0.0
    %3741 = vmatpush2.msra.mxu0 0.0
    %3742 = vmatprep.mubr.f32.mxu0 0.0
    %3743 = vmatmul.mubr.f32.gmra.mxu0 %v3673
    %v3744 = vpop.f32.mrf.mxu0
    %v3745 = vadd.f32 0.0, %v3744
    %v3746 = vpop.f32.mrf.mxu0
    %3747 = vmatprep.mubr.f32.mxu0 0.0
    %3748 = vmatmul.mubr.f32.gmra.mxu0 %v3676
    %v3749 = vpop.f32.mrf.mxu0
    %v3750 = vadd.f32 0.0, %v3749
    %v3751 = vpop.f32.mrf.mxu0
    %3752 = vdwg.mxu0
    %3753 = vrot.lane.b32.xlu0 %v3444, 120
    %v3754 = vpop.permute.xlu0 %3753
    %3755 = vrot.lane.b32.xlu0 %v3449, 120
    %v3756 = vpop.permute.xlu0 %3755
    %3757 = vrot.lane.b32.xlu0 %v3544, 120
    %v3758 = vpop.permute.xlu0 %3757
    %3759 = vrot.lane.b32.xlu0 %v3549, 120
    %v3760 = vpop.permute.xlu0 %3759
    %v3761 = vsel %vm507, %v3754, 0
    %v3763 = vsel %vm507, %v3756, 0
    %v3765 = vsel %vm507, %v3758, 0
    %v3767 = vsel %vm507, %v3760, 0
    %3769 = vmatprep.subr.mxu0 0.0
    %3770 = vmatpush1.xpose.msra.mxu0 0.0
    %3771 = vmatprep.subr.mxu0 0.0
    %3772 = vmatpush1.xpose.msra.mxu0 0.0
    %3773 = vmatprep.subr.mxu0 0.0
    %3774 = vmatpush1.xpose.msra.mxu0 0.0
    %3775 = vmatprep.subr.mxu0 0.0
    %3776 = vmatpush1.xpose.msra.mxu0 0.0
    %3777 = vmatprep.subr.mxu0 0.0
    %3778 = vmatpush1.xpose.msra.mxu0 0.0
    %3779 = vmatprep.subr.mxu0 0.0
    %3780 = vmatpush1.xpose.msra.mxu0 0.0
    %3781 = vmatprep.subr.mxu0 0.0
    %3782 = vmatpush1.xpose.msra.mxu0 0.0
    %3783 = vmatprep.subr.mxu0 0.0
    %3784 = vmatpush1.xpose.msra.mxu0 0.0
    %3785 = vmatprep.subr.mxu0 0.0
    %3786 = vmatpush1.xpose.msra.mxu0 0.0
    %3787 = vmatprep.subr.mxu0 0.0
    %3788 = vmatpush1.xpose.msra.mxu0 0.0
    %3789 = vmatprep.subr.mxu0 0.0
    %3790 = vmatpush1.xpose.msra.mxu0 0.0
    %3791 = vmatprep.subr.mxu0 0.0
    %3792 = vmatpush1.xpose.msra.mxu0 0.0
    %3793 = vmatprep.subr.mxu0 0.0
    %3794 = vmatpush1.xpose.msra.mxu0 0.0
    %3795 = vmatprep.subr.mxu0 0.0
    %3796 = vmatpush1.xpose.msra.mxu0 0.0
    %3797 = vmatprep.subr.mxu0 0.0
    %3798 = vmatpush1.xpose.msra.mxu0 %v3767
    %3799 = vmatprep.subr.mxu0 0.0
    %3800 = vmatpush1.xpose.msra.mxu0 %v3765
    %3801 = vmatprep.subr.mxu0 0.0
    %3802 = vmatpush2.xpose.msra.mxu0 0.0
    %3803 = vmatprep.subr.mxu0 0.0
    %3804 = vmatpush2.xpose.msra.mxu0 0.0
    %3805 = vmatprep.subr.mxu0 0.0
    %3806 = vmatpush2.xpose.msra.mxu0 0.0
    %3807 = vmatprep.subr.mxu0 0.0
    %3808 = vmatpush2.xpose.msra.mxu0 0.0
    %3809 = vmatprep.subr.mxu0 0.0
    %3810 = vmatpush2.xpose.msra.mxu0 0.0
    %3811 = vmatprep.subr.mxu0 0.0
    %3812 = vmatpush2.xpose.msra.mxu0 0.0
    %3813 = vmatprep.subr.mxu0 0.0
    %3814 = vmatpush2.xpose.msra.mxu0 0.0
    %3815 = vmatprep.subr.mxu0 0.0
    %3816 = vmatpush2.xpose.msra.mxu0 0.0
    %3817 = vmatprep.subr.mxu0 0.0
    %3818 = vmatpush2.xpose.msra.mxu0 0.0
    %3819 = vmatprep.subr.mxu0 0.0
    %3820 = vmatpush2.xpose.msra.mxu0 0.0
    %3821 = vmatprep.subr.mxu0 0.0
    %3822 = vmatpush2.xpose.msra.mxu0 0.0
    %3823 = vmatprep.subr.mxu0 0.0
    %3824 = vmatpush2.xpose.msra.mxu0 0.0
    %3825 = vmatprep.subr.mxu0 0.0
    %3826 = vmatpush2.xpose.msra.mxu0 0.0
    %3827 = vmatprep.subr.mxu0 0.0
    %3828 = vmatpush2.xpose.msra.mxu0 0.0
    %3829 = vmatprep.subr.mxu0 0.0
    %3830 = vmatpush2.xpose.msra.mxu0 0.0
    %3831 = vmatprep.subr.mxu0 0.0
    %3832 = vmatpush2.xpose.msra.mxu0 0.0
    %3833 = vmatprep.mubr.f32.mxu0 0.0
    %3834 = vmatmul.mubr.f32.gmra.mxu0 %v3761
    %v3835 = vpop.f32.mrf.mxu0
    %v3836 = vadd.f32 0.0, %v3835
    %v3837 = vpop.f32.mrf.mxu0
    %3838 = vmatprep.mubr.f32.mxu0 0.0
    %3839 = vmatmul.mubr.f32.gmra.mxu0 %v3763
    %v3840 = vpop.f32.mrf.mxu0
    %v3841 = vadd.f32 0.0, %v3840
    %v3842 = vpop.f32.mrf.mxu0
    %3843 = vdwg.mxu0
    %v3844 = vmul.f32 %v3836, 0.35355338
    %v3845 = vmul.f32 %v3841, 0.35355338
    %v3846 = vadd.f32 %v3844, %v2075
    %v3847 = vadd.f32 %v3845, %v2076
    %v3848 = vsel %vm595, %v3846, -inf
    %3849 = vmax.xlane.f32.xlu0 %v3848
    %v3850 = vpop.xlane.xlu0 %3849
    %v3851 = vsel %vm3646, %v3847, -inf
    %3852 = vmax.xlane.f32.xlu0 %v3851
    %v3853 = vpop.xlane.xlu0 %3852
    %v3854 = vsub.f32 %v3846, %v3850
    %v3855 = vsub.f32 %v3847, %v3853
    %v3856 = vmul.f32 %v3854, 1.442695
    %v3857 = vpow.pop %v3856
    %v3858 = vmul.f32 %v3855, 1.442695
    %v3859 = vpow.pop %v3858
    %v3860 = vsel %vm595, %v3857, 0.0
    %3861 = vadd.xlane.f32.xlu0 %v3860
    %v3862 = vpop.xlane.xlu0 %3861
    %v3863 = vsel %vm3646, %v3859, 0.0
    %3864 = vadd.xlane.f32.xlu0 %v3863
    %v3865 = vpop.xlane.xlu0 %3864
    %v3866 = vrcp.pop %v3862
    %v3867 = vmul.f32 %v3857, %v3866
    %v3868 = vrcp.pop %v3865
    %v3869 = vmul.f32 %v3859, %v3868
    %3870 = vrot.lane.b32.xlu0 %v3544, 88
    %v3871 = vpop.permute.xlu0 %3870
    %3872 = vrot.lane.b32.xlu0 %v3549, 88
    %v3873 = vpop.permute.xlu0 %3872
    %v3877 = vsel %vm595, %v3867, 0
    %v3880 = vsel %vm595, %v3869, 0
    %3882 = vmatprep.subr.mxu0 0.0
    %3883 = vmatpush1.msra.mxu0 0.0
    %3884 = vmatprep.subr.mxu0 0.0
    %3885 = vmatpush1.msra.mxu0 0.0
    %3886 = vmatprep.subr.mxu0 0.0
    %3887 = vmatpush1.msra.mxu0 0.0
    %3888 = vmatprep.subr.mxu0 0.0
    %3889 = vmatpush1.msra.mxu0 0.0
    %3890 = vmatprep.subr.mxu0 0.0
    %3891 = vmatpush1.msra.mxu0 0.0
    %3892 = vmatprep.subr.mxu0 0.0
    %3893 = vmatpush1.msra.mxu0 0.0
    %3894 = vmatprep.subr.mxu0 0.0
    %3895 = vmatpush1.msra.mxu0 0.0
    %3896 = vmatprep.subr.mxu0 0.0
    %3897 = vmatpush1.msra.mxu0 0.0
    %3898 = vmatprep.subr.mxu0 0.0
    %3899 = vmatpush1.msra.mxu0 0.0
    %3900 = vmatprep.subr.mxu0 0.0
    %3901 = vmatpush1.msra.mxu0 0.0
    %3902 = vmatprep.subr.mxu0 0.0
    %3903 = vmatpush1.msra.mxu0 0.0
    %3904 = vmatprep.subr.mxu0 0.0
    %3905 = vmatpush1.msra.mxu0 0.0
    %3906 = vmatprep.subr.mxu0 0.0
    %3907 = vmatpush1.msra.mxu0 0.0
    %3908 = vmatprep.subr.mxu0 0.0
    %3909 = vmatpush1.msra.mxu0 0.0
    %3910 = vmatprep.subr.mxu0 0.0
    %3911 = vmatpush1.msra.mxu0 %v3873
    %3912 = vmatprep.subr.mxu0 0.0
    %3913 = vmatpush1.msra.mxu0 %v3871
    %3914 = vmatprep.subr.mxu0 0.0
    %3915 = vmatpush2.msra.mxu0 0.0
    %3916 = vmatprep.subr.mxu0 0.0
    %3917 = vmatpush2.msra.mxu0 0.0
    %3918 = vmatprep.subr.mxu0 0.0
    %3919 = vmatpush2.msra.mxu0 0.0
    %3920 = vmatprep.subr.mxu0 0.0
    %3921 = vmatpush2.msra.mxu0 0.0
    %3922 = vmatprep.subr.mxu0 0.0
    %3923 = vmatpush2.msra.mxu0 0.0
    %3924 = vmatprep.subr.mxu0 0.0
    %3925 = vmatpush2.msra.mxu0 0.0
    %3926 = vmatprep.subr.mxu0 0.0
    %3927 = vmatpush2.msra.mxu0 0.0
    %3928 = vmatprep.subr.mxu0 0.0
    %3929 = vmatpush2.msra.mxu0 0.0
    %3930 = vmatprep.subr.mxu0 0.0
    %3931 = vmatpush2.msra.mxu0 0.0
    %3932 = vmatprep.subr.mxu0 0.0
    %3933 = vmatpush2.msra.mxu0 0.0
    %3934 = vmatprep.subr.mxu0 0.0
    %3935 = vmatpush2.msra.mxu0 0.0
    %3936 = vmatprep.subr.mxu0 0.0
    %3937 = vmatpush2.msra.mxu0 0.0
    %3938 = vmatprep.subr.mxu0 0.0
    %3939 = vmatpush2.msra.mxu0 0.0
    %3940 = vmatprep.subr.mxu0 0.0
    %3941 = vmatpush2.msra.mxu0 0.0
    %3942 = vmatprep.subr.mxu0 0.0
    %3943 = vmatpush2.msra.mxu0 0.0
    %3944 = vmatprep.subr.mxu0 0.0
    %3945 = vmatpush2.msra.mxu0 0.0
    %3946 = vmatprep.mubr.f32.mxu0 0.0
    %3947 = vmatmul.mubr.f32.gmra.mxu0 %v3877
    %v3948 = vpop.f32.mrf.mxu0
    %v3949 = vadd.f32 0.0, %v3948
    %v3950 = vpop.f32.mrf.mxu0
    %3951 = vmatprep.mubr.f32.mxu0 0.0
    %3952 = vmatmul.mubr.f32.gmra.mxu0 %v3880
    %v3953 = vpop.f32.mrf.mxu0
    %v3954 = vadd.f32 0.0, %v3953
    %v3955 = vpop.f32.mrf.mxu0
    %3956 = vdwg.mxu0
    %v3958 = vsel %vm507, %v3949, 0
    %v3961 = vsel %vm507, %v3954, 0
    %3963 = vmatprep.subr.mxu0 0.0
    %3964 = vmatpush1.msra.mxu0 0.0
    %3965 = vmatprep.subr.mxu0 0.0
    %3966 = vmatpush1.msra.mxu0 0.0
    %3967 = vmatprep.subr.mxu0 0.0
    %3968 = vmatpush1.msra.mxu0 0.0
    %3969 = vmatprep.subr.mxu0 0.0
    %3970 = vmatpush1.msra.mxu0 0.0
    %3971 = vmatprep.subr.mxu0 0.0
    %3972 = vmatpush1.msra.mxu0 0.0
    %3973 = vmatprep.subr.mxu0 0.0
    %3974 = vmatpush1.msra.mxu0 0.0
    %3975 = vmatprep.subr.mxu0 0.0
    %3976 = vmatpush1.msra.mxu0 0.0
    %3977 = vmatprep.subr.mxu0 0.0
    %3978 = vmatpush1.msra.mxu0 0.0
    %3979 = vmatprep.subr.mxu0 0.0
    %3980 = vmatpush1.msra.mxu0 0.0
    %3981 = vmatprep.subr.mxu0 0.0
    %3982 = vmatpush1.msra.mxu0 0.0
    %3983 = vmatprep.subr.mxu0 0.0
    %3984 = vmatpush1.msra.mxu0 0.0
    %3985 = vmatprep.subr.mxu0 0.0
    %3986 = vmatpush1.msra.mxu0 0.0
    %3987 = vmatprep.subr.mxu0 0.0
    %3988 = vmatpush1.msra.mxu0 0.0
    %3989 = vmatprep.subr.mxu0 0.0
    %3990 = vmatpush1.msra.mxu0 0.0
    %3991 = vmatprep.subr.mxu0 0.0
    %3992 = vmatpush1.msra.mxu0 0.0
    %3993 = vmatprep.subr.mxu0 0.0
    %3994 = vmatpush1.msra.mxu0 %v188
    %3995 = vmatprep.subr.mxu0 0.0
    %3996 = vmatpush2.msra.mxu0 0.0
    %3997 = vmatprep.subr.mxu0 0.0
    %3998 = vmatpush2.msra.mxu0 0.0
    %3999 = vmatprep.subr.mxu0 0.0
    %4000 = vmatpush2.msra.mxu0 0.0
    %4001 = vmatprep.subr.mxu0 0.0
    %4002 = vmatpush2.msra.mxu0 0.0
    %4003 = vmatprep.subr.mxu0 0.0
    %4004 = vmatpush2.msra.mxu0 0.0
    %4005 = vmatprep.subr.mxu0 0.0
    %4006 = vmatpush2.msra.mxu0 0.0
    %4007 = vmatprep.subr.mxu0 0.0
    %4008 = vmatpush2.msra.mxu0 0.0
    %4009 = vmatprep.subr.mxu0 0.0
    %4010 = vmatpush2.msra.mxu0 0.0
    %4011 = vmatprep.subr.mxu0 0.0
    %4012 = vmatpush2.msra.mxu0 0.0
    %4013 = vmatprep.subr.mxu0 0.0
    %4014 = vmatpush2.msra.mxu0 0.0
    %4015 = vmatprep.subr.mxu0 0.0
    %4016 = vmatpush2.msra.mxu0 0.0
    %4017 = vmatprep.subr.mxu0 0.0
    %4018 = vmatpush2.msra.mxu0 0.0
    %4019 = vmatprep.subr.mxu0 0.0
    %4020 = vmatpush2.msra.mxu0 0.0
    %4021 = vmatprep.subr.mxu0 0.0
    %4022 = vmatpush2.msra.mxu0 0.0
    %4023 = vmatprep.subr.mxu0 0.0
    %4024 = vmatpush2.msra.mxu0 0.0
    %4025 = vmatprep.subr.mxu0 0.0
    %4026 = vmatpush2.msra.mxu0 0.0
    %4027 = vmatprep.mubr.f32.mxu0 0.0
    %4028 = vmatmul.mubr.f32.gmra.mxu0 %v3958
    %v4029 = vpop.f32.mrf.mxu0
    %v4030 = vadd.f32 0.0, %v4029
    %v4031 = vpop.f32.mrf.mxu0
    %4032 = vmatprep.mubr.f32.mxu0 0.0
    %4033 = vmatmul.mubr.f32.gmra.mxu0 %v3961
    %v4034 = vpop.f32.mrf.mxu0
    %v4035 = vadd.f32 0.0, %v4034
    %v4036 = vpop.f32.mrf.mxu0
    %4037 = vdwg.mxu0
    %v4039 = vsel %vm507, %v3745, 0
    %v4042 = vsel %vm507, %v3750, 0
    %4044 = vmatprep.subr.mxu0 0.0
    %4045 = vmatpush1.msra.mxu0 0.0
    %4046 = vmatprep.subr.mxu0 0.0
    %4047 = vmatpush1.msra.mxu0 0.0
    %4048 = vmatprep.subr.mxu0 0.0
    %4049 = vmatpush1.msra.mxu0 0.0
    %4050 = vmatprep.subr.mxu0 0.0
    %4051 = vmatpush1.msra.mxu0 0.0
    %4052 = vmatprep.subr.mxu0 0.0
    %4053 = vmatpush1.msra.mxu0 0.0
    %4054 = vmatprep.subr.mxu0 0.0
    %4055 = vmatpush1.msra.mxu0 0.0
    %4056 = vmatprep.subr.mxu0 0.0
    %4057 = vmatpush1.msra.mxu0 0.0
    %4058 = vmatprep.subr.mxu0 0.0
    %4059 = vmatpush1.msra.mxu0 0.0
    %4060 = vmatprep.subr.mxu0 0.0
    %4061 = vmatpush1.msra.mxu0 0.0
    %4062 = vmatprep.subr.mxu0 0.0
    %4063 = vmatpush1.msra.mxu0 0.0
    %4064 = vmatprep.subr.mxu0 0.0
    %4065 = vmatpush1.msra.mxu0 0.0
    %4066 = vmatprep.subr.mxu0 0.0
    %4067 = vmatpush1.msra.mxu0 0.0
    %4068 = vmatprep.subr.mxu0 0.0
    %4069 = vmatpush1.msra.mxu0 0.0
    %4070 = vmatprep.subr.mxu0 0.0
    %4071 = vmatpush1.msra.mxu0 0.0
    %4072 = vmatprep.subr.mxu0 0.0
    %4073 = vmatpush1.msra.mxu0 0.0
    %4074 = vmatprep.subr.mxu0 0.0
    %4075 = vmatpush1.msra.mxu0 %v187
    %4076 = vmatprep.subr.mxu0 0.0
    %4077 = vmatpush2.msra.mxu0 0.0
    %4078 = vmatprep.subr.mxu0 0.0
    %4079 = vmatpush2.msra.mxu0 0.0
    %4080 = vmatprep.subr.mxu0 0.0
    %4081 = vmatpush2.msra.mxu0 0.0
    %4082 = vmatprep.subr.mxu0 0.0
    %4083 = vmatpush2.msra.mxu0 0.0
    %4084 = vmatprep.subr.mxu0 0.0
    %4085 = vmatpush2.msra.mxu0 0.0
    %4086 = vmatprep.subr.mxu0 0.0
    %4087 = vmatpush2.msra.mxu0 0.0
    %4088 = vmatprep.subr.mxu0 0.0
    %4089 = vmatpush2.msra.mxu0 0.0
    %4090 = vmatprep.subr.mxu0 0.0
    %4091 = vmatpush2.msra.mxu0 0.0
    %4092 = vmatprep.subr.mxu0 0.0
    %4093 = vmatpush2.msra.mxu0 0.0
    %4094 = vmatprep.subr.mxu0 0.0
    %4095 = vmatpush2.msra.mxu0 0.0
    %4096 = vmatprep.subr.mxu0 0.0
    %4097 = vmatpush2.msra.mxu0 0.0
    %4098 = vmatprep.subr.mxu0 0.0
    %4099 = vmatpush2.msra.mxu0 0.0
    %4100 = vmatprep.subr.mxu0 0.0
    %4101 = vmatpush2.msra.mxu0 0.0
    %4102 = vmatprep.subr.mxu0 0.0
    %4103 = vmatpush2.msra.mxu0 0.0
    %4104 = vmatprep.subr.mxu0 0.0
    %4105 = vmatpush2.msra.mxu0 0.0
    %4106 = vmatprep.subr.mxu0 0.0
    %4107 = vmatpush2.msra.mxu0 0.0
    %4108 = vmatprep.mubr.f32.mxu0 0.0
    %4109 = vmatmul.mubr.f32.gmra.mxu0 %v4039
    %v4110 = vpop.f32.mrf.mxu0
    %v4111 = vadd.f32 %v4030, %v4110
    %v4112 = vpop.f32.mrf.mxu0
    %4113 = vmatprep.mubr.f32.mxu0 0.0
    %4114 = vmatmul.mubr.f32.gmra.mxu0 %v4042
    %v4115 = vpop.f32.mrf.mxu0
    %v4116 = vadd.f32 %v4035, %v4115
    %v4117 = vpop.f32.mrf.mxu0
    %4118 = vdwg.mxu0
    %4119 = vrot.lane.b32.xlu0 %v3444, 112
    %v4120 = vpop.permute.xlu0 %4119
    %4121 = vrot.lane.b32.xlu0 %v3449, 112
    %v4122 = vpop.permute.xlu0 %4121
    %4123 = vrot.lane.b32.xlu0 %v3544, 112
    %v4124 = vpop.permute.xlu0 %4123
    %4125 = vrot.lane.b32.xlu0 %v3549, 112
    %v4126 = vpop.permute.xlu0 %4125
    %v4127 = vsel %vm507, %v4120, 0
    %v4129 = vsel %vm507, %v4122, 0
    %v4131 = vsel %vm507, %v4124, 0
    %v4133 = vsel %vm507, %v4126, 0
    %4135 = vmatprep.subr.mxu0 0.0
    %4136 = vmatpush1.xpose.msra.mxu0 0.0
    %4137 = vmatprep.subr.mxu0 0.0
    %4138 = vmatpush1.xpose.msra.mxu0 0.0
    %4139 = vmatprep.subr.mxu0 0.0
    %4140 = vmatpush1.xpose.msra.mxu0 0.0
    %4141 = vmatprep.subr.mxu0 0.0
    %4142 = vmatpush1.xpose.msra.mxu0 0.0
    %4143 = vmatprep.subr.mxu0 0.0
    %4144 = vmatpush1.xpose.msra.mxu0 0.0
    %4145 = vmatprep.subr.mxu0 0.0
    %4146 = vmatpush1.xpose.msra.mxu0 0.0
    %4147 = vmatprep.subr.mxu0 0.0
    %4148 = vmatpush1.xpose.msra.mxu0 0.0
    %4149 = vmatprep.subr.mxu0 0.0
    %4150 = vmatpush1.xpose.msra.mxu0 0.0
    %4151 = vmatprep.subr.mxu0 0.0
    %4152 = vmatpush1.xpose.msra.mxu0 0.0
    %4153 = vmatprep.subr.mxu0 0.0
    %4154 = vmatpush1.xpose.msra.mxu0 0.0
    %4155 = vmatprep.subr.mxu0 0.0
    %4156 = vmatpush1.xpose.msra.mxu0 0.0
    %4157 = vmatprep.subr.mxu0 0.0
    %4158 = vmatpush1.xpose.msra.mxu0 0.0
    %4159 = vmatprep.subr.mxu0 0.0
    %4160 = vmatpush1.xpose.msra.mxu0 0.0
    %4161 = vmatprep.subr.mxu0 0.0
    %4162 = vmatpush1.xpose.msra.mxu0 0.0
    %4163 = vmatprep.subr.mxu0 0.0
    %4164 = vmatpush1.xpose.msra.mxu0 %v4133
    %4165 = vmatprep.subr.mxu0 0.0
    %4166 = vmatpush1.xpose.msra.mxu0 %v4131
    %4167 = vmatprep.subr.mxu0 0.0
    %4168 = vmatpush2.xpose.msra.mxu0 0.0
    %4169 = vmatprep.subr.mxu0 0.0
    %4170 = vmatpush2.xpose.msra.mxu0 0.0
    %4171 = vmatprep.subr.mxu0 0.0
    %4172 = vmatpush2.xpose.msra.mxu0 0.0
    %4173 = vmatprep.subr.mxu0 0.0
    %4174 = vmatpush2.xpose.msra.mxu0 0.0
    %4175 = vmatprep.subr.mxu0 0.0
    %4176 = vmatpush2.xpose.msra.mxu0 0.0
    %4177 = vmatprep.subr.mxu0 0.0
    %4178 = vmatpush2.xpose.msra.mxu0 0.0
    %4179 = vmatprep.subr.mxu0 0.0
    %4180 = vmatpush2.xpose.msra.mxu0 0.0
    %4181 = vmatprep.subr.mxu0 0.0
    %4182 = vmatpush2.xpose.msra.mxu0 0.0
    %4183 = vmatprep.subr.mxu0 0.0
    %4184 = vmatpush2.xpose.msra.mxu0 0.0
    %4185 = vmatprep.subr.mxu0 0.0
    %4186 = vmatpush2.xpose.msra.mxu0 0.0
    %4187 = vmatprep.subr.mxu0 0.0
    %4188 = vmatpush2.xpose.msra.mxu0 0.0
    %4189 = vmatprep.subr.mxu0 0.0
    %4190 = vmatpush2.xpose.msra.mxu0 0.0
    %4191 = vmatprep.subr.mxu0 0.0
    %4192 = vmatpush2.xpose.msra.mxu0 0.0
    %4193 = vmatprep.subr.mxu0 0.0
    %4194 = vmatpush2.xpose.msra.mxu0 0.0
    %4195 = vmatprep.subr.mxu0 0.0
    %4196 = vmatpush2.xpose.msra.mxu0 0.0
    %4197 = vmatprep.subr.mxu0 0.0
    %4198 = vmatpush2.xpose.msra.mxu0 0.0
    %4199 = vmatprep.mubr.f32.mxu0 0.0
    %4200 = vmatmul.mubr.f32.gmra.mxu0 %v4127
    %v4201 = vpop.f32.mrf.mxu0
    %v4202 = vadd.f32 0.0, %v4201
    %v4203 = vpop.f32.mrf.mxu0
    %4204 = vmatprep.mubr.f32.mxu0 0.0
    %4205 = vmatmul.mubr.f32.gmra.mxu0 %v4129
    %v4206 = vpop.f32.mrf.mxu0
    %v4207 = vadd.f32 0.0, %v4206
    %v4208 = vpop.f32.mrf.mxu0
    %4209 = vdwg.mxu0
    %v4210 = vmul.f32 %v4202, 0.35355338
    %v4211 = vmul.f32 %v4207, 0.35355338
    %v4212 = vadd.f32 %v4210, %v2075
    %v4213 = vadd.f32 %v4211, %v2076
    %v4214 = vsel %vm595, %v4212, -inf
    %4215 = vmax.xlane.f32.xlu0 %v4214
    %v4216 = vpop.xlane.xlu0 %4215
    %v4217 = vsel %vm3646, %v4213, -inf
    %4218 = vmax.xlane.f32.xlu0 %v4217
    %v4219 = vpop.xlane.xlu0 %4218
    %v4220 = vsub.f32 %v4212, %v4216
    %v4221 = vsub.f32 %v4213, %v4219
    %v4222 = vmul.f32 %v4220, 1.442695
    %v4223 = vpow.pop %v4222
    %v4224 = vmul.f32 %v4221, 1.442695
    %v4225 = vpow.pop %v4224
    %v4226 = vsel %vm595, %v4223, 0.0
    %4227 = vadd.xlane.f32.xlu0 %v4226
    %v4228 = vpop.xlane.xlu0 %4227
    %v4229 = vsel %vm3646, %v4225, 0.0
    %4230 = vadd.xlane.f32.xlu0 %v4229
    %v4231 = vpop.xlane.xlu0 %4230
    %v4232 = vrcp.pop %v4228
    %v4233 = vmul.f32 %v4223, %v4232
    %v4234 = vrcp.pop %v4231
    %v4235 = vmul.f32 %v4225, %v4234
    %4236 = vrot.lane.b32.xlu0 %v3544, 80
    %v4237 = vpop.permute.xlu0 %4236
    %4238 = vrot.lane.b32.xlu0 %v3549, 80
    %v4239 = vpop.permute.xlu0 %4238
    %v4243 = vsel %vm595, %v4233, 0
    %v4246 = vsel %vm595, %v4235, 0
    %4248 = vmatprep.subr.mxu0 0.0
    %4249 = vmatpush1.msra.mxu0 0.0
    %4250 = vmatprep.subr.mxu0 0.0
    %4251 = vmatpush1.msra.mxu0 0.0
    %4252 = vmatprep.subr.mxu0 0.0
    %4253 = vmatpush1.msra.mxu0 0.0
    %4254 = vmatprep.subr.mxu0 0.0
    %4255 = vmatpush1.msra.mxu0 0.0
    %4256 = vmatprep.subr.mxu0 0.0
    %4257 = vmatpush1.msra.mxu0 0.0
    %4258 = vmatprep.subr.mxu0 0.0
    %4259 = vmatpush1.msra.mxu0 0.0
    %4260 = vmatprep.subr.mxu0 0.0
    %4261 = vmatpush1.msra.mxu0 0.0
    %4262 = vmatprep.subr.mxu0 0.0
    %4263 = vmatpush1.msra.mxu0 0.0
    %4264 = vmatprep.subr.mxu0 0.0
    %4265 = vmatpush1.msra.mxu0 0.0
    %4266 = vmatprep.subr.mxu0 0.0
    %4267 = vmatpush1.msra.mxu0 0.0
    %4268 = vmatprep.subr.mxu0 0.0
    %4269 = vmatpush1.msra.mxu0 0.0
    %4270 = vmatprep.subr.mxu0 0.0
    %4271 = vmatpush1.msra.mxu0 0.0
    %4272 = vmatprep.subr.mxu0 0.0
    %4273 = vmatpush1.msra.mxu0 0.0
    %4274 = vmatprep.subr.mxu0 0.0
    %4275 = vmatpush1.msra.mxu0 0.0
    %4276 = vmatprep.subr.mxu0 0.0
    %4277 = vmatpush1.msra.mxu0 %v4239
    %4278 = vmatprep.subr.mxu0 0.0
    %4279 = vmatpush1.msra.mxu0 %v4237
    %4280 = vmatprep.subr.mxu0 0.0
    %4281 = vmatpush2.msra.mxu0 0.0
    %4282 = vmatprep.subr.mxu0 0.0
    %4283 = vmatpush2.msra.mxu0 0.0
    %4284 = vmatprep.subr.mxu0 0.0
    %4285 = vmatpush2.msra.mxu0 0.0
    %4286 = vmatprep.subr.mxu0 0.0
    %4287 = vmatpush2.msra.mxu0 0.0
    %4288 = vmatprep.subr.mxu0 0.0
    %4289 = vmatpush2.msra.mxu0 0.0
    %4290 = vmatprep.subr.mxu0 0.0
    %4291 = vmatpush2.msra.mxu0 0.0
    %4292 = vmatprep.subr.mxu0 0.0
    %4293 = vmatpush2.msra.mxu0 0.0
    %4294 = vmatprep.subr.mxu0 0.0
    %4295 = vmatpush2.msra.mxu0 0.0
    %4296 = vmatprep.subr.mxu0 0.0
    %4297 = vmatpush2.msra.mxu0 0.0
    %4298 = vmatprep.subr.mxu0 0.0
    %4299 = vmatpush2.msra.mxu0 0.0
    %4300 = vmatprep.subr.mxu0 0.0
    %4301 = vmatpush2.msra.mxu0 0.0
    %4302 = vmatprep.subr.mxu0 0.0
    %4303 = vmatpush2.msra.mxu0 0.0
    %4304 = vmatprep.subr.mxu0 0.0
    %4305 = vmatpush2.msra.mxu0 0.0
    %4306 = vmatprep.subr.mxu0 0.0
    %4307 = vmatpush2.msra.mxu0 0.0
    %4308 = vmatprep.subr.mxu0 0.0
    %4309 = vmatpush2.msra.mxu0 0.0
    %4310 = vmatprep.subr.mxu0 0.0
    %4311 = vmatpush2.msra.mxu0 0.0
    %4312 = vmatprep.mubr.f32.mxu0 0.0
    %4313 = vmatmul.mubr.f32.gmra.mxu0 %v4243
    %v4314 = vpop.f32.mrf.mxu0
    %v4315 = vadd.f32 0.0, %v4314
    %v4316 = vpop.f32.mrf.mxu0
    %4317 = vmatprep.mubr.f32.mxu0 0.0
    %4318 = vmatmul.mubr.f32.gmra.mxu0 %v4246
    %v4319 = vpop.f32.mrf.mxu0
    %v4320 = vadd.f32 0.0, %v4319
    %v4321 = vpop.f32.mrf.mxu0
    %4322 = vdwg.mxu0
    %v4324 = vsel %vm507, %v4315, 0
    %v4327 = vsel %vm507, %v4320, 0
    %4329 = vmatprep.subr.mxu0 0.0
    %4330 = vmatpush1.msra.mxu0 0.0
    %4331 = vmatprep.subr.mxu0 0.0
    %4332 = vmatpush1.msra.mxu0 0.0
    %4333 = vmatprep.subr.mxu0 0.0
    %4334 = vmatpush1.msra.mxu0 0.0
    %4335 = vmatprep.subr.mxu0 0.0
    %4336 = vmatpush1.msra.mxu0 0.0
    %4337 = vmatprep.subr.mxu0 0.0
    %4338 = vmatpush1.msra.mxu0 0.0
    %4339 = vmatprep.subr.mxu0 0.0
    %4340 = vmatpush1.msra.mxu0 0.0
    %4341 = vmatprep.subr.mxu0 0.0
    %4342 = vmatpush1.msra.mxu0 0.0
    %4343 = vmatprep.subr.mxu0 0.0
    %4344 = vmatpush1.msra.mxu0 0.0
    %4345 = vmatprep.subr.mxu0 0.0
    %4346 = vmatpush1.msra.mxu0 0.0
    %4347 = vmatprep.subr.mxu0 0.0
    %4348 = vmatpush1.msra.mxu0 0.0
    %4349 = vmatprep.subr.mxu0 0.0
    %4350 = vmatpush1.msra.mxu0 0.0
    %4351 = vmatprep.subr.mxu0 0.0
    %4352 = vmatpush1.msra.mxu0 0.0
    %4353 = vmatprep.subr.mxu0 0.0
    %4354 = vmatpush1.msra.mxu0 0.0
    %4355 = vmatprep.subr.mxu0 0.0
    %4356 = vmatpush1.msra.mxu0 0.0
    %4357 = vmatprep.subr.mxu0 0.0
    %4358 = vmatpush1.msra.mxu0 0.0
    %4359 = vmatprep.subr.mxu0 0.0
    %4360 = vmatpush1.msra.mxu0 %v189
    %4361 = vmatprep.subr.mxu0 0.0
    %4362 = vmatpush2.msra.mxu0 0.0
    %4363 = vmatprep.subr.mxu0 0.0
    %4364 = vmatpush2.msra.mxu0 0.0
    %4365 = vmatprep.subr.mxu0 0.0
    %4366 = vmatpush2.msra.mxu0 0.0
    %4367 = vmatprep.subr.mxu0 0.0
    %4368 = vmatpush2.msra.mxu0 0.0
    %4369 = vmatprep.subr.mxu0 0.0
    %4370 = vmatpush2.msra.mxu0 0.0
    %4371 = vmatprep.subr.mxu0 0.0
    %4372 = vmatpush2.msra.mxu0 0.0
    %4373 = vmatprep.subr.mxu0 0.0
    %4374 = vmatpush2.msra.mxu0 0.0
    %4375 = vmatprep.subr.mxu0 0.0
    %4376 = vmatpush2.msra.mxu0 0.0
    %4377 = vmatprep.subr.mxu0 0.0
    %4378 = vmatpush2.msra.mxu0 0.0
    %4379 = vmatprep.subr.mxu0 0.0
    %4380 = vmatpush2.msra.mxu0 0.0
    %4381 = vmatprep.subr.mxu0 0.0
    %4382 = vmatpush2.msra.mxu0 0.0
    %4383 = vmatprep.subr.mxu0 0.0
    %4384 = vmatpush2.msra.mxu0 0.0
    %4385 = vmatprep.subr.mxu0 0.0
    %4386 = vmatpush2.msra.mxu0 0.0
    %4387 = vmatprep.subr.mxu0 0.0
    %4388 = vmatpush2.msra.mxu0 0.0
    %4389 = vmatprep.subr.mxu0 0.0
    %4390 = vmatpush2.msra.mxu0 0.0
    %4391 = vmatprep.subr.mxu0 0.0
    %4392 = vmatpush2.msra.mxu0 0.0
    %4393 = vmatprep.mubr.f32.mxu0 0.0
    %4394 = vmatmul.mubr.f32.gmra.mxu0 %v4324
    %v4395 = vpop.f32.mrf.mxu0
    %v4396 = vadd.f32 0.0, %v4395
    %v4397 = vpop.f32.mrf.mxu0
    %4398 = vmatprep.mubr.f32.mxu0 0.0
    %4399 = vmatmul.mubr.f32.gmra.mxu0 %v4327
    %v4400 = vpop.f32.mrf.mxu0
    %v4401 = vadd.f32 0.0, %v4400
    %v4402 = vpop.f32.mrf.mxu0
    %4403 = vdwg.mxu0
    %v4404 = vadd.f32 %v4111, %v4396
    %v4405 = vadd.f32 %v4116, %v4401
    %4406 = vrot.lane.b32.xlu0 %v3444, 104
    %v4407 = vpop.permute.xlu0 %4406
    %4408 = vrot.lane.b32.xlu0 %v3449, 104
    %v4409 = vpop.permute.xlu0 %4408
    %4410 = vrot.lane.b32.xlu0 %v3544, 104
    %v4411 = vpop.permute.xlu0 %4410
    %4412 = vrot.lane.b32.xlu0 %v3549, 104
    %v4413 = vpop.permute.xlu0 %4412
    %v4414 = vsel %vm507, %v4407, 0
    %v4416 = vsel %vm507, %v4409, 0
    %v4418 = vsel %vm507, %v4411, 0
    %v4420 = vsel %vm507, %v4413, 0
    %4422 = vmatprep.subr.mxu0 0.0
    %4423 = vmatpush1.xpose.msra.mxu0 0.0
    %4424 = vmatprep.subr.mxu0 0.0
    %4425 = vmatpush1.xpose.msra.mxu0 0.0
    %4426 = vmatprep.subr.mxu0 0.0
    %4427 = vmatpush1.xpose.msra.mxu0 0.0
    %4428 = vmatprep.subr.mxu0 0.0
    %4429 = vmatpush1.xpose.msra.mxu0 0.0
    %4430 = vmatprep.subr.mxu0 0.0
    %4431 = vmatpush1.xpose.msra.mxu0 0.0
    %4432 = vmatprep.subr.mxu0 0.0
    %4433 = vmatpush1.xpose.msra.mxu0 0.0
    %4434 = vmatprep.subr.mxu0 0.0
    %4435 = vmatpush1.xpose.msra.mxu0 0.0
    %4436 = vmatprep.subr.mxu0 0.0
    %4437 = vmatpush1.xpose.msra.mxu0 0.0
    %4438 = vmatprep.subr.mxu0 0.0
    %4439 = vmatpush1.xpose.msra.mxu0 0.0
    %4440 = vmatprep.subr.mxu0 0.0
    %4441 = vmatpush1.xpose.msra.mxu0 0.0
    %4442 = vmatprep.subr.mxu0 0.0
    %4443 = vmatpush1.xpose.msra.mxu0 0.0
    %4444 = vmatprep.subr.mxu0 0.0
    %4445 = vmatpush1.xpose.msra.mxu0 0.0
    %4446 = vmatprep.subr.mxu0 0.0
    %4447 = vmatpush1.xpose.msra.mxu0 0.0
    %4448 = vmatprep.subr.mxu0 0.0
    %4449 = vmatpush1.xpose.msra.mxu0 0.0
    %4450 = vmatprep.subr.mxu0 0.0
    %4451 = vmatpush1.xpose.msra.mxu0 %v4420
    %4452 = vmatprep.subr.mxu0 0.0
    %4453 = vmatpush1.xpose.msra.mxu0 %v4418
    %4454 = vmatprep.subr.mxu0 0.0
    %4455 = vmatpush2.xpose.msra.mxu0 0.0
    %4456 = vmatprep.subr.mxu0 0.0
    %4457 = vmatpush2.xpose.msra.mxu0 0.0
    %4458 = vmatprep.subr.mxu0 0.0
    %4459 = vmatpush2.xpose.msra.mxu0 0.0
    %4460 = vmatprep.subr.mxu0 0.0
    %4461 = vmatpush2.xpose.msra.mxu0 0.0
    %4462 = vmatprep.subr.mxu0 0.0
    %4463 = vmatpush2.xpose.msra.mxu0 0.0
    %4464 = vmatprep.subr.mxu0 0.0
    %4465 = vmatpush2.xpose.msra.mxu0 0.0
    %4466 = vmatprep.subr.mxu0 0.0
    %4467 = vmatpush2.xpose.msra.mxu0 0.0
    %4468 = vmatprep.subr.mxu0 0.0
    %4469 = vmatpush2.xpose.msra.mxu0 0.0
    %4470 = vmatprep.subr.mxu0 0.0
    %4471 = vmatpush2.xpose.msra.mxu0 0.0
    %4472 = vmatprep.subr.mxu0 0.0
    %4473 = vmatpush2.xpose.msra.mxu0 0.0
    %4474 = vmatprep.subr.mxu0 0.0
    %4475 = vmatpush2.xpose.msra.mxu0 0.0
    %4476 = vmatprep.subr.mxu0 0.0
    %4477 = vmatpush2.xpose.msra.mxu0 0.0
    %4478 = vmatprep.subr.mxu0 0.0
    %4479 = vmatpush2.xpose.msra.mxu0 0.0
    %4480 = vmatprep.subr.mxu0 0.0
    %4481 = vmatpush2.xpose.msra.mxu0 0.0
    %4482 = vmatprep.subr.mxu0 0.0
    %4483 = vmatpush2.xpose.msra.mxu0 0.0
    %4484 = vmatprep.subr.mxu0 0.0
    %4485 = vmatpush2.xpose.msra.mxu0 0.0
    %4486 = vmatprep.mubr.f32.mxu0 0.0
    %4487 = vmatmul.mubr.f32.gmra.mxu0 %v4414
    %v4488 = vpop.f32.mrf.mxu0
    %v4489 = vadd.f32 0.0, %v4488
    %v4490 = vpop.f32.mrf.mxu0
    %4491 = vmatprep.mubr.f32.mxu0 0.0
    %4492 = vmatmul.mubr.f32.gmra.mxu0 %v4416
    %v4493 = vpop.f32.mrf.mxu0
    %v4494 = vadd.f32 0.0, %v4493
    %v4495 = vpop.f32.mrf.mxu0
    %4496 = vdwg.mxu0
    %v4497 = vmul.f32 %v4489, 0.35355338
    %v4498 = vmul.f32 %v4494, 0.35355338
    %v4499 = vadd.f32 %v4497, %v2075
    %v4500 = vadd.f32 %v4498, %v2076
    %v4501 = vsel %vm595, %v4499, -inf
    %4502 = vmax.xlane.f32.xlu0 %v4501
    %v4503 = vpop.xlane.xlu0 %4502
    %v4504 = vsel %vm3646, %v4500, -inf
    %4505 = vmax.xlane.f32.xlu0 %v4504
    %v4506 = vpop.xlane.xlu0 %4505
    %v4507 = vsub.f32 %v4499, %v4503
    %v4508 = vsub.f32 %v4500, %v4506
    %v4509 = vmul.f32 %v4507, 1.442695
    %v4510 = vpow.pop %v4509
    %v4511 = vmul.f32 %v4508, 1.442695
    %v4512 = vpow.pop %v4511
    %v4513 = vsel %vm595, %v4510, 0.0
    %4514 = vadd.xlane.f32.xlu0 %v4513
    %v4515 = vpop.xlane.xlu0 %4514
    %v4516 = vsel %vm3646, %v4512, 0.0
    %4517 = vadd.xlane.f32.xlu0 %v4516
    %v4518 = vpop.xlane.xlu0 %4517
    %v4519 = vrcp.pop %v4515
    %v4520 = vmul.f32 %v4510, %v4519
    %v4521 = vrcp.pop %v4518
    %v4522 = vmul.f32 %v4512, %v4521
    %4523 = vrot.lane.b32.xlu0 %v3544, 72
    %v4524 = vpop.permute.xlu0 %4523
    %4525 = vrot.lane.b32.xlu0 %v3549, 72
    %v4526 = vpop.permute.xlu0 %4525
    %v4530 = vsel %vm595, %v4520, 0
    %v4533 = vsel %vm595, %v4522, 0
    %4535 = vmatprep.subr.mxu0 0.0
    %4536 = vmatpush1.msra.mxu0 0.0
    %4537 = vmatprep.subr.mxu0 0.0
    %4538 = vmatpush1.msra.mxu0 0.0
    %4539 = vmatprep.subr.mxu0 0.0
    %4540 = vmatpush1.msra.mxu0 0.0
    %4541 = vmatprep.subr.mxu0 0.0
    %4542 = vmatpush1.msra.mxu0 0.0
    %4543 = vmatprep.subr.mxu0 0.0
    %4544 = vmatpush1.msra.mxu0 0.0
    %4545 = vmatprep.subr.mxu0 0.0
    %4546 = vmatpush1.msra.mxu0 0.0
    %4547 = vmatprep.subr.mxu0 0.0
    %4548 = vmatpush1.msra.mxu0 0.0
    %4549 = vmatprep.subr.mxu0 0.0
    %4550 = vmatpush1.msra.mxu0 0.0
    %4551 = vmatprep.subr.mxu0 0.0
    %4552 = vmatpush1.msra.mxu0 0.0
    %4553 = vmatprep.subr.mxu0 0.0
    %4554 = vmatpush1.msra.mxu0 0.0
    %4555 = vmatprep.subr.mxu0 0.0
    %4556 = vmatpush1.msra.mxu0 0.0
    %4557 = vmatprep.subr.mxu0 0.0
    %4558 = vmatpush1.msra.mxu0 0.0
    %4559 = vmatprep.subr.mxu0 0.0
    %4560 = vmatpush1.msra.mxu0 0.0
    %4561 = vmatprep.subr.mxu0 0.0
    %4562 = vmatpush1.msra.mxu0 0.0
    %4563 = vmatprep.subr.mxu0 0.0
    %4564 = vmatpush1.msra.mxu0 %v4526
    %4565 = vmatprep.subr.mxu0 0.0
    %4566 = vmatpush1.msra.mxu0 %v4524
    %4567 = vmatprep.subr.mxu0 0.0
    %4568 = vmatpush2.msra.mxu0 0.0
    %4569 = vmatprep.subr.mxu0 0.0
    %4570 = vmatpush2.msra.mxu0 0.0
    %4571 = vmatprep.subr.mxu0 0.0
    %4572 = vmatpush2.msra.mxu0 0.0
    %4573 = vmatprep.subr.mxu0 0.0
    %4574 = vmatpush2.msra.mxu0 0.0
    %4575 = vmatprep.subr.mxu0 0.0
    %4576 = vmatpush2.msra.mxu0 0.0
    %4577 = vmatprep.subr.mxu0 0.0
    %4578 = vmatpush2.msra.mxu0 0.0
    %4579 = vmatprep.subr.mxu0 0.0
    %4580 = vmatpush2.msra.mxu0 0.0
    %4581 = vmatprep.subr.mxu0 0.0
    %4582 = vmatpush2.msra.mxu0 0.0
    %4583 = vmatprep.subr.mxu0 0.0
    %4584 = vmatpush2.msra.mxu0 0.0
    %4585 = vmatprep.subr.mxu0 0.0
    %4586 = vmatpush2.msra.mxu0 0.0
    %4587 = vmatprep.subr.mxu0 0.0
    %4588 = vmatpush2.msra.mxu0 0.0
    %4589 = vmatprep.subr.mxu0 0.0
    %4590 = vmatpush2.msra.mxu0 0.0
    %4591 = vmatprep.subr.mxu0 0.0
    %4592 = vmatpush2.msra.mxu0 0.0
    %4593 = vmatprep.subr.mxu0 0.0
    %4594 = vmatpush2.msra.mxu0 0.0
    %4595 = vmatprep.subr.mxu0 0.0
    %4596 = vmatpush2.msra.mxu0 0.0
    %4597 = vmatprep.subr.mxu0 0.0
    %4598 = vmatpush2.msra.mxu0 0.0
    %4599 = vmatprep.mubr.f32.mxu0 0.0
    %4600 = vmatmul.mubr.f32.gmra.mxu0 %v4530
    %v4601 = vpop.f32.mrf.mxu0
    %v4602 = vadd.f32 0.0, %v4601
    %v4603 = vpop.f32.mrf.mxu0
    %4604 = vmatprep.mubr.f32.mxu0 0.0
    %4605 = vmatmul.mubr.f32.gmra.mxu0 %v4533
    %v4606 = vpop.f32.mrf.mxu0
    %v4607 = vadd.f32 0.0, %v4606
    %v4608 = vpop.f32.mrf.mxu0
    %4609 = vdwg.mxu0
    %v4611 = vsel %vm507, %v4602, 0
    %v4614 = vsel %vm507, %v4607, 0
    %4616 = vmatprep.subr.mxu0 0.0
    %4617 = vmatpush1.msra.mxu0 0.0
    %4618 = vmatprep.subr.mxu0 0.0
    %4619 = vmatpush1.msra.mxu0 0.0
    %4620 = vmatprep.subr.mxu0 0.0
    %4621 = vmatpush1.msra.mxu0 0.0
    %4622 = vmatprep.subr.mxu0 0.0
    %4623 = vmatpush1.msra.mxu0 0.0
    %4624 = vmatprep.subr.mxu0 0.0
    %4625 = vmatpush1.msra.mxu0 0.0
    %4626 = vmatprep.subr.mxu0 0.0
    %4627 = vmatpush1.msra.mxu0 0.0
    %4628 = vmatprep.subr.mxu0 0.0
    %4629 = vmatpush1.msra.mxu0 0.0
    %4630 = vmatprep.subr.mxu0 0.0
    %4631 = vmatpush1.msra.mxu0 0.0
    %4632 = vmatprep.subr.mxu0 0.0
    %4633 = vmatpush1.msra.mxu0 0.0
    %4634 = vmatprep.subr.mxu0 0.0
    %4635 = vmatpush1.msra.mxu0 0.0
    %4636 = vmatprep.subr.mxu0 0.0
    %4637 = vmatpush1.msra.mxu0 0.0
    %4638 = vmatprep.subr.mxu0 0.0
    %4639 = vmatpush1.msra.mxu0 0.0
    %4640 = vmatprep.subr.mxu0 0.0
    %4641 = vmatpush1.msra.mxu0 0.0
    %4642 = vmatprep.subr.mxu0 0.0
    %4643 = vmatpush1.msra.mxu0 0.0
    %4644 = vmatprep.subr.mxu0 0.0
    %4645 = vmatpush1.msra.mxu0 0.0
    %4646 = vmatprep.subr.mxu0 0.0
    %4647 = vmatpush1.msra.mxu0 %v190
    %4648 = vmatprep.subr.mxu0 0.0
    %4649 = vmatpush2.msra.mxu0 0.0
    %4650 = vmatprep.subr.mxu0 0.0
    %4651 = vmatpush2.msra.mxu0 0.0
    %4652 = vmatprep.subr.mxu0 0.0
    %4653 = vmatpush2.msra.mxu0 0.0
    %4654 = vmatprep.subr.mxu0 0.0
    %4655 = vmatpush2.msra.mxu0 0.0
    %4656 = vmatprep.subr.mxu0 0.0
    %4657 = vmatpush2.msra.mxu0 0.0
    %4658 = vmatprep.subr.mxu0 0.0
    %4659 = vmatpush2.msra.mxu0 0.0
    %4660 = vmatprep.subr.mxu0 0.0
    %4661 = vmatpush2.msra.mxu0 0.0
    %4662 = vmatprep.subr.mxu0 0.0
    %4663 = vmatpush2.msra.mxu0 0.0
    %4664 = vmatprep.subr.mxu0 0.0
    %4665 = vmatpush2.msra.mxu0 0.0
    %4666 = vmatprep.subr.mxu0 0.0
    %4667 = vmatpush2.msra.mxu0 0.0
    %4668 = vmatprep.subr.mxu0 0.0
    %4669 = vmatpush2.msra.mxu0 0.0
    %4670 = vmatprep.subr.mxu0 0.0
    %4671 = vmatpush2.msra.mxu0 0.0
    %4672 = vmatprep.subr.mxu0 0.0
    %4673 = vmatpush2.msra.mxu0 0.0
    %4674 = vmatprep.subr.mxu0 0.0
    %4675 = vmatpush2.msra.mxu0 0.0
    %4676 = vmatprep.subr.mxu0 0.0
    %4677 = vmatpush2.msra.mxu0 0.0
    %4678 = vmatprep.subr.mxu0 0.0
    %4679 = vmatpush2.msra.mxu0 0.0
    %4680 = vmatprep.mubr.f32.mxu0 0.0
    %4681 = vmatmul.mubr.f32.gmra.mxu0 %v4611
    %v4682 = vpop.f32.mrf.mxu0
    %v4683 = vadd.f32 0.0, %v4682
    %v4684 = vpop.f32.mrf.mxu0
    %4685 = vmatprep.mubr.f32.mxu0 0.0
    %4686 = vmatmul.mubr.f32.gmra.mxu0 %v4614
    %v4687 = vpop.f32.mrf.mxu0
    %v4688 = vadd.f32 0.0, %v4687
    %v4689 = vpop.f32.mrf.mxu0
    %4690 = vdwg.mxu0
    %v4691 = vadd.f32 %v4404, %v4683
    %v4692 = vadd.f32 %v4405, %v4688
    %v4694 = vlaneseq
    %v4695 = vshrl.u32 %v4694, 7
    %v4696 = vsub.s32 0, %v4695
    %v4697 = vrot.slane %v185, %v4696
    %v4699 = vadd.f32 %v4691, %v4697
    %v4700 = vadd.f32 %v4692, %v4697
    %v4701 = vadd.f32 %v3363, %v4699
    %v4702 = vadd.f32 %v3364, %v4700
    %v4703 = vsel %vm368, %v4701, 0.0
    %4704 = vadd.xlane.f32.xlu0 %v4703
    %v4705 = vpop.xlane.xlu0 %4704
    %v4706 = vsel %vm2033, %v4702, 0.0
    %4707 = vadd.xlane.f32.xlu0 %v4706
    %v4708 = vpop.xlane.xlu0 %4707
    %v4709 = vmul.f32 %v4705, %v375
    %v4710 = vmul.f32 %v4708, %v375
    %v4711 = vsub.f32 %v4701, %v4709
    %v4712 = vsub.f32 %v4702, %v4710
    %v4713 = vmul.f32 %v4711, %v4711
    %v4714 = vmul.f32 %v4712, %v4712
    %v4715 = vsel %vm368, %v4713, 0.0
    %4716 = vadd.xlane.f32.xlu0 %v4715
    %v4717 = vpop.xlane.xlu0 %4716
    %v4718 = vsel %vm2033, %v4714, 0.0
    %4719 = vadd.xlane.f32.xlu0 %v4718
    %v4720 = vpop.xlane.xlu0 %4719
    %v4721 = vmul.f32 %v4717, %v375
    %v4722 = vmul.f32 %v4720, %v375
    %v4723 = vadd.f32 %v4721, 1e-05
    %v4724 = vadd.f32 %v4722, 1e-05
    %v4725 = vrsqrt.pop %v4723
    %v4726 = vrsqrt.pop %v4724
    %v4727 = vmul.f32 %v4711, %v4725
    %v4728 = vmul.f32 %v4712, %v4726
    %v4730 = vlaneseq
    %v4731 = vshrl.u32 %v4730, 7
    %v4732 = vsub.s32 0, %v4731
    %v4733 = vrot.slane %v212, %v4732
    %v4735 = vmul.f32 %v4727, %v4733
    %v4736 = vmul.f32 %v4728, %v4733
    %v4738 = vlaneseq
    %v4739 = vshrl.u32 %v4738, 7
    %v4740 = vsub.s32 0, %v4739
    %v4741 = vrot.slane %v211, %v4740
    %v4743 = vadd.f32 %v4735, %v4741
    %v4744 = vadd.f32 %v4736, %v4741
    %v4746 = vlaneseq
    %v4747 = vshrl.u32 %v4746, 7
    %v4748 = vsub.s32 0, %v4747
    %v4749 = vrot.slane %v195, %v4748
    %v4752 = vsel %vm368, %v4743, 0
    %v4755 = vsel %vm368, %v4744, 0
    %4757 = vmatprep.subr.mxu0 0.0
    %4758 = vmatpush1.msra.mxu0 0.0
    %4759 = vmatprep.subr.mxu0 0.0
    %4760 = vmatpush1.msra.mxu0 0.0
    %4761 = vmatprep.subr.mxu0 0.0
    %4762 = vmatpush1.msra.mxu0 0.0
    %4763 = vmatprep.subr.mxu0 0.0
    %4764 = vmatpush1.msra.mxu0 0.0
    %4765 = vmatprep.subr.mxu0 0.0
    %4766 = vmatpush1.msra.mxu0 0.0
    %4767 = vmatprep.subr.mxu0 0.0
    %4768 = vmatpush1.msra.mxu0 0.0
    %4769 = vmatprep.subr.mxu0 0.0
    %4770 = vmatpush1.msra.mxu0 0.0
    %4771 = vmatprep.subr.mxu0 0.0
    %4772 = vmatpush1.msra.mxu0 0.0
    %4773 = vmatprep.subr.mxu0 0.0
    %4774 = vmatpush1.msra.mxu0 0.0
    %4775 = vmatprep.subr.mxu0 0.0
    %4776 = vmatpush1.msra.mxu0 0.0
    %4777 = vmatprep.subr.mxu0 0.0
    %4778 = vmatpush1.msra.mxu0 0.0
    %4779 = vmatprep.subr.mxu0 0.0
    %4780 = vmatpush1.msra.mxu0 0.0
    %4781 = vmatprep.subr.mxu0 0.0
    %4782 = vmatpush1.msra.mxu0 %v200
    %4783 = vmatprep.subr.mxu0 0.0
    %4784 = vmatpush1.msra.mxu0 %v199
    %4785 = vmatprep.subr.mxu0 0.0
    %4786 = vmatpush1.msra.mxu0 %v198
    %4787 = vmatprep.subr.mxu0 0.0
    %4788 = vmatpush1.msra.mxu0 %v197
    %4789 = vmatprep.subr.mxu0 0.0
    %4790 = vmatpush2.msra.mxu0 0.0
    %4791 = vmatprep.subr.mxu0 0.0
    %4792 = vmatpush2.msra.mxu0 0.0
    %4793 = vmatprep.subr.mxu0 0.0
    %4794 = vmatpush2.msra.mxu0 0.0
    %4795 = vmatprep.subr.mxu0 0.0
    %4796 = vmatpush2.msra.mxu0 0.0
    %4797 = vmatprep.subr.mxu0 0.0
    %4798 = vmatpush2.msra.mxu0 0.0
    %4799 = vmatprep.subr.mxu0 0.0
    %4800 = vmatpush2.msra.mxu0 0.0
    %4801 = vmatprep.subr.mxu0 0.0
    %4802 = vmatpush2.msra.mxu0 0.0
    %4803 = vmatprep.subr.mxu0 0.0
    %4804 = vmatpush2.msra.mxu0 0.0
    %4805 = vmatprep.subr.mxu0 0.0
    %4806 = vmatpush2.msra.mxu0 0.0
    %4807 = vmatprep.subr.mxu0 0.0
    %4808 = vmatpush2.msra.mxu0 0.0
    %4809 = vmatprep.subr.mxu0 0.0
    %4810 = vmatpush2.msra.mxu0 0.0
    %4811 = vmatprep.subr.mxu0 0.0
    %4812 = vmatpush2.msra.mxu0 0.0
    %4813 = vmatprep.subr.mxu0 0.0
    %4814 = vmatpush2.msra.mxu0 0.0
    %4815 = vmatprep.subr.mxu0 0.0
    %4816 = vmatpush2.msra.mxu0 0.0
    %4817 = vmatprep.subr.mxu0 0.0
    %4818 = vmatpush2.msra.mxu0 0.0
    %4819 = vmatprep.subr.mxu0 0.0
    %4820 = vmatpush2.msra.mxu0 0.0
    %4821 = vmatprep.mubr.f32.mxu0 0.0
    %4822 = vmatmul.mubr.f32.gmra.mxu0 %v4752
    %v4823 = vpop.f32.mrf.mxu0
    %v4824 = vadd.f32 %v4749, %v4823
    %v4825 = vpop.f32.mrf.mxu0
    %4826 = vmatprep.mubr.f32.mxu0 0.0
    %4827 = vmatmul.mubr.f32.gmra.mxu0 %v4755
    %v4828 = vpop.f32.mrf.mxu0
    %v4829 = vadd.f32 %v4749, %v4828
    %v4830 = vpop.f32.mrf.mxu0
    %4831 = vdwg.mxu0
    %v4832 = vxor.u32 %v4824, 2147483648
    %v4833 = vxor.u32 %v4829, 2147483648
    %v4834 = vmul.f32 %v4832, 1.442695
    %v4835 = vpow.pop %v4834
    %v4836 = vmul.f32 %v4833, 1.442695
    %v4837 = vpow.pop %v4836
    %v4838 = vadd.f32 %v4835, 1.0
    %v4839 = vadd.f32 %v4837, 1.0
    %v4840 = vrcp.pop %v4838
    %v4841 = vmul.f32 1.0, %v4840
    %v4842 = vrcp.pop %v4839
    %v4843 = vmul.f32 1.0, %v4842
    %v4844 = vmul.f32 %v4824, %v4841
    %v4845 = vmul.f32 %v4829, %v4843
    %v4847 = vlaneseq
    %v4848 = vshrl.u32 %v4847, 7
    %v4849 = vsub.s32 0, %v4848
    %v4850 = vrot.slane %v196, %v4849
    %v4853 = vsel %vm280, %v4844, 0
    %v4856 = vsel %vm280, %v4845, 0
    %4858 = vmatprep.subr.mxu0 0.0
    %4859 = vmatpush1.msra.mxu0 0.0
    %4860 = vmatprep.subr.mxu0 0.0
    %4861 = vmatpush1.msra.mxu0 0.0
    %4862 = vmatprep.subr.mxu0 0.0
    %4863 = vmatpush1.msra.mxu0 0.0
    %4864 = vmatprep.subr.mxu0 0.0
    %4865 = vmatpush1.msra.mxu0 0.0
    %4866 = vmatprep.subr.mxu0 0.0
    %4867 = vmatpush1.msra.mxu0 0.0
    %4868 = vmatprep.subr.mxu0 0.0
    %4869 = vmatpush1.msra.mxu0 0.0
    %4870 = vmatprep.subr.mxu0 0.0
    %4871 = vmatpush1.msra.mxu0 0.0
    %4872 = vmatprep.subr.mxu0 0.0
    %4873 = vmatpush1.msra.mxu0 0.0
    %4874 = vmatprep.subr.mxu0 0.0
    %4875 = vmatpush1.msra.mxu0 %v208
    %4876 = vmatprep.subr.mxu0 0.0
    %4877 = vmatpush1.msra.mxu0 %v207
    %4878 = vmatprep.subr.mxu0 0.0
    %4879 = vmatpush1.msra.mxu0 %v206
    %4880 = vmatprep.subr.mxu0 0.0
    %4881 = vmatpush1.msra.mxu0 %v205
    %4882 = vmatprep.subr.mxu0 0.0
    %4883 = vmatpush1.msra.mxu0 %v204
    %4884 = vmatprep.subr.mxu0 0.0
    %4885 = vmatpush1.msra.mxu0 %v203
    %4886 = vmatprep.subr.mxu0 0.0
    %4887 = vmatpush1.msra.mxu0 %v202
    %4888 = vmatprep.subr.mxu0 0.0
    %4889 = vmatpush1.msra.mxu0 %v201
    %4890 = vmatprep.subr.mxu0 0.0
    %4891 = vmatpush2.msra.mxu0 0.0
    %4892 = vmatprep.subr.mxu0 0.0
    %4893 = vmatpush2.msra.mxu0 0.0
    %4894 = vmatprep.subr.mxu0 0.0
    %4895 = vmatpush2.msra.mxu0 0.0
    %4896 = vmatprep.subr.mxu0 0.0
    %4897 = vmatpush2.msra.mxu0 0.0
    %4898 = vmatprep.subr.mxu0 0.0
    %4899 = vmatpush2.msra.mxu0 0.0
    %4900 = vmatprep.subr.mxu0 0.0
    %4901 = vmatpush2.msra.mxu0 0.0
    %4902 = vmatprep.subr.mxu0 0.0
    %4903 = vmatpush2.msra.mxu0 0.0
    %4904 = vmatprep.subr.mxu0 0.0
    %4905 = vmatpush2.msra.mxu0 0.0
    %4906 = vmatprep.subr.mxu0 0.0
    %4907 = vmatpush2.msra.mxu0 0.0
    %4908 = vmatprep.subr.mxu0 0.0
    %4909 = vmatpush2.msra.mxu0 0.0
    %4910 = vmatprep.subr.mxu0 0.0
    %4911 = vmatpush2.msra.mxu0 0.0
    %4912 = vmatprep.subr.mxu0 0.0
    %4913 = vmatpush2.msra.mxu0 0.0
    %4914 = vmatprep.subr.mxu0 0.0
    %4915 = vmatpush2.msra.mxu0 0.0
    %4916 = vmatprep.subr.mxu0 0.0
    %4917 = vmatpush2.msra.mxu0 0.0
    %4918 = vmatprep.subr.mxu0 0.0
    %4919 = vmatpush2.msra.mxu0 0.0
    %4920 = vmatprep.subr.mxu0 0.0
    %4921 = vmatpush2.msra.mxu0 0.0
    %4922 = vmatprep.mubr.f32.mxu0 0.0
    %4923 = vmatmul.mubr.f32.gmra.mxu0 %v4853
    %v4924 = vpop.f32.mrf.mxu0
    %v4925 = vadd.f32 %v4850, %v4924
    %v4926 = vpop.f32.mrf.mxu0
    %4927 = vmatprep.mubr.f32.mxu0 0.0
    %4928 = vmatmul.mubr.f32.gmra.mxu0 %v4856
    %v4929 = vpop.f32.mrf.mxu0
    %v4930 = vadd.f32 %v4850, %v4929
    %v4931 = vpop.f32.mrf.mxu0
    %4932 = vdwg.mxu0
    %v4933 = vadd.f32 %v4743, %v4925
    %v4934 = vadd.f32 %v4744, %v4930
    %v4935 = vsel %vm368, %v4933, 0.0
    %4936 = vadd.xlane.f32.xlu0 %v4935
    %v4937 = vpop.xlane.xlu0 %4936
    %v4938 = vsel %vm2033, %v4934, 0.0
    %4939 = vadd.xlane.f32.xlu0 %v4938
    %v4940 = vpop.xlane.xlu0 %4939
    %v4941 = vmul.f32 %v4937, %v375
    %v4942 = vmul.f32 %v4940, %v375
    %v4943 = vsub.f32 %v4933, %v4941
    %v4944 = vsub.f32 %v4934, %v4942
    %v4945 = vmul.f32 %v4943, %v4943
    %v4946 = vmul.f32 %v4944, %v4944
    %v4947 = vsel %vm368, %v4945, 0.0
    %4948 = vadd.xlane.f32.xlu0 %v4947
    %v4949 = vpop.xlane.xlu0 %4948
    %v4950 = vsel %vm2033, %v4946, 0.0
    %4951 = vadd.xlane.f32.xlu0 %v4950
    %v4952 = vpop.xlane.xlu0 %4951
    %v4953 = vmul.f32 %v4949, %v375
    %v4954 = vmul.f32 %v4952, %v375
    %v4955 = vadd.f32 %v4953, 1e-05
    %v4956 = vadd.f32 %v4954, 1e-05
    %v4957 = vrsqrt.pop %v4955
    %v4958 = vrsqrt.pop %v4956
    %v4959 = vmul.f32 %v4943, %v4957
    %v4960 = vmul.f32 %v4944, %v4958
    %v4962 = vlaneseq
    %v4963 = vshrl.u32 %v4962, 7
    %v4964 = vsub.s32 0, %v4963
    %v4965 = vrot.slane %v214, %v4964
    %v4967 = vmul.f32 %v4959, %v4965
    %v4968 = vmul.f32 %v4960, %v4965
    %v4970 = vlaneseq
    %v4971 = vshrl.u32 %v4970, 7
    %v4972 = vsub.s32 0, %v4971
    %v4973 = vrot.slane %v213, %v4972
    %v4975 = vadd.f32 %v4967, %v4973
    %v4976 = vadd.f32 %v4968, %v4973
    %v4978 = vlaneseq
    %v4979 = vshrl.u32 %v4978, 7
    %v4980 = vsub.s32 0, %v4979
    %v4981 = vrot.slane %v263, %v4980
    %v4984 = vsel %vm368, %v4975, 0
    %v4987 = vsel %vm368, %v4976, 0
    %v4990 = vsel %vm368, %v225, 0
    %v4993 = vsel %vm368, %v226, 0
    %v4996 = vsel %vm368, %v227, 0
    %v4999 = vsel %vm368, %v228, 0
    %v5002 = vsel %vm368, %v229, 0
    %v5005 = vsel %vm368, %v230, 0
    %v5008 = vsel %vm368, %v231, 0
    %v5011 = vsel %vm368, %v232, 0
    %5013 = vmatprep.subr.mxu0 0.0
    %5014 = vmatpush1.xpose.msra.mxu0 0.0
    %5015 = vmatprep.subr.mxu0 0.0
    %5016 = vmatpush1.xpose.msra.mxu0 0.0
    %5017 = vmatprep.subr.mxu0 0.0
    %5018 = vmatpush1.xpose.msra.mxu0 0.0
    %5019 = vmatprep.subr.mxu0 0.0
    %5020 = vmatpush1.xpose.msra.mxu0 0.0
    %5021 = vmatprep.subr.mxu0 0.0
    %5022 = vmatpush1.xpose.msra.mxu0 0.0
    %5023 = vmatprep.subr.mxu0 0.0
    %5024 = vmatpush1.xpose.msra.mxu0 0.0
    %5025 = vmatprep.subr.mxu0 0.0
    %5026 = vmatpush1.xpose.msra.mxu0 0.0
    %5027 = vmatprep.subr.mxu0 0.0
    %5028 = vmatpush1.xpose.msra.mxu0 0.0
    %5029 = vmatprep.subr.mxu0 0.0
    %5030 = vmatpush1.xpose.msra.mxu0 %v5011
    %5031 = vmatprep.subr.mxu0 0.0
    %5032 = vmatpush1.xpose.msra.mxu0 %v5008
    %5033 = vmatprep.subr.mxu0 0.0
    %5034 = vmatpush1.xpose.msra.mxu0 %v5005
    %5035 = vmatprep.subr.mxu0 0.0
    %5036 = vmatpush1.xpose.msra.mxu0 %v5002
    %5037 = vmatprep.subr.mxu0 0.0
    %5038 = vmatpush1.xpose.msra.mxu0 %v4999
    %5039 = vmatprep.subr.mxu0 0.0
    %5040 = vmatpush1.xpose.msra.mxu0 %v4996
    %5041 = vmatprep.subr.mxu0 0.0
    %5042 = vmatpush1.xpose.msra.mxu0 %v4993
    %5043 = vmatprep.subr.mxu0 0.0
    %5044 = vmatpush1.xpose.msra.mxu0 %v4990
    %5045 = vmatprep.subr.mxu0 0.0
    %5046 = vmatpush2.xpose.msra.mxu0 0.0
    %5047 = vmatprep.subr.mxu0 0.0
    %5048 = vmatpush2.xpose.msra.mxu0 0.0
    %5049 = vmatprep.subr.mxu0 0.0
    %5050 = vmatpush2.xpose.msra.mxu0 0.0
    %5051 = vmatprep.subr.mxu0 0.0
    %5052 = vmatpush2.xpose.msra.mxu0 0.0
    %5053 = vmatprep.subr.mxu0 0.0
    %5054 = vmatpush2.xpose.msra.mxu0 0.0
    %5055 = vmatprep.subr.mxu0 0.0
    %5056 = vmatpush2.xpose.msra.mxu0 0.0
    %5057 = vmatprep.subr.mxu0 0.0
    %5058 = vmatpush2.xpose.msra.mxu0 0.0
    %5059 = vmatprep.subr.mxu0 0.0
    %5060 = vmatpush2.xpose.msra.mxu0 0.0
    %5061 = vmatprep.subr.mxu0 0.0
    %5062 = vmatpush2.xpose.msra.mxu0 0.0
    %5063 = vmatprep.subr.mxu0 0.0
    %5064 = vmatpush2.xpose.msra.mxu0 0.0
    %5065 = vmatprep.subr.mxu0 0.0
    %5066 = vmatpush2.xpose.msra.mxu0 0.0
    %5067 = vmatprep.subr.mxu0 0.0
    %5068 = vmatpush2.xpose.msra.mxu0 0.0
    %5069 = vmatprep.subr.mxu0 0.0
    %5070 = vmatpush2.xpose.msra.mxu0 0.0
    %5071 = vmatprep.subr.mxu0 0.0
    %5072 = vmatpush2.xpose.msra.mxu0 0.0
    %5073 = vmatprep.subr.mxu0 0.0
    %5074 = vmatpush2.xpose.msra.mxu0 0.0
    %5075 = vmatprep.subr.mxu0 0.0
    %5076 = vmatpush2.xpose.msra.mxu0 0.0
    %5077 = vmatprep.mubr.f32.mxu0 0.0
    %5078 = vmatmul.mubr.f32.gmra.mxu0 %v4984
    %v5079 = vpop.f32.mrf.mxu0
    %v5080 = vadd.f32 %v4981, %v5079
    %v5081 = vpop.f32.mrf.mxu0
    %5082 = vmatprep.mubr.f32.mxu0 0.0
    %5083 = vmatmul.mubr.f32.gmra.mxu0 %v4987
    %v5084 = vpop.f32.mrf.mxu0
    %v5085 = vadd.f32 %v4981, %v5084
    %v5086 = vpop.f32.mrf.mxu0
    %5087 = vdwg.mxu0
    %v5088 = vld [vmem:[%s5] sm:$0xff]
    %v5089 = vld [vmem:[%s5 + $0x8] sm:$0x3f]
    %v5090 = vsel %vm280, %v5080, -inf
    %5091 = vmax.xlane.f32.xlu0 %v5090
    %v5092 = vpop.xlane.xlu0 %5091
    %vm5093 = vcmask 521216
    %v5094 = vsel %vm5093, %v5085, -inf
    %5095 = vmax.xlane.f32.xlu0 %v5094
    %v5096 = vpop.xlane.xlu0 %5095
    %v5097 = vsub.f32 %v5080, %v5092
    %v5098 = vsub.f32 %v5085, %v5096
    %v5099 = vmul.f32 %v5097, 1.442695
    %v5100 = vpow.pop %v5099
    %v5101 = vmul.f32 %v5098, 1.442695
    %v5102 = vpow.pop %v5101
    %v5103 = vsel %vm280, %v5100, 0.0
    %5104 = vadd.xlane.f32.xlu0 %v5103
    %v5105 = vpop.xlane.xlu0 %5104
    %v5106 = vsel %vm5093, %v5102, 0.0
    %5107 = vadd.xlane.f32.xlu0 %v5106
    %v5108 = vpop.xlane.xlu0 %5107
    %v5109 = vlog2.pop %v5105
    %v5110 = vmul.f32 %v5109, 0.6931472
    %v5111 = vlog2.pop %v5108
    %v5112 = vmul.f32 %v5111, 0.6931472
    %v5113 = vadd.f32 %v5092, %v5110
    %v5114 = vadd.f32 %v5096, %v5112
    %5115 = vset.pattern.permute.xlu0 0
    %5116 = vperm.xlu0 %5115, %v5088
    %v5117 = vpop.permute.xlu0 %5116
    %5118 = vset.pattern.permute.xlu0 0
    %5119 = vperm.xlu0 %5118, %v5089
    %v5120 = vpop.permute.xlu0 %5119
    %vm5121 = vcmp.eq.s32.totalorder %v267, %v5117
    %vm5122 = vcmp.eq.s32.totalorder %v267, %v5120
    %v5123 = vsel %vm5121, %v5080, 0.0
    %v5124 = vsel %vm5122, %v5085, 0.0
    %v5125 = vsel %vm280, %v5123, 0.0
    %5126 = vadd.xlane.f32.xlu0 %v5125
    %v5127 = vpop.xlane.xlu0 %5126
    %v5128 = vsel %vm5093, %v5124, 0.0
    %5129 = vadd.xlane.f32.xlu0 %v5128
    %v5130 = vpop.xlane.xlu0 %5129
    %v5131 = vsub.f32 %v5113, %v5127
    %v5132 = vsub.f32 %v5114, %v5130
    %vm5133 = vcmp.ge.s32.totalorder %v5088, 0
    %vm5134 = vcmp.ge.s32.totalorder %v5089, 0
    %v5135 = vsel %vm5133, 1, 0
    %v5136 = vsel %vm5134, 1, 0
    %v5137 = vcvt.s32.f32 %v5135
    %v5138 = vcvt.s32.f32 %v5136
    %v5139 = vmul.f32 %v5131, %v5137
    %v5140 = vmul.f32 %v5132, %v5138
    %vm5141 = vcmask 7168
    %v5142 = vsel %vm5141, %v5139, 0.0
    %vm5143 = vcmask 5120
    %v5144 = vsel %vm5143, %v5140, 0.0
    %v5145 = vadd.f32 %v5142, %v5144
    %v5146 = vrot.slane %v5145, 4
    %v5147 = vadd.f32 %v5145, %v5146
    %v5148 = vrot.slane %v5147, 2
    %v5149 = vadd.f32 %v5147, %v5148
    %v5150 = vrot.slane %v5149, 1
    %v5151 = vadd.f32 %v5149, %v5150
    %v5152 = vsel %vm5141, %v5137, 0.0
    %v5153 = vsel %vm5143, %v5138, 0.0
    %v5154 = vadd.f32 %v5152, %v5153
    %v5155 = vrot.slane %v5154, 4
    %v5156 = vadd.f32 %v5154, %v5155
    %v5157 = vrot.slane %v5156, 2
    %v5158 = vadd.f32 %v5156, %v5157
    %v5159 = vrot.slane %v5158, 1
    %v5160 = vadd.f32 %v5158, %v5159
    %v5161 = vmax.f32 %v5160, 1.0
    %v5162 = vrcp.pop %v5161
    %v5163 = vmul.f32 %v5151, %v5162
    %vm5164 = vcmask 0
    %5165 = vst.msk [vmem:[#allocation2] sm:$0x1] %vm5164, %v5163
    // Predicated region
    $region178: #{net_forward.1} parent=1 // pred_check
      _
    $region179: #{net_forward.1} parent=1 // pred_check_branch
      %5167 = sbr.rel (0) target = $region181
    $region180: #{net_forward.1} parent=1 // pred_region
      %s5169 = ssub.s32 16, 16
      %5170 = vsyncadd [#allocation3], %s5169
      %s5172 = sshll.u32 [#allocation2], 4
      %s5173 = int_to_ptr.vmem [resolvable:$true] %s5172
      %5175 = dma.vmem_to_hbm [thread:$0]  %s5173, 16, %s89, [#allocation3]
    $region181: #{net_forward.1} parent=1 // pred_fallthru
      _
    // Predicated region
    $region182: #{net_forward.1} parent=1 // pred_check
      _
    $region183: #{net_forward.1} parent=1 // pred_check_branch
      %5177 = sbr.rel (0) target = $region185
    $region184: #{net_forward.1} parent=1 // pred_region
      %5178 = dma.done [#allocation3], 16
    $region185: #{net_forward.1} parent=1 // pred_fallthru
      _
    %5179 = vsyncpa [#allocation3], 1

</llo_original>
